<compile_context>
chip_gen: v7x
topology: tpu7x:2x2x1
jax: 0.10.0
libtpu: 0.0.40
codegen_flags: <defaults>
</compile_context>

<pallas_src>
import math
import functools

import jax
import jax.numpy as jnp
from jax.experimental import pallas as pl
from jax.experimental.pallas import tpu as pltpu


_VMEM = functools.partial(pl.BlockSpec, memory_space=pltpu.MemorySpace.VMEM)


# ----------------------------------------------------------------------------- kernel
def _fused_forward_kernel(
    nid_ref,        # (N, 1)  int32   node token ids
    mid_ref,        # (S, 1)  int32   metric token ids
    edge_ref,       # (2, E)  int32   edge_index (row 0 = src, row 1 = dst)
    tab_ref,        # (Tr, H) f32     [embed | metric_embed | pe] row-stacked (8-aligned)
    gcn_w_ref,      # (Lg, H, H) f32
    enc_wA_ref,     # (Le, H, 4H+F) f32   [Wqkv(3H) | Wo(H) | W1(F)]
    enc_w2_ref,     # (Le, F, H) f32
    vec_ref,        # (Lv, 2H+1 + 9H+F + 5H+4) f32   packed per-layer / head vectors
    head_mat_ref,   # (2H, H+2) f32   [att_W | fc_w (padded)]
    out_ref,        # (1, 2)  f32
    heads_ref,      # (S, H)  f32 scratch — per-head attention outputs (lane-sliced)
    readout_ref,    # (Lg, H) f32 scratch — per-GCN-layer pooled readouts
    *, nhead, off_metric, off_pe, eps=1e-5):
    f32 = jnp.float32
    N = nid_ref.shape[0]
    S = mid_ref.shape[0]
    E = edge_ref.shape[1]
    H = tab_ref.shape[1]
    Lg = gcn_w_ref.shape[0]
    Le = enc_wA_ref.shape[0]
    F = enc_w2_ref.shape[1]
    dh = H // nhead
    o_e = 2 * H + 1                     # start of encoder-vector block in vec_pack
    o_h = o_e + 9 * H + F               # start of head-vector block in vec_pack

    def softmax_last(s):
        mx = jnp.max(s, axis=-1, keepdims=True)
        e = jnp.exp(s - mx)
        return e / jnp.sum(e, axis=-1, keepdims=True)

    def attn_pool(h, gw, gb):
        # PyG GlobalAttention with gate_nn = Linear(H,1) -> Sigmoid, single graph.
        logit = jnp.sum(h * gw, axis=-1, keepdims=True) + gb        # (M, 1)
        gate = jax.nn.sigmoid(logit)
        mx = jnp.max(gate, axis=0, keepdims=True)
        e = jnp.exp(gate - mx)
        p = e / jnp.sum(e, axis=0, keepdims=True)
        return jnp.sum(p * h, axis=0, keepdims=True)                # (1, H)

    def layer_norm(x, g, b):
        mu = jnp.mean(x, axis=-1, keepdims=True)
        var = jnp.mean((x - mu) ** 2, axis=-1, keepdims=True)
        return (x - mu) * jax.lax.rsqrt(var + eps) * g + b

    # ---------------- in-kernel embedding gathers (one-hot matmuls) ----------------
    node_oh = jnp.where(
        nid_ref[...] == jax.lax.broadcasted_iota(jnp.int32, (N, off_metric), 1), 1.0, 0.0)
    x = jnp.dot(node_oh, tab_ref[0:off_metric, :], preferred_element_type=f32)      # (N, H)

    n_metric = off_pe - off_metric
    met_oh = jnp.where(
        mid_ref[...] == jax.lax.broadcasted_iota(jnp.int32, (S, n_metric), 1), 1.0, 0.0)
    m = jnp.dot(met_oh, tab_ref[off_metric:off_pe, :], preferred_element_type=f32)  # (S, H)
    m = m + tab_ref[off_pe:off_pe + S, :]          # positional encoding (dropout = eval)

    # ---------------- in-kernel GCN normalized adjacency (A + I, deg^-1/2) ----------------
    sub_iota = jax.lax.broadcasted_iota(jnp.int32, (N, E), 0)
    oh_srcT = jnp.where(sub_iota == edge_ref[0:1, :], 1.0, 0.0)     # (N, E): [src_e == j]
    oh_dstT = jnp.where(sub_iota == edge_ref[1:2, :], 1.0, 0.0)     # (N, E): [dst_e == i]
    A = jnp.einsum("ie,je->ij", oh_dstT, oh_srcT,
                   preferred_element_type=f32)                      # A[i,j] = #edges j -> i
    eye = jnp.where(jax.lax.broadcasted_iota(jnp.int32, (N, N), 0) ==
                    jax.lax.broadcasted_iota(jnp.int32, (N, N), 1), 1.0, 0.0)
    A = A + eye
    deg = jnp.sum(A, axis=1, keepdims=True)                         # (N, 1)
    dinv = jnp.where(deg > 0.0, jax.lax.rsqrt(deg), 0.0)
    # D^-1/2 (A+I) D^-1/2 @ y  ==  dinv * ((A+I) @ (dinv * y))  -> no dinv transpose needed.

    # ---------------- GCN branch ----------------
    h = x
    for i in range(Lg):
        xw = jnp.dot(h, gcn_w_ref[i], preferred_element_type=f32)
        agg = jnp.dot(A, dinv * xw, preferred_element_type=f32)
        h = jnp.maximum(dinv * agg + vec_ref[i:i + 1, 0:H], 0.0)
        readout_ref[i:i + 1, :] = attn_pool(h,
                                            vec_ref[i:i + 1, H:2 * H],
                                            vec_ref[i:i + 1, 2 * H:2 * H + 1])

    # ---------------- Transformer-encoder branch (post-norm, relu, batch==1) ----------------
    t = m                                                           # (S, H)
    for i in range(Le):
        wA = enc_wA_ref[i]                                          # (H, 4H+F)
        qkv = (jnp.dot(t, wA[:, 0:3 * H], preferred_element_type=f32)
               + vec_ref[i:i + 1, o_e:o_e + 3 * H])                 # (S, 3H)
        for hh in range(nhead):
            lo = hh * dh
            qh = qkv[:, lo:lo + dh]          # 1/sqrt(dh) folded into Wq at pack time
            kh = qkv[:, H + lo:H + lo + dh]
            vh = qkv[:, 2 * H + lo:2 * H + lo + dh]
            s = jnp.einsum("qd,kd->qk", qh, kh, preferred_element_type=f32)
            heads_ref[:, lo:lo + dh] = jnp.dot(softmax_last(s), vh,
                                               preferred_element_type=f32)
        # concat(heads) @ Wo done as ONE (S,H)@(H,H) matmul from the VMEM scratch.
        attn = (jnp.dot(heads_ref[...], wA[:, 3 * H:4 * H], preferred_element_type=f32)
                + vec_ref[i:i + 1, o_e + 3 * H:o_e + 4 * H])
        t = layer_norm(t + attn,
                       vec_ref[i:i + 1, o_e + 5 * H + F:o_e + 6 * H + F],
                       vec_ref[i:i + 1, o_e + 6 * H + F:o_e + 7 * H + F])
        ff = jnp.maximum(jnp.dot(t, wA[:, 4 * H:4 * H + F], preferred_element_type=f32)
                         + vec_ref[i:i + 1, o_e + 4 * H:o_e + 4 * H + F], 0.0)
        ff = (jnp.dot(ff, enc_w2_ref[i], preferred_element_type=f32)
              + vec_ref[i:i + 1, o_e + 4 * H + F:o_e + 5 * H + F])
        t = layer_norm(t + ff,
                       vec_ref[i:i + 1, o_e + 7 * H + F:o_e + 8 * H + F],
                       vec_ref[i:i + 1, o_e + 8 * H + F:o_e + 9 * H + F])
    out2 = layer_norm(t, vec_ref[0:1, o_h:o_h + H],
                      vec_ref[0:1, o_h + H:o_h + 2 * H])            # final encoder LayerNorm

    # ---------------- pooling + fusion head + classifier ----------------
    p1 = attn_pool(readout_ref[...],
                   vec_ref[0:1, o_h + 2 * H:o_h + 3 * H],
                   vec_ref[0:1, o_h + 3 * H:o_h + 3 * H + 1])
    p2 = attn_pool(out2,
                   vec_ref[0:1, o_h + 3 * H + 1:o_h + 4 * H + 1],
                   vec_ref[0:1, o_h + 4 * H + 1:o_h + 4 * H + 2])
    # cat([p1, p2], dim=1) @ att_W  ==  p1 @ att_W[:H] + p2 @ att_W[H:]
    z = (jnp.dot(p1, head_mat_ref[0:H, 0:H], preferred_element_type=f32)
         + jnp.dot(p2, head_mat_ref[H:2 * H, 0:H], preferred_element_type=f32)
         + vec_ref[0:1, o_h + 4 * H + 2:o_h + 5 * H + 2])
    # TODO(synk): GlobalSelfAttentionLayer is not defined in the source; a GAT-style layer
    # over a single global node degenerates to elu(h @ W), which is what is implemented.
    z = jnp.where(z > 0.0, z, jnp.exp(jnp.minimum(z, 0.0)) - 1.0)   # ELU
    logits = (jnp.dot(z, head_mat_ref[0:H, H:H + 2], preferred_element_type=f32)
              + vec_ref[0:1, o_h + 5 * H + 2:o_h + 5 * H + 4])      # (1, 2)
    mx = jnp.max(logits, axis=-1, keepdims=True)
    e = jnp.exp(logits - mx)
    out_ref[...] = e / jnp.sum(e, axis=-1, keepdims=True)


# ----------------------------------------------------------------------------- wrapper
@functools.partial(jax.jit, static_argnames=("nhead", "off_metric", "off_pe"))
def _forward_impl(x_ids, metrics_ids, edge_index,
                  tables, gcn_w, enc_wA, enc_w2, vec_pack, head_mat,
                  *, nhead, off_metric, off_pe):
    # trivially-fused / free shape plumbing only — the whole forward runs in one kernel
    nid = x_ids.astype(jnp.int32).reshape(-1, 1)
    mid = metrics_ids.astype(jnp.int32).reshape(-1, 1)
    eid = edge_index.astype(jnp.int32)

    S = mid.shape[0]
    H = tables.shape[1]
    Lg = gcn_w.shape[0]

    inputs = (nid, mid, eid, tables, gcn_w, enc_wA, enc_w2, vec_pack, head_mat)
    operand_bytes = sum(int(a.size) * a.dtype.itemsize for a in inputs)
    scratch_bytes = (S * H + Lg * H) * 4
    vmem_limit = int(min(max(4 * (operand_bytes + scratch_bytes) + (1 << 20), 8 << 20),
                         100 << 20))

    kernel = functools.partial(_fused_forward_kernel, nhead=nhead,
                               off_metric=off_metric, off_pe=off_pe)
    return pl.pallas_call(
        kernel,
        out_shape=jax.ShapeDtypeStruct((1, 2), jnp.float32),
        in_specs=[_VMEM() for _ in inputs],
        out_specs=_VMEM(),
        scratch_shapes=[pltpu.VMEM((S, H), jnp.float32),
                        pltpu.VMEM((Lg, H), jnp.float32)],
        compiler_params=pltpu.CompilerParams(vmem_limit_bytes=vmem_limit),
    )(*inputs)


def my_model_forward(params, x_ids, edge_index, edge_attr, metrics_ids,
                     token_list=None, src_metrics=None):
    # edge_attr / token_list / src_metrics accepted but unused (as in MyModel.forward).
    return _forward_impl(
        x_ids, metrics_ids, edge_index,
        params["tables"], params["gcn_w"], params["enc_wA"], params["enc_w2"],
        params["vec_pack"], params["head_mat"],
        nhead=params["nhead"], off_metric=params["off_metric"], off_pe=params["off_pe"])


# ----------------------------------------------------------------------------- params
def build_params(key, vocablen, metriclen, hidden, nhead,
                 num_gcn_layers, num_encoder_layers, dim_feedforward, max_len=100):
    H, F, Lg, Le = hidden, dim_feedforward, num_gcn_layers, num_encoder_layers
    keys = iter(jax.random.split(key, 512))

    def xavier(shape, gain=1.0):
        a = gain * math.sqrt(6.0 / (shape[0] + shape[1]))
        return jax.random.uniform(next(keys), shape, jnp.float32, -a, a)

    def normal(shape):
        return jax.random.normal(next(keys), shape, jnp.float32)

    # --- embedding / metric / positional-encoding tables, 8-row-aligned row-stack ---
    embed = normal((vocablen, H))
    metric_embed = normal((metriclen, H))
    position = jnp.arange(max_len, dtype=jnp.float32)[:, None]
    div_term = jnp.exp(jnp.arange(0, H, 2, dtype=jnp.float32) * (-math.log(10000.0) / H))
    pe = jnp.zeros((max_len, H), jnp.float32)
    pe = pe.at[:, 0::2].set(jnp.sin(position * div_term))
    pe = pe.at[:, 1::2].set(jnp.cos(position * div_term))

    def pad8(a):
        r = (-a.shape[0]) % 8
        return jnp.pad(a, ((0, r), (0, 0))) if r else a

    embed_p, metric_p = pad8(embed), pad8(metric_embed)
    off_metric = int(embed_p.shape[0])
    off_pe = int(off_metric + metric_p.shape[0])
    tables = jnp.concatenate([embed_p, metric_p, pe], axis=0)

    # --- GCN layers: GCNConv weight/bias + GlobalAttention gate per layer ---
    gcn_w = jnp.stack([xavier((H, H)) for _ in range(Lg)])
    gcn_b = jnp.zeros((Lg, H), jnp.float32)
    gate_w = jnp.stack([xavier((1, H))[0] for _ in range(Lg)])        # Linear(H,1) weights
    gate_b = jnp.zeros((Lg, 1), jnp.float32)
    gcn_vec = jnp.concatenate([gcn_b, gate_w, gate_b], axis=1)        # (Lg, 2H+1)

    # --- Transformer encoder layers (1/sqrt(dh) folded into Q weights) ---
    scale = 1.0 / math.sqrt(H // nhead)
    wA_list, w2_list, ev_list = [], [], []
    for _ in range(Le):
        wq, wk, wv = xavier((H, H)), xavier((H, H)), xavier((H, H))
        wqkv = jnp.concatenate([wq * scale, wk, wv], axis=1)          # (H, 3H)
        wo, w1, w2 = xavier((H, H)), xavier((H, F)), xavier((F, H))
        wA_list.append(jnp.concatenate([wqkv, wo, w1], axis=1))       # (H, 4H+F)
        w2_list.append(w2)
        ev_list.append(jnp.concatenate([
            jnp.zeros((3 * H,), jnp.float32),    # bqkv (Q-scale fold is a no-op on zeros)
            jnp.zeros((H,), jnp.float32),        # bo
            jnp.zeros((F,), jnp.float32),        # b1
            jnp.zeros((H,), jnp.float32),        # b2
            jnp.ones((H,), jnp.float32),         # ln1 gamma
            jnp.zeros((H,), jnp.float32),        # ln1 beta
            jnp.ones((H,), jnp.float32),         # ln2 gamma
            jnp.zeros((H,), jnp.float32)]))      # ln2 beta
    enc_wA = jnp.stack(wA_list)
    enc_w2 = jnp.stack(w2_list)
    enc_vec = jnp.stack(ev_list)                                      # (Le, 9H+F)

    # --- fusion head ---
    head_vec = jnp.concatenate([
        jnp.ones((H,), jnp.float32), jnp.zeros((H,), jnp.float32),    # final encoder LN
        xavier((1, H))[0], jnp.zeros((1,), jnp.float32),              # gpool1 gate
        xavier((1, H))[0], jnp.zeros((1,), jnp.float32),              # gpool2 gate
        jnp.zeros((H,), jnp.float32),                                 # att bias
        jnp.zeros((2,), jnp.float32)])                                # fc bias   -> (5H+4,)

    Wg, We, Wh = 2 * H + 1, 9 * H + F, 5 * H + 4
    Lv = max(Lg, Le, 1)
    vec_pack = jnp.zeros((Lv, Wg + We + Wh), jnp.float32)
    vec_pack = vec_pack.at[:Lg, :Wg].set(gcn_vec)
    vec_pack = vec_pack.at[:Le, Wg:Wg + We].set(enc_vec)
    vec_pack = vec_pack.at[0, Wg + We:].set(head_vec)

    head_mat = jnp.zeros((2 * H, H + 2), jnp.float32)
    head_mat = head_mat.at[:, :H].set(xavier((2 * H, H), gain=1.414)) # att_W
    head_mat = head_mat.at[:H, H:].set(xavier((H, 2)))                # fc_w

    return {
        "nhead": nhead, "off_metric": off_metric, "off_pe": off_pe,
        "tables": tables, "gcn_w": gcn_w, "enc_wA": enc_wA, "enc_w2": enc_w2,
        "vec_pack": vec_pack, "head_mat": head_mat,
    }


# ----------------------------------------------------------------------------- main
if __name__ == "__main__":
    vocablen, metriclen = 50, 30
    hidden = 32            # d_model == hidden (required by FullModel's use of the encoder)
    nhead = 4
    num_gcn_layers = 2
    num_encoder_layers = 2
    dim_feedforward = 64

    key = jax.random.PRNGKey(0)
    kp, kx, km = jax.random.split(key, 3)

    params = build_params(kp, vocablen, metriclen, hidden, nhead,
                          num_gcn_layers, num_encoder_layers, dim_feedforward)

    # graph inputs
    n_nodes = 10
    x_ids = jax.random.randint(kx, (n_nodes,), 0, vocablen)
    src = jnp.arange(n_nodes, dtype=jnp.int32)
    dst = (src + 1) % n_nodes
    edge_index = jnp.stack([jnp.concatenate([src, dst]),
                            jnp.concatenate([dst, src])], axis=0)     # bidirectional ring
    edge_attr = jnp.ones((edge_index.shape[1],), jnp.float32)         # unused (matches PyTorch)

    # metrics sequence inputs: (S, N=1) int ids
    S = 8
    metrics_ids = jax.random.randint(km, (S, 1), 0, metriclen)

    out = my_model_forward(params, x_ids, edge_index, edge_attr, metrics_ids, None, None)
    out = jax.block_until_ready(out)
    assert out.shape == (1, 2)
    assert bool(jnp.isfinite(out).all())
    print("KERNEL_OK")
</pallas_src>

<mosaic_0001>
module attributes {stable_mosaic.version = 11 : i64} {
  func.func @_fused_forward_kernel(%arg0: memref<10x1xi32, #tpu.memory_space<vmem>>, %arg1: memref<8x1xi32, #tpu.memory_space<vmem>>, %arg2: memref<2x20xi32, #tpu.memory_space<vmem>>, %arg3: memref<188x32xf32, #tpu.memory_space<vmem>>, %arg4: memref<2x32x32xf32, #tpu.memory_space<vmem>>, %arg5: memref<2x32x192xf32, #tpu.memory_space<vmem>>, %arg6: memref<2x64x32xf32, #tpu.memory_space<vmem>>, %arg7: memref<2x581xf32, #tpu.memory_space<vmem>>, %arg8: memref<64x34xf32, #tpu.memory_space<vmem>>, %arg9: memref<1x2xf32, #tpu.memory_space<vmem>>, %arg10: memref<8x32xf32, #tpu.memory_space<vmem>>, %arg11: memref<2x32xf32, #tpu.memory_space<vmem>>) attributes {dimension_semantics = [], scalar_prefetch = 0 : i64, scratch_operands = 2 : i64, tpu.core_type = #tpu.core_type<tc>} {
    %c0 = arith.constant 0 : index
    %c0_0 = arith.constant 0 : index
    %0 = vector.load %arg0[%c0, %c0_0] : memref<10x1xi32, #tpu.memory_space<vmem>>, vector<10x1xi32>
    %1 = tpu.iota {dimensions = array<i32: 1>} : vector<10x56xi32>
    %2 = vector.broadcast %0 : vector<10x1xi32> to vector<10x56xi32>
    %3 = arith.cmpi eq, %2, %1 : vector<10x56xi32>
    %cst = arith.constant 1.000000e+00 : f32
    %cst_1 = arith.constant 0.000000e+00 : f32
    %4 = vector.broadcast %cst : f32 to vector<10x56xf32>
    %5 = vector.broadcast %cst_1 : f32 to vector<10x56xf32>
    %6 = arith.select %3, %4, %5 : vector<10x56xi1>, vector<10x56xf32>
    %c0_2 = arith.constant 0 : index
    %c0_3 = arith.constant 0 : index
    %7 = vector.load %arg3[%c0_2, %c0_3] : memref<188x32xf32, #tpu.memory_space<vmem>>, vector<56x32xf32>
    %cst_4 = arith.constant dense<0.000000e+00> : vector<10x32xf32>
    %8 = tpu.matmul %6, %7, %cst_4 {dimension_numbers = #tpu.dot_dimension_numbers<[1], [0], [0], [1], [0, 0, 1, 1], [], []>} : vector<10x56xf32>, vector<56x32xf32>, vector<10x32xf32> -> vector<10x32xf32>
    %c0_5 = arith.constant 0 : index
    %c0_6 = arith.constant 0 : index
    %9 = vector.load %arg1[%c0_5, %c0_6] : memref<8x1xi32, #tpu.memory_space<vmem>>, vector<8x1xi32>
    %10 = tpu.iota {dimensions = array<i32: 1>} : vector<8x32xi32>
    %11 = vector.broadcast %9 : vector<8x1xi32> to vector<8x32xi32>
    %12 = arith.cmpi eq, %11, %10 : vector<8x32xi32>
    %cst_7 = arith.constant 1.000000e+00 : f32
    %cst_8 = arith.constant 0.000000e+00 : f32
    %13 = vector.broadcast %cst_7 : f32 to vector<8x32xf32>
    %14 = vector.broadcast %cst_8 : f32 to vector<8x32xf32>
    %15 = arith.select %12, %13, %14 : vector<8x32xi1>, vector<8x32xf32>
    %c56 = arith.constant 56 : index
    %c0_9 = arith.constant 0 : index
    %16 = vector.load %arg3[%c56, %c0_9] : memref<188x32xf32, #tpu.memory_space<vmem>>, vector<32x32xf32>
    %cst_10 = arith.constant dense<0.000000e+00> : vector<8x32xf32>
    %17 = tpu.matmul %15, %16, %cst_10 {dimension_numbers = #tpu.dot_dimension_numbers<[1], [0], [0], [1], [0, 0, 1, 1], [], []>} : vector<8x32xf32>, vector<32x32xf32>, vector<8x32xf32> -> vector<8x32xf32>
    %c88 = arith.constant 88 : index
    %c0_11 = arith.constant 0 : index
    %18 = vector.load %arg3[%c88, %c0_11] : memref<188x32xf32, #tpu.memory_space<vmem>>, vector<8x32xf32>
    %19 = arith.addf %17, %18 : vector<8x32xf32>
    %20 = tpu.iota {dimensions = array<i32: 0>} : vector<10x20xi32>
    %c0_12 = arith.constant 0 : index
    %c0_13 = arith.constant 0 : index
    %21 = vector.load %arg2[%c0_12, %c0_13] : memref<2x20xi32, #tpu.memory_space<vmem>>, vector<1x20xi32>
    %22 = vector.broadcast %21 : vector<1x20xi32> to vector<10x20xi32>
    %23 = arith.cmpi eq, %20, %22 : vector<10x20xi32>
    %cst_14 = arith.constant 1.000000e+00 : f32
    %cst_15 = arith.constant 0.000000e+00 : f32
    %24 = vector.broadcast %cst_14 : f32 to vector<10x20xf32>
    %25 = vector.broadcast %cst_15 : f32 to vector<10x20xf32>
    %26 = arith.select %23, %24, %25 : vector<10x20xi1>, vector<10x20xf32>
    %c1 = arith.constant 1 : index
    %c0_16 = arith.constant 0 : index
    %27 = vector.load %arg2[%c1, %c0_16] : memref<2x20xi32, #tpu.memory_space<vmem>>, vector<1x20xi32>
    %28 = vector.broadcast %27 : vector<1x20xi32> to vector<10x20xi32>
    %29 = arith.cmpi eq, %20, %28 : vector<10x20xi32>
    %cst_17 = arith.constant 1.000000e+00 : f32
    %cst_18 = arith.constant 0.000000e+00 : f32
    %30 = vector.broadcast %cst_17 : f32 to vector<10x20xf32>
    %31 = vector.broadcast %cst_18 : f32 to vector<10x20xf32>
    %32 = arith.select %29, %30, %31 : vector<10x20xi1>, vector<10x20xf32>
    "tpu.trace_start"() <{level = 10 : i32, message = "ie,je->ij"}> : () -> ()
    %cst_19 = arith.constant dense<0.000000e+00> : vector<10x10xf32>
    %33 = tpu.matmul %32, %26, %cst_19 {dimension_numbers = #tpu.dot_dimension_numbers<[1], [1], [0], [0], [0, 0, 1, 0], [], []>} : vector<10x20xf32>, vector<10x20xf32>, vector<10x10xf32> -> vector<10x10xf32>
    "tpu.trace_stop"() : () -> ()
    %34 = tpu.iota {dimensions = array<i32: 0>} : vector<10x10xi32>
    %35 = tpu.iota {dimensions = array<i32: 1>} : vector<10x10xi32>
    %36 = arith.cmpi eq, %34, %35 : vector<10x10xi32>
    %cst_20 = arith.constant 1.000000e+00 : f32
    %cst_21 = arith.constant 0.000000e+00 : f32
    %37 = vector.broadcast %cst_20 : f32 to vector<10x10xf32>
    %38 = vector.broadcast %cst_21 : f32 to vector<10x10xf32>
    %39 = arith.select %36, %37, %38 : vector<10x10xi1>, vector<10x10xf32>
    %40 = arith.addf %33, %39 : vector<10x10xf32>
    %cst_22 = arith.constant dense<0.000000e+00> : vector<10xf32>
    %41 = vector.multi_reduction <add>, %40, %cst_22 [1] : vector<10x10xf32> to vector<10xf32>
    %42 = vector.shape_cast %41 : vector<10xf32> to vector<10x1xf32>
    %cst_23 = arith.constant 0.000000e+00 : f32
    %43 = vector.broadcast %cst_23 : f32 to vector<10x1xf32>
    %44 = arith.cmpf ogt, %42, %43 : vector<10x1xf32>
    %45 = math.rsqrt %42 : vector<10x1xf32>
    %cst_24 = arith.constant 0.000000e+00 : f32
    %46 = vector.broadcast %cst_24 : f32 to vector<10x1xf32>
    %47 = arith.select %44, %45, %46 : vector<10x1xi1>, vector<10x1xf32>
    %c0_25 = arith.constant 0 : index
    %c0_26 = arith.constant 0 : index
    %c0_27 = arith.constant 0 : index
    %48 = vector.load %arg4[%c0_25, %c0_26, %c0_27] : memref<2x32x32xf32, #tpu.memory_space<vmem>>, vector<1x32x32xf32>
    %49 = vector.shape_cast %48 : vector<1x32x32xf32> to vector<32x32xf32>
    %cst_28 = arith.constant dense<0.000000e+00> : vector<10x32xf32>
    %50 = tpu.matmul %8, %49, %cst_28 {dimension_numbers = #tpu.dot_dimension_numbers<[1], [0], [0], [1], [0, 0, 1, 1], [], []>} : vector<10x32xf32>, vector<32x32xf32>, vector<10x32xf32> -> vector<10x32xf32>
    %51 = vector.broadcast %47 : vector<10x1xf32> to vector<10x32xf32>
    %52 = arith.mulf %51, %50 : vector<10x32xf32>
    %cst_29 = arith.constant dense<0.000000e+00> : vector<10x32xf32>
    %53 = tpu.matmul %40, %52, %cst_29 {dimension_numbers = #tpu.dot_dimension_numbers<[1], [0], [0], [1], [0, 0, 1, 1], [], []>} : vector<10x10xf32>, vector<10x32xf32>, vector<10x32xf32> -> vector<10x32xf32>
    %54 = vector.broadcast %47 : vector<10x1xf32> to vector<10x32xf32>
    %55 = arith.mulf %54, %53 : vector<10x32xf32>
    %c0_30 = arith.constant 0 : index
    %c0_31 = arith.constant 0 : index
    %56 = vector.load %arg7[%c0_30, %c0_31] : memref<2x581xf32, #tpu.memory_space<vmem>>, vector<1x32xf32>
    %57 = vector.broadcast %56 : vector<1x32xf32> to vector<10x32xf32>
    %58 = arith.addf %55, %57 : vector<10x32xf32>
    %cst_32 = arith.constant 0.000000e+00 : f32
    %59 = vector.broadcast %cst_32 : f32 to vector<10x32xf32>
    %60 = arith.maximumf %58, %59 : vector<10x32xf32>
    %c0_33 = arith.constant 0 : index
    %c32 = arith.constant 32 : index
    %61 = vector.load %arg7[%c0_33, %c32] : memref<2x581xf32, #tpu.memory_space<vmem>>, vector<1x32xf32>
    %c0_34 = arith.constant 0 : index
    %c64 = arith.constant 64 : index
    %62 = vector.load %arg7[%c0_34, %c64] : memref<2x581xf32, #tpu.memory_space<vmem>>, vector<1x1xf32>
    %63 = vector.broadcast %61 : vector<1x32xf32> to vector<10x32xf32>
    %64 = arith.mulf %60, %63 : vector<10x32xf32>
    %cst_35 = arith.constant dense<0.000000e+00> : vector<10xf32>
    %65 = vector.multi_reduction <add>, %64, %cst_35 [1] : vector<10x32xf32> to vector<10xf32>
    %66 = vector.shape_cast %65 : vector<10xf32> to vector<10x1xf32>
    %67 = vector.broadcast %62 : vector<1x1xf32> to vector<10x1xf32>
    %68 = arith.addf %66, %67 : vector<10x1xf32>
    %69 = arith.negf %68 : vector<10x1xf32>
    %70 = math.exp %69 : vector<10x1xf32>
    %cst_36 = arith.constant 1.000000e+00 : f32
    %71 = vector.broadcast %cst_36 : f32 to vector<10x1xf32>
    %72 = arith.addf %71, %70 : vector<10x1xf32>
    %73 = arith.divf %71, %72 : vector<10x1xf32>
    %cst_37 = arith.constant dense<0xFF800000> : vector<1xf32>
    %74 = vector.multi_reduction <maximumf>, %73, %cst_37 [0] : vector<10x1xf32> to vector<1xf32>
    %75 = vector.shape_cast %74 : vector<1xf32> to vector<1x1xf32>
    %76 = vector.broadcast %75 : vector<1x1xf32> to vector<10x1xf32>
    %77 = arith.subf %73, %76 : vector<10x1xf32>
    %78 = math.exp %77 : vector<10x1xf32>
    %cst_38 = arith.constant dense<0.000000e+00> : vector<1xf32>
    %79 = vector.multi_reduction <add>, %78, %cst_38 [0] : vector<10x1xf32> to vector<1xf32>
    %80 = vector.shape_cast %79 : vector<1xf32> to vector<1x1xf32>
    %81 = vector.broadcast %80 : vector<1x1xf32> to vector<10x1xf32>
    %82 = arith.divf %78, %81 : vector<10x1xf32>
    %83 = vector.broadcast %82 : vector<10x1xf32> to vector<10x32xf32>
    %84 = arith.mulf %83, %60 : vector<10x32xf32>
    %cst_39 = arith.constant dense<0.000000e+00> : vector<32xf32>
    %85 = vector.multi_reduction <add>, %84, %cst_39 [0] : vector<10x32xf32> to vector<32xf32>
    %86 = vector.shape_cast %85 : vector<32xf32> to vector<1x32xf32>
    %c0_40 = arith.constant 0 : index
    %c0_41 = arith.constant 0 : index
    %87 = vector.load %arg11[%c0_40, %c0_41] : memref<2x32xf32, #tpu.memory_space<vmem>>, vector<1x32xf32>
    tpu.vector_store %arg11[%c0_40, %c0_41], %86 {strides = array<i32>} : memref<2x32xf32, #tpu.memory_space<vmem>>, vector<1x32xf32>,
    %c1_42 = arith.constant 1 : index
    %c0_43 = arith.constant 0 : index
    %c0_44 = arith.constant 0 : index
    %88 = vector.load %arg4[%c1_42, %c0_43, %c0_44] : memref<2x32x32xf32, #tpu.memory_space<vmem>>, vector<1x32x32xf32>
    %89 = vector.shape_cast %88 : vector<1x32x32xf32> to vector<32x32xf32>
    %cst_45 = arith.constant dense<0.000000e+00> : vector<10x32xf32>
    %90 = tpu.matmul %60, %89, %cst_45 {dimension_numbers = #tpu.dot_dimension_numbers<[1], [0], [0], [1], [0, 0, 1, 1], [], []>} : vector<10x32xf32>, vector<32x32xf32>, vector<10x32xf32> -> vector<10x32xf32>
    %91 = vector.broadcast %47 : vector<10x1xf32> to vector<10x32xf32>
    %92 = arith.mulf %91, %90 : vector<10x32xf32>
    %cst_46 = arith.constant dense<0.000000e+00> : vector<10x32xf32>
    %93 = tpu.matmul %40, %92, %cst_46 {dimension_numbers = #tpu.dot_dimension_numbers<[1], [0], [0], [1], [0, 0, 1, 1], [], []>} : vector<10x10xf32>, vector<10x32xf32>, vector<10x32xf32> -> vector<10x32xf32>
    %94 = vector.broadcast %47 : vector<10x1xf32> to vector<10x32xf32>
    %95 = arith.mulf %94, %93 : vector<10x32xf32>
    %c1_47 = arith.constant 1 : index
    %c0_48 = arith.constant 0 : index
    %96 = vector.load %arg7[%c1_47, %c0_48] : memref<2x581xf32, #tpu.memory_space<vmem>>, vector<1x32xf32>
    %97 = vector.broadcast %96 : vector<1x32xf32> to vector<10x32xf32>
    %98 = arith.addf %95, %97 : vector<10x32xf32>
    %cst_49 = arith.constant 0.000000e+00 : f32
    %99 = vector.broadcast %cst_49 : f32 to vector<10x32xf32>
    %100 = arith.maximumf %98, %99 : vector<10x32xf32>
    %c1_50 = arith.constant 1 : index
    %c32_51 = arith.constant 32 : index
    %101 = vector.load %arg7[%c1_50, %c32_51] : memref<2x581xf32, #tpu.memory_space<vmem>>, vector<1x32xf32>
    %c1_52 = arith.constant 1 : index
    %c64_53 = arith.constant 64 : index
    %102 = vector.load %arg7[%c1_52, %c64_53] : memref<2x581xf32, #tpu.memory_space<vmem>>, vector<1x1xf32>
    %103 = vector.broadcast %101 : vector<1x32xf32> to vector<10x32xf32>
    %104 = arith.mulf %100, %103 : vector<10x32xf32>
    %cst_54 = arith.constant dense<0.000000e+00> : vector<10xf32>
    %105 = vector.multi_reduction <add>, %104, %cst_54 [1] : vector<10x32xf32> to vector<10xf32>
    %106 = vector.shape_cast %105 : vector<10xf32> to vector<10x1xf32>
    %107 = vector.broadcast %102 : vector<1x1xf32> to vector<10x1xf32>
    %108 = arith.addf %106, %107 : vector<10x1xf32>
    %109 = arith.negf %108 : vector<10x1xf32>
    %110 = math.exp %109 : vector<10x1xf32>
    %cst_55 = arith.constant 1.000000e+00 : f32
    %111 = vector.broadcast %cst_55 : f32 to vector<10x1xf32>
    %112 = arith.addf %111, %110 : vector<10x1xf32>
    %113 = arith.divf %111, %112 : vector<10x1xf32>
    %cst_56 = arith.constant dense<0xFF800000> : vector<1xf32>
    %114 = vector.multi_reduction <maximumf>, %113, %cst_56 [0] : vector<10x1xf32> to vector<1xf32>
    %115 = vector.shape_cast %114 : vector<1xf32> to vector<1x1xf32>
    %116 = vector.broadcast %115 : vector<1x1xf32> to vector<10x1xf32>
    %117 = arith.subf %113, %116 : vector<10x1xf32>
    %118 = math.exp %117 : vector<10x1xf32>
    %cst_57 = arith.constant dense<0.000000e+00> : vector<1xf32>
    %119 = vector.multi_reduction <add>, %118, %cst_57 [0] : vector<10x1xf32> to vector<1xf32>
    %120 = vector.shape_cast %119 : vector<1xf32> to vector<1x1xf32>
    %121 = vector.broadcast %120 : vector<1x1xf32> to vector<10x1xf32>
    %122 = arith.divf %118, %121 : vector<10x1xf32>
    %123 = vector.broadcast %122 : vector<10x1xf32> to vector<10x32xf32>
    %124 = arith.mulf %123, %100 : vector<10x32xf32>
    %cst_58 = arith.constant dense<0.000000e+00> : vector<32xf32>
    %125 = vector.multi_reduction <add>, %124, %cst_58 [0] : vector<10x32xf32> to vector<32xf32>
    %126 = vector.shape_cast %125 : vector<32xf32> to vector<1x32xf32>
    %c1_59 = arith.constant 1 : index
    %c0_60 = arith.constant 0 : index
    %127 = vector.load %arg11[%c1_59, %c0_60] : memref<2x32xf32, #tpu.memory_space<vmem>>, vector<1x32xf32>
    tpu.vector_store %arg11[%c1_59, %c0_60], %126 {strides = array<i32>} : memref<2x32xf32, #tpu.memory_space<vmem>>, vector<1x32xf32>,
    %c0_61 = arith.constant 0 : index
    %c0_62 = arith.constant 0 : index
    %c0_63 = arith.constant 0 : index
    %128 = vector.load %arg5[%c0_61, %c0_62, %c0_63] : memref<2x32x192xf32, #tpu.memory_space<vmem>>, vector<1x32x192xf32>
    %129 = vector.shape_cast %128 : vector<1x32x192xf32> to vector<32x192xf32>
    %130 = vector.extract_strided_slice %129 {offsets = [0, 0], sizes = [32, 96], strides = [1, 1]} : vector<32x192xf32> to vector<32x96xf32>
    %cst_64 = arith.constant dense<0.000000e+00> : vector<8x96xf32>
    %131 = tpu.matmul %19, %130, %cst_64 {dimension_numbers = #tpu.dot_dimension_numbers<[1], [0], [0], [1], [0, 0, 1, 1], [], []>} : vector<8x32xf32>, vector<32x96xf32>, vector<8x96xf32> -> vector<8x96xf32>
    %c0_65 = arith.constant 0 : index
    %c65 = arith.constant 65 : index
    %132 = vector.load %arg7[%c0_65, %c65] : memref<2x581xf32, #tpu.memory_space<vmem>>, vector<1x96xf32>
    %133 = vector.broadcast %132 : vector<1x96xf32> to vector<8x96xf32>
    %134 = arith.addf %131, %133 : vector<8x96xf32>
    %135 = vector.extract_strided_slice %134 {offsets = [0, 0], sizes = [8, 8], strides = [1, 1]} : vector<8x96xf32> to vector<8x8xf32>
    %136 = vector.extract_strided_slice %134 {offsets = [0, 32], sizes = [8, 8], strides = [1, 1]} : vector<8x96xf32> to vector<8x8xf32>
    %137 = vector.extract_strided_slice %134 {offsets = [0, 64], sizes = [8, 8], strides = [1, 1]} : vector<8x96xf32> to vector<8x8xf32>
    "tpu.trace_start"() <{level = 10 : i32, message = "qd,kd->qk"}> : () -> ()
    %cst_66 = arith.constant dense<0.000000e+00> : vector<8x8xf32>
    %138 = tpu.matmul %135, %136, %cst_66 {dimension_numbers = #tpu.dot_dimension_numbers<[1], [1], [0], [0], [0, 0, 1, 0], [], []>} : vector<8x8xf32>, vector<8x8xf32>, vector<8x8xf32> -> vector<8x8xf32>
    "tpu.trace_stop"() : () -> ()
    %cst_67 = arith.constant dense<0xFF800000> : vector<8xf32>
    %139 = vector.multi_reduction <maximumf>, %138, %cst_67 [1] : vector<8x8xf32> to vector<8xf32>
    %140 = vector.shape_cast %139 : vector<8xf32> to vector<8x1xf32>
    %141 = vector.broadcast %140 : vector<8x1xf32> to vector<8x8xf32>
    %142 = arith.subf %138, %141 : vector<8x8xf32>
    %143 = math.exp %142 : vector<8x8xf32>
    %cst_68 = arith.constant dense<0.000000e+00> : vector<8xf32>
    %144 = vector.multi_reduction <add>, %143, %cst_68 [1] : vector<8x8xf32> to vector<8xf32>
    %145 = vector.shape_cast %144 : vector<8xf32> to vector<8x1xf32>
    %146 = vector.broadcast %145 : vector<8x1xf32> to vector<8x8xf32>
    %147 = arith.divf %143, %146 : vector<8x8xf32>
    %cst_69 = arith.constant dense<0.000000e+00> : vector<8x8xf32>
    %148 = tpu.matmul %147, %137, %cst_69 {dimension_numbers = #tpu.dot_dimension_numbers<[1], [0], [0], [1], [0, 0, 1, 1], [], []>} : vector<8x8xf32>, vector<8x8xf32>, vector<8x8xf32> -> vector<8x8xf32>
    %c0_70 = arith.constant 0 : index
    %c0_71 = arith.constant 0 : index
    %149 = vector.load %arg10[%c0_70, %c0_71] : memref<8x32xf32, #tpu.memory_space<vmem>>, vector<8x8xf32>
    tpu.vector_store %arg10[%c0_70, %c0_71], %148 {strides = array<i32>} : memref<8x32xf32, #tpu.memory_space<vmem>>, vector<8x8xf32>,
    %150 = vector.extract_strided_slice %134 {offsets = [0, 8], sizes = [8, 8], strides = [1, 1]} : vector<8x96xf32> to vector<8x8xf32>
    %151 = vector.extract_strided_slice %134 {offsets = [0, 40], sizes = [8, 8], strides = [1, 1]} : vector<8x96xf32> to vector<8x8xf32>
    %152 = vector.extract_strided_slice %134 {offsets = [0, 72], sizes = [8, 8], strides = [1, 1]} : vector<8x96xf32> to vector<8x8xf32>
    "tpu.trace_start"() <{level = 10 : i32, message = "qd,kd->qk"}> : () -> ()
    %cst_72 = arith.constant dense<0.000000e+00> : vector<8x8xf32>
    %153 = tpu.matmul %150, %151, %cst_72 {dimension_numbers = #tpu.dot_dimension_numbers<[1], [1], [0], [0], [0, 0, 1, 0], [], []>} : vector<8x8xf32>, vector<8x8xf32>, vector<8x8xf32> -> vector<8x8xf32>
    "tpu.trace_stop"() : () -> ()
    %cst_73 = arith.constant dense<0xFF800000> : vector<8xf32>
    %154 = vector.multi_reduction <maximumf>, %153, %cst_73 [1] : vector<8x8xf32> to vector<8xf32>
    %155 = vector.shape_cast %154 : vector<8xf32> to vector<8x1xf32>
    %156 = vector.broadcast %155 : vector<8x1xf32> to vector<8x8xf32>
    %157 = arith.subf %153, %156 : vector<8x8xf32>
    %158 = math.exp %157 : vector<8x8xf32>
    %cst_74 = arith.constant dense<0.000000e+00> : vector<8xf32>
    %159 = vector.multi_reduction <add>, %158, %cst_74 [1] : vector<8x8xf32> to vector<8xf32>
    %160 = vector.shape_cast %159 : vector<8xf32> to vector<8x1xf32>
    %161 = vector.broadcast %160 : vector<8x1xf32> to vector<8x8xf32>
    %162 = arith.divf %158, %161 : vector<8x8xf32>
    %cst_75 = arith.constant dense<0.000000e+00> : vector<8x8xf32>
    %163 = tpu.matmul %162, %152, %cst_75 {dimension_numbers = #tpu.dot_dimension_numbers<[1], [0], [0], [1], [0, 0, 1, 1], [], []>} : vector<8x8xf32>, vector<8x8xf32>, vector<8x8xf32> -> vector<8x8xf32>
    %c0_76 = arith.constant 0 : index
    %c8 = arith.constant 8 : index
    %164 = vector.load %arg10[%c0_76, %c8] : memref<8x32xf32, #tpu.memory_space<vmem>>, vector<8x8xf32>
    tpu.vector_store %arg10[%c0_76, %c8], %163 {strides = array<i32>} : memref<8x32xf32, #tpu.memory_space<vmem>>, vector<8x8xf32>,
    %165 = vector.extract_strided_slice %134 {offsets = [0, 16], sizes = [8, 8], strides = [1, 1]} : vector<8x96xf32> to vector<8x8xf32>
    %166 = vector.extract_strided_slice %134 {offsets = [0, 48], sizes = [8, 8], strides = [1, 1]} : vector<8x96xf32> to vector<8x8xf32>
    %167 = vector.extract_strided_slice %134 {offsets = [0, 80], sizes = [8, 8], strides = [1, 1]} : vector<8x96xf32> to vector<8x8xf32>
    "tpu.trace_start"() <{level = 10 : i32, message = "qd,kd->qk"}> : () -> ()
    %cst_77 = arith.constant dense<0.000000e+00> : vector<8x8xf32>
    %168 = tpu.matmul %165, %166, %cst_77 {dimension_numbers = #tpu.dot_dimension_numbers<[1], [1], [0], [0], [0, 0, 1, 0], [], []>} : vector<8x8xf32>, vector<8x8xf32>, vector<8x8xf32> -> vector<8x8xf32>
    "tpu.trace_stop"() : () -> ()
    %cst_78 = arith.constant dense<0xFF800000> : vector<8xf32>
    %169 = vector.multi_reduction <maximumf>, %168, %cst_78 [1] : vector<8x8xf32> to vector<8xf32>
    %170 = vector.shape_cast %169 : vector<8xf32> to vector<8x1xf32>
    %171 = vector.broadcast %170 : vector<8x1xf32> to vector<8x8xf32>
    %172 = arith.subf %168, %171 : vector<8x8xf32>
    %173 = math.exp %172 : vector<8x8xf32>
    %cst_79 = arith.constant dense<0.000000e+00> : vector<8xf32>
    %174 = vector.multi_reduction <add>, %173, %cst_79 [1] : vector<8x8xf32> to vector<8xf32>
    %175 = vector.shape_cast %174 : vector<8xf32> to vector<8x1xf32>
    %176 = vector.broadcast %175 : vector<8x1xf32> to vector<8x8xf32>
    %177 = arith.divf %173, %176 : vector<8x8xf32>
    %cst_80 = arith.constant dense<0.000000e+00> : vector<8x8xf32>
    %178 = tpu.matmul %177, %167, %cst_80 {dimension_numbers = #tpu.dot_dimension_numbers<[1], [0], [0], [1], [0, 0, 1, 1], [], []>} : vector<8x8xf32>, vector<8x8xf32>, vector<8x8xf32> -> vector<8x8xf32>
    %c0_81 = arith.constant 0 : index
    %c16 = arith.constant 16 : index
    %179 = vector.load %arg10[%c0_81, %c16] : memref<8x32xf32, #tpu.memory_space<vmem>>, vector<8x8xf32>
    tpu.vector_store %arg10[%c0_81, %c16], %178 {strides = array<i32>} : memref<8x32xf32, #tpu.memory_space<vmem>>, vector<8x8xf32>,
    %180 = vector.extract_strided_slice %134 {offsets = [0, 24], sizes = [8, 8], strides = [1, 1]} : vector<8x96xf32> to vector<8x8xf32>
    %181 = vector.extract_strided_slice %134 {offsets = [0, 56], sizes = [8, 8], strides = [1, 1]} : vector<8x96xf32> to vector<8x8xf32>
    %182 = vector.extract_strided_slice %134 {offsets = [0, 88], sizes = [8, 8], strides = [1, 1]} : vector<8x96xf32> to vector<8x8xf32>
    "tpu.trace_start"() <{level = 10 : i32, message = "qd,kd->qk"}> : () -> ()
    %cst_82 = arith.constant dense<0.000000e+00> : vector<8x8xf32>
    %183 = tpu.matmul %180, %181, %cst_82 {dimension_numbers = #tpu.dot_dimension_numbers<[1], [1], [0], [0], [0, 0, 1, 0], [], []>} : vector<8x8xf32>, vector<8x8xf32>, vector<8x8xf32> -> vector<8x8xf32>
    "tpu.trace_stop"() : () -> ()
    %cst_83 = arith.constant dense<0xFF800000> : vector<8xf32>
    %184 = vector.multi_reduction <maximumf>, %183, %cst_83 [1] : vector<8x8xf32> to vector<8xf32>
    %185 = vector.shape_cast %184 : vector<8xf32> to vector<8x1xf32>
    %186 = vector.broadcast %185 : vector<8x1xf32> to vector<8x8xf32>
    %187 = arith.subf %183, %186 : vector<8x8xf32>
    %188 = math.exp %187 : vector<8x8xf32>
    %cst_84 = arith.constant dense<0.000000e+00> : vector<8xf32>
    %189 = vector.multi_reduction <add>, %188, %cst_84 [1] : vector<8x8xf32> to vector<8xf32>
    %190 = vector.shape_cast %189 : vector<8xf32> to vector<8x1xf32>
    %191 = vector.broadcast %190 : vector<8x1xf32> to vector<8x8xf32>
    %192 = arith.divf %188, %191 : vector<8x8xf32>
    %cst_85 = arith.constant dense<0.000000e+00> : vector<8x8xf32>
    %193 = tpu.matmul %192, %182, %cst_85 {dimension_numbers = #tpu.dot_dimension_numbers<[1], [0], [0], [1], [0, 0, 1, 1], [], []>} : vector<8x8xf32>, vector<8x8xf32>, vector<8x8xf32> -> vector<8x8xf32>
    %c0_86 = arith.constant 0 : index
    %c24 = arith.constant 24 : index
    %194 = vector.load %arg10[%c0_86, %c24] : memref<8x32xf32, #tpu.memory_space<vmem>>, vector<8x8xf32>
    tpu.vector_store %arg10[%c0_86, %c24], %193 {strides = array<i32>} : memref<8x32xf32, #tpu.memory_space<vmem>>, vector<8x8xf32>,
    %c0_87 = arith.constant 0 : index
    %c0_88 = arith.constant 0 : index
    %195 = vector.load %arg10[%c0_87, %c0_88] : memref<8x32xf32, #tpu.memory_space<vmem>>, vector<8x32xf32>
    %196 = vector.extract_strided_slice %129 {offsets = [0, 96], sizes = [32, 32], strides = [1, 1]} : vector<32x192xf32> to vector<32x32xf32>
    %cst_89 = arith.constant dense<0.000000e+00> : vector<8x32xf32>
    %197 = tpu.matmul %195, %196, %cst_89 {dimension_numbers = #tpu.dot_dimension_numbers<[1], [0], [0], [1], [0, 0, 1, 1], [], []>} : vector<8x32xf32>, vector<32x32xf32>, vector<8x32xf32> -> vector<8x32xf32>
    %c0_90 = arith.constant 0 : index
    %c161 = arith.constant 161 : index
    %198 = vector.load %arg7[%c0_90, %c161] : memref<2x581xf32, #tpu.memory_space<vmem>>, vector<1x32xf32>
    %199 = vector.broadcast %198 : vector<1x32xf32> to vector<8x32xf32>
    %200 = arith.addf %197, %199 : vector<8x32xf32>
    %201 = arith.addf %19, %200 : vector<8x32xf32>
    %c0_91 = arith.constant 0 : index
    %c289 = arith.constant 289 : index
    %202 = vector.load %arg7[%c0_91, %c289] : memref<2x581xf32, #tpu.memory_space<vmem>>, vector<1x32xf32>
    %c0_92 = arith.constant 0 : index
    %c321 = arith.constant 321 : index
    %203 = vector.load %arg7[%c0_92, %c321] : memref<2x581xf32, #tpu.memory_space<vmem>>, vector<1x32xf32>
    %cst_93 = arith.constant dense<0.000000e+00> : vector<8xf32>
    %204 = vector.multi_reduction <add>, %201, %cst_93 [1] : vector<8x32xf32> to vector<8xf32>
    %205 = vector.shape_cast %204 : vector<8xf32> to vector<8x1xf32>
    %cst_94 = arith.constant 3.200000e+01 : f32
    %206 = vector.broadcast %cst_94 : f32 to vector<8x1xf32>
    %207 = arith.divf %205, %206 : vector<8x1xf32>
    %208 = vector.broadcast %207 : vector<8x1xf32> to vector<8x32xf32>
    %209 = arith.subf %201, %208 : vector<8x32xf32>
    %210 = arith.mulf %209, %209 : vector<8x32xf32>
    %cst_95 = arith.constant dense<0.000000e+00> : vector<8xf32>
    %211 = vector.multi_reduction <add>, %210, %cst_95 [1] : vector<8x32xf32> to vector<8xf32>
    %212 = vector.shape_cast %211 : vector<8xf32> to vector<8x1xf32>
    %cst_96 = arith.constant 3.200000e+01 : f32
    %213 = vector.broadcast %cst_96 : f32 to vector<8x1xf32>
    %214 = arith.divf %212, %213 : vector<8x1xf32>
    %215 = vector.broadcast %207 : vector<8x1xf32> to vector<8x32xf32>
    %216 = arith.subf %201, %215 : vector<8x32xf32>
    %cst_97 = arith.constant 9.99999974E-6 : f32
    %217 = vector.broadcast %cst_97 : f32 to vector<8x1xf32>
    %218 = arith.addf %214, %217 : vector<8x1xf32>
    %219 = math.rsqrt %218 : vector<8x1xf32>
    %220 = vector.broadcast %219 : vector<8x1xf32> to vector<8x32xf32>
    %221 = arith.mulf %216, %220 : vector<8x32xf32>
    %222 = vector.broadcast %202 : vector<1x32xf32> to vector<8x32xf32>
    %223 = arith.mulf %221, %222 : vector<8x32xf32>
    %224 = vector.broadcast %203 : vector<1x32xf32> to vector<8x32xf32>
    %225 = arith.addf %223, %224 : vector<8x32xf32>
    %226 = vector.extract_strided_slice %129 {offsets = [0, 128], sizes = [32, 64], strides = [1, 1]} : vector<32x192xf32> to vector<32x64xf32>
    %cst_98 = arith.constant dense<0.000000e+00> : vector<8x64xf32>
    %227 = tpu.matmul %225, %226, %cst_98 {dimension_numbers = #tpu.dot_dimension_numbers<[1], [0], [0], [1], [0, 0, 1, 1], [], []>} : vector<8x32xf32>, vector<32x64xf32>, vector<8x64xf32> -> vector<8x64xf32>
    %c0_99 = arith.constant 0 : index
    %c193 = arith.constant 193 : index
    %228 = vector.load %arg7[%c0_99, %c193] : memref<2x581xf32, #tpu.memory_space<vmem>>, vector<1x64xf32>
    %229 = vector.broadcast %228 : vector<1x64xf32> to vector<8x64xf32>
    %230 = arith.addf %227, %229 : vector<8x64xf32>
    %cst_100 = arith.constant 0.000000e+00 : f32
    %231 = vector.broadcast %cst_100 : f32 to vector<8x64xf32>
    %232 = arith.maximumf %230, %231 : vector<8x64xf32>
    %c0_101 = arith.constant 0 : index
    %c0_102 = arith.constant 0 : index
    %c0_103 = arith.constant 0 : index
    %233 = vector.load %arg6[%c0_101, %c0_102, %c0_103] : memref<2x64x32xf32, #tpu.memory_space<vmem>>, vector<1x64x32xf32>
    %234 = vector.shape_cast %233 : vector<1x64x32xf32> to vector<64x32xf32>
    %cst_104 = arith.constant dense<0.000000e+00> : vector<8x32xf32>
    %235 = tpu.matmul %232, %234, %cst_104 {dimension_numbers = #tpu.dot_dimension_numbers<[1], [0], [0], [1], [0, 0, 1, 1], [], []>} : vector<8x64xf32>, vector<64x32xf32>, vector<8x32xf32> -> vector<8x32xf32>
    %c0_105 = arith.constant 0 : index
    %c257 = arith.constant 257 : index
    %236 = vector.load %arg7[%c0_105, %c257] : memref<2x581xf32, #tpu.memory_space<vmem>>, vector<1x32xf32>
    %237 = vector.broadcast %236 : vector<1x32xf32> to vector<8x32xf32>
    %238 = arith.addf %235, %237 : vector<8x32xf32>
    %239 = arith.addf %225, %238 : vector<8x32xf32>
    %c0_106 = arith.constant 0 : index
    %c353 = arith.constant 353 : index
    %240 = vector.load %arg7[%c0_106, %c353] : memref<2x581xf32, #tpu.memory_space<vmem>>, vector<1x32xf32>
    %c0_107 = arith.constant 0 : index
    %c385 = arith.constant 385 : index
    %241 = vector.load %arg7[%c0_107, %c385] : memref<2x581xf32, #tpu.memory_space<vmem>>, vector<1x32xf32>
    %cst_108 = arith.constant dense<0.000000e+00> : vector<8xf32>
    %242 = vector.multi_reduction <add>, %239, %cst_108 [1] : vector<8x32xf32> to vector<8xf32>
    %243 = vector.shape_cast %242 : vector<8xf32> to vector<8x1xf32>
    %cst_109 = arith.constant 3.200000e+01 : f32
    %244 = vector.broadcast %cst_109 : f32 to vector<8x1xf32>
    %245 = arith.divf %243, %244 : vector<8x1xf32>
    %246 = vector.broadcast %245 : vector<8x1xf32> to vector<8x32xf32>
    %247 = arith.subf %239, %246 : vector<8x32xf32>
    %248 = arith.mulf %247, %247 : vector<8x32xf32>
    %cst_110 = arith.constant dense<0.000000e+00> : vector<8xf32>
    %249 = vector.multi_reduction <add>, %248, %cst_110 [1] : vector<8x32xf32> to vector<8xf32>
    %250 = vector.shape_cast %249 : vector<8xf32> to vector<8x1xf32>
    %cst_111 = arith.constant 3.200000e+01 : f32
    %251 = vector.broadcast %cst_111 : f32 to vector<8x1xf32>
    %252 = arith.divf %250, %251 : vector<8x1xf32>
    %253 = vector.broadcast %245 : vector<8x1xf32> to vector<8x32xf32>
    %254 = arith.subf %239, %253 : vector<8x32xf32>
    %cst_112 = arith.constant 9.99999974E-6 : f32
    %255 = vector.broadcast %cst_112 : f32 to vector<8x1xf32>
    %256 = arith.addf %252, %255 : vector<8x1xf32>
    %257 = math.rsqrt %256 : vector<8x1xf32>
    %258 = vector.broadcast %257 : vector<8x1xf32> to vector<8x32xf32>
    %259 = arith.mulf %254, %258 : vector<8x32xf32>
    %260 = vector.broadcast %240 : vector<1x32xf32> to vector<8x32xf32>
    %261 = arith.mulf %259, %260 : vector<8x32xf32>
    %262 = vector.broadcast %241 : vector<1x32xf32> to vector<8x32xf32>
    %263 = arith.addf %261, %262 : vector<8x32xf32>
    %c1_113 = arith.constant 1 : index
    %c0_114 = arith.constant 0 : index
    %c0_115 = arith.constant 0 : index
    %264 = vector.load %arg5[%c1_113, %c0_114, %c0_115] : memref<2x32x192xf32, #tpu.memory_space<vmem>>, vector<1x32x192xf32>
    %265 = vector.shape_cast %264 : vector<1x32x192xf32> to vector<32x192xf32>
    %266 = vector.extract_strided_slice %265 {offsets = [0, 0], sizes = [32, 96], strides = [1, 1]} : vector<32x192xf32> to vector<32x96xf32>
    %cst_116 = arith.constant dense<0.000000e+00> : vector<8x96xf32>
    %267 = tpu.matmul %263, %266, %cst_116 {dimension_numbers = #tpu.dot_dimension_numbers<[1], [0], [0], [1], [0, 0, 1, 1], [], []>} : vector<8x32xf32>, vector<32x96xf32>, vector<8x96xf32> -> vector<8x96xf32>
    %c1_117 = arith.constant 1 : index
    %c65_118 = arith.constant 65 : index
    %268 = vector.load %arg7[%c1_117, %c65_118] : memref<2x581xf32, #tpu.memory_space<vmem>>, vector<1x96xf32>
    %269 = vector.broadcast %268 : vector<1x96xf32> to vector<8x96xf32>
    %270 = arith.addf %267, %269 : vector<8x96xf32>
    %271 = vector.extract_strided_slice %270 {offsets = [0, 0], sizes = [8, 8], strides = [1, 1]} : vector<8x96xf32> to vector<8x8xf32>
    %272 = vector.extract_strided_slice %270 {offsets = [0, 32], sizes = [8, 8], strides = [1, 1]} : vector<8x96xf32> to vector<8x8xf32>
    %273 = vector.extract_strided_slice %270 {offsets = [0, 64], sizes = [8, 8], strides = [1, 1]} : vector<8x96xf32> to vector<8x8xf32>
    "tpu.trace_start"() <{level = 10 : i32, message = "qd,kd->qk"}> : () -> ()
    %cst_119 = arith.constant dense<0.000000e+00> : vector<8x8xf32>
    %274 = tpu.matmul %271, %272, %cst_119 {dimension_numbers = #tpu.dot_dimension_numbers<[1], [1], [0], [0], [0, 0, 1, 0], [], []>} : vector<8x8xf32>, vector<8x8xf32>, vector<8x8xf32> -> vector<8x8xf32>
    "tpu.trace_stop"() : () -> ()
    %cst_120 = arith.constant dense<0xFF800000> : vector<8xf32>
    %275 = vector.multi_reduction <maximumf>, %274, %cst_120 [1] : vector<8x8xf32> to vector<8xf32>
    %276 = vector.shape_cast %275 : vector<8xf32> to vector<8x1xf32>
    %277 = vector.broadcast %276 : vector<8x1xf32> to vector<8x8xf32>
    %278 = arith.subf %274, %277 : vector<8x8xf32>
    %279 = math.exp %278 : vector<8x8xf32>
    %cst_121 = arith.constant dense<0.000000e+00> : vector<8xf32>
    %280 = vector.multi_reduction <add>, %279, %cst_121 [1] : vector<8x8xf32> to vector<8xf32>
    %281 = vector.shape_cast %280 : vector<8xf32> to vector<8x1xf32>
    %282 = vector.broadcast %281 : vector<8x1xf32> to vector<8x8xf32>
    %283 = arith.divf %279, %282 : vector<8x8xf32>
    %cst_122 = arith.constant dense<0.000000e+00> : vector<8x8xf32>
    %284 = tpu.matmul %283, %273, %cst_122 {dimension_numbers = #tpu.dot_dimension_numbers<[1], [0], [0], [1], [0, 0, 1, 1], [], []>} : vector<8x8xf32>, vector<8x8xf32>, vector<8x8xf32> -> vector<8x8xf32>
    %c0_123 = arith.constant 0 : index
    %c0_124 = arith.constant 0 : index
    %285 = vector.load %arg10[%c0_123, %c0_124] : memref<8x32xf32, #tpu.memory_space<vmem>>, vector<8x8xf32>
    tpu.vector_store %arg10[%c0_123, %c0_124], %284 {strides = array<i32>} : memref<8x32xf32, #tpu.memory_space<vmem>>, vector<8x8xf32>,
    %286 = vector.extract_strided_slice %270 {offsets = [0, 8], sizes = [8, 8], strides = [1, 1]} : vector<8x96xf32> to vector<8x8xf32>
    %287 = vector.extract_strided_slice %270 {offsets = [0, 40], sizes = [8, 8], strides = [1, 1]} : vector<8x96xf32> to vector<8x8xf32>
    %288 = vector.extract_strided_slice %270 {offsets = [0, 72], sizes = [8, 8], strides = [1, 1]} : vector<8x96xf32> to vector<8x8xf32>
    "tpu.trace_start"() <{level = 10 : i32, message = "qd,kd->qk"}> : () -> ()
    %cst_125 = arith.constant dense<0.000000e+00> : vector<8x8xf32>
    %289 = tpu.matmul %286, %287, %cst_125 {dimension_numbers = #tpu.dot_dimension_numbers<[1], [1], [0], [0], [0, 0, 1, 0], [], []>} : vector<8x8xf32>, vector<8x8xf32>, vector<8x8xf32> -> vector<8x8xf32>
    "tpu.trace_stop"() : () -> ()
    %cst_126 = arith.constant dense<0xFF800000> : vector<8xf32>
    %290 = vector.multi_reduction <maximumf>, %289, %cst_126 [1] : vector<8x8xf32> to vector<8xf32>
    %291 = vector.shape_cast %290 : vector<8xf32> to vector<8x1xf32>
    %292 = vector.broadcast %291 : vector<8x1xf32> to vector<8x8xf32>
    %293 = arith.subf %289, %292 : vector<8x8xf32>
    %294 = math.exp %293 : vector<8x8xf32>
    %cst_127 = arith.constant dense<0.000000e+00> : vector<8xf32>
    %295 = vector.multi_reduction <add>, %294, %cst_127 [1] : vector<8x8xf32> to vector<8xf32>
    %296 = vector.shape_cast %295 : vector<8xf32> to vector<8x1xf32>
    %297 = vector.broadcast %296 : vector<8x1xf32> to vector<8x8xf32>
    %298 = arith.divf %294, %297 : vector<8x8xf32>
    %cst_128 = arith.constant dense<0.000000e+00> : vector<8x8xf32>
    %299 = tpu.matmul %298, %288, %cst_128 {dimension_numbers = #tpu.dot_dimension_numbers<[1], [0], [0], [1], [0, 0, 1, 1], [], []>} : vector<8x8xf32>, vector<8x8xf32>, vector<8x8xf32> -> vector<8x8xf32>
    %c0_129 = arith.constant 0 : index
    %c8_130 = arith.constant 8 : index
    %300 = vector.load %arg10[%c0_129, %c8_130] : memref<8x32xf32, #tpu.memory_space<vmem>>, vector<8x8xf32>
    tpu.vector_store %arg10[%c0_129, %c8_130], %299 {strides = array<i32>} : memref<8x32xf32, #tpu.memory_space<vmem>>, vector<8x8xf32>,
    %301 = vector.extract_strided_slice %270 {offsets = [0, 16], sizes = [8, 8], strides = [1, 1]} : vector<8x96xf32> to vector<8x8xf32>
    %302 = vector.extract_strided_slice %270 {offsets = [0, 48], sizes = [8, 8], strides = [1, 1]} : vector<8x96xf32> to vector<8x8xf32>
    %303 = vector.extract_strided_slice %270 {offsets = [0, 80], sizes = [8, 8], strides = [1, 1]} : vector<8x96xf32> to vector<8x8xf32>
    "tpu.trace_start"() <{level = 10 : i32, message = "qd,kd->qk"}> : () -> ()
    %cst_131 = arith.constant dense<0.000000e+00> : vector<8x8xf32>
    %304 = tpu.matmul %301, %302, %cst_131 {dimension_numbers = #tpu.dot_dimension_numbers<[1], [1], [0], [0], [0, 0, 1, 0], [], []>} : vector<8x8xf32>, vector<8x8xf32>, vector<8x8xf32> -> vector<8x8xf32>
    "tpu.trace_stop"() : () -> ()
    %cst_132 = arith.constant dense<0xFF800000> : vector<8xf32>
    %305 = vector.multi_reduction <maximumf>, %304, %cst_132 [1] : vector<8x8xf32> to vector<8xf32>
    %306 = vector.shape_cast %305 : vector<8xf32> to vector<8x1xf32>
    %307 = vector.broadcast %306 : vector<8x1xf32> to vector<8x8xf32>
    %308 = arith.subf %304, %307 : vector<8x8xf32>
    %309 = math.exp %308 : vector<8x8xf32>
    %cst_133 = arith.constant dense<0.000000e+00> : vector<8xf32>
    %310 = vector.multi_reduction <add>, %309, %cst_133 [1] : vector<8x8xf32> to vector<8xf32>
    %311 = vector.shape_cast %310 : vector<8xf32> to vector<8x1xf32>
    %312 = vector.broadcast %311 : vector<8x1xf32> to vector<8x8xf32>
    %313 = arith.divf %309, %312 : vector<8x8xf32>
    %cst_134 = arith.constant dense<0.000000e+00> : vector<8x8xf32>
    %314 = tpu.matmul %313, %303, %cst_134 {dimension_numbers = #tpu.dot_dimension_numbers<[1], [0], [0], [1], [0, 0, 1, 1], [], []>} : vector<8x8xf32>, vector<8x8xf32>, vector<8x8xf32> -> vector<8x8xf32>
    %c0_135 = arith.constant 0 : index
    %c16_136 = arith.constant 16 : index
    %315 = vector.load %arg10[%c0_135, %c16_136] : memref<8x32xf32, #tpu.memory_space<vmem>>, vector<8x8xf32>
    tpu.vector_store %arg10[%c0_135, %c16_136], %314 {strides = array<i32>} : memref<8x32xf32, #tpu.memory_space<vmem>>, vector<8x8xf32>,
    %316 = vector.extract_strided_slice %270 {offsets = [0, 24], sizes = [8, 8], strides = [1, 1]} : vector<8x96xf32> to vector<8x8xf32>
    %317 = vector.extract_strided_slice %270 {offsets = [0, 56], sizes = [8, 8], strides = [1, 1]} : vector<8x96xf32> to vector<8x8xf32>
    %318 = vector.extract_strided_slice %270 {offsets = [0, 88], sizes = [8, 8], strides = [1, 1]} : vector<8x96xf32> to vector<8x8xf32>
    "tpu.trace_start"() <{level = 10 : i32, message = "qd,kd->qk"}> : () -> ()
    %cst_137 = arith.constant dense<0.000000e+00> : vector<8x8xf32>
    %319 = tpu.matmul %316, %317, %cst_137 {dimension_numbers = #tpu.dot_dimension_numbers<[1], [1], [0], [0], [0, 0, 1, 0], [], []>} : vector<8x8xf32>, vector<8x8xf32>, vector<8x8xf32> -> vector<8x8xf32>
    "tpu.trace_stop"() : () -> ()
    %cst_138 = arith.constant dense<0xFF800000> : vector<8xf32>
    %320 = vector.multi_reduction <maximumf>, %319, %cst_138 [1] : vector<8x8xf32> to vector<8xf32>
    %321 = vector.shape_cast %320 : vector<8xf32> to vector<8x1xf32>
    %322 = vector.broadcast %321 : vector<8x1xf32> to vector<8x8xf32>
    %323 = arith.subf %319, %322 : vector<8x8xf32>
    %324 = math.exp %323 : vector<8x8xf32>
    %cst_139 = arith.constant dense<0.000000e+00> : vector<8xf32>
    %325 = vector.multi_reduction <add>, %324, %cst_139 [1] : vector<8x8xf32> to vector<8xf32>
    %326 = vector.shape_cast %325 : vector<8xf32> to vector<8x1xf32>
    %327 = vector.broadcast %326 : vector<8x1xf32> to vector<8x8xf32>
    %328 = arith.divf %324, %327 : vector<8x8xf32>
    %cst_140 = arith.constant dense<0.000000e+00> : vector<8x8xf32>
    %329 = tpu.matmul %328, %318, %cst_140 {dimension_numbers = #tpu.dot_dimension_numbers<[1], [0], [0], [1], [0, 0, 1, 1], [], []>} : vector<8x8xf32>, vector<8x8xf32>, vector<8x8xf32> -> vector<8x8xf32>
    %c0_141 = arith.constant 0 : index
    %c24_142 = arith.constant 24 : index
    %330 = vector.load %arg10[%c0_141, %c24_142] : memref<8x32xf32, #tpu.memory_space<vmem>>, vector<8x8xf32>
    tpu.vector_store %arg10[%c0_141, %c24_142], %329 {strides = array<i32>} : memref<8x32xf32, #tpu.memory_space<vmem>>, vector<8x8xf32>,
    %c0_143 = arith.constant 0 : index
    %c0_144 = arith.constant 0 : index
    %331 = vector.load %arg10[%c0_143, %c0_144] : memref<8x32xf32, #tpu.memory_space<vmem>>, vector<8x32xf32>
    %332 = vector.extract_strided_slice %265 {offsets = [0, 96], sizes = [32, 32], strides = [1, 1]} : vector<32x192xf32> to vector<32x32xf32>
    %cst_145 = arith.constant dense<0.000000e+00> : vector<8x32xf32>
    %333 = tpu.matmul %331, %332, %cst_145 {dimension_numbers = #tpu.dot_dimension_numbers<[1], [0], [0], [1], [0, 0, 1, 1], [], []>} : vector<8x32xf32>, vector<32x32xf32>, vector<8x32xf32> -> vector<8x32xf32>
    %c1_146 = arith.constant 1 : index
    %c161_147 = arith.constant 161 : index
    %334 = vector.load %arg7[%c1_146, %c161_147] : memref<2x581xf32, #tpu.memory_space<vmem>>, vector<1x32xf32>
    %335 = vector.broadcast %334 : vector<1x32xf32> to vector<8x32xf32>
    %336 = arith.addf %333, %335 : vector<8x32xf32>
    %337 = arith.addf %263, %336 : vector<8x32xf32>
    %c1_148 = arith.constant 1 : index
    %c289_149 = arith.constant 289 : index
    %338 = vector.load %arg7[%c1_148, %c289_149] : memref<2x581xf32, #tpu.memory_space<vmem>>, vector<1x32xf32>
    %c1_150 = arith.constant 1 : index
    %c321_151 = arith.constant 321 : index
    %339 = vector.load %arg7[%c1_150, %c321_151] : memref<2x581xf32, #tpu.memory_space<vmem>>, vector<1x32xf32>
    %cst_152 = arith.constant dense<0.000000e+00> : vector<8xf32>
    %340 = vector.multi_reduction <add>, %337, %cst_152 [1] : vector<8x32xf32> to vector<8xf32>
    %341 = vector.shape_cast %340 : vector<8xf32> to vector<8x1xf32>
    %cst_153 = arith.constant 3.200000e+01 : f32
    %342 = vector.broadcast %cst_153 : f32 to vector<8x1xf32>
    %343 = arith.divf %341, %342 : vector<8x1xf32>
    %344 = vector.broadcast %343 : vector<8x1xf32> to vector<8x32xf32>
    %345 = arith.subf %337, %344 : vector<8x32xf32>
    %346 = arith.mulf %345, %345 : vector<8x32xf32>
    %cst_154 = arith.constant dense<0.000000e+00> : vector<8xf32>
    %347 = vector.multi_reduction <add>, %346, %cst_154 [1] : vector<8x32xf32> to vector<8xf32>
    %348 = vector.shape_cast %347 : vector<8xf32> to vector<8x1xf32>
    %cst_155 = arith.constant 3.200000e+01 : f32
    %349 = vector.broadcast %cst_155 : f32 to vector<8x1xf32>
    %350 = arith.divf %348, %349 : vector<8x1xf32>
    %351 = vector.broadcast %343 : vector<8x1xf32> to vector<8x32xf32>
    %352 = arith.subf %337, %351 : vector<8x32xf32>
    %cst_156 = arith.constant 9.99999974E-6 : f32
    %353 = vector.broadcast %cst_156 : f32 to vector<8x1xf32>
    %354 = arith.addf %350, %353 : vector<8x1xf32>
    %355 = math.rsqrt %354 : vector<8x1xf32>
    %356 = vector.broadcast %355 : vector<8x1xf32> to vector<8x32xf32>
    %357 = arith.mulf %352, %356 : vector<8x32xf32>
    %358 = vector.broadcast %338 : vector<1x32xf32> to vector<8x32xf32>
    %359 = arith.mulf %357, %358 : vector<8x32xf32>
    %360 = vector.broadcast %339 : vector<1x32xf32> to vector<8x32xf32>
    %361 = arith.addf %359, %360 : vector<8x32xf32>
    %362 = vector.extract_strided_slice %265 {offsets = [0, 128], sizes = [32, 64], strides = [1, 1]} : vector<32x192xf32> to vector<32x64xf32>
    %cst_157 = arith.constant dense<0.000000e+00> : vector<8x64xf32>
    %363 = tpu.matmul %361, %362, %cst_157 {dimension_numbers = #tpu.dot_dimension_numbers<[1], [0], [0], [1], [0, 0, 1, 1], [], []>} : vector<8x32xf32>, vector<32x64xf32>, vector<8x64xf32> -> vector<8x64xf32>
    %c1_158 = arith.constant 1 : index
    %c193_159 = arith.constant 193 : index
    %364 = vector.load %arg7[%c1_158, %c193_159] : memref<2x581xf32, #tpu.memory_space<vmem>>, vector<1x64xf32>
    %365 = vector.broadcast %364 : vector<1x64xf32> to vector<8x64xf32>
    %366 = arith.addf %363, %365 : vector<8x64xf32>
    %cst_160 = arith.constant 0.000000e+00 : f32
    %367 = vector.broadcast %cst_160 : f32 to vector<8x64xf32>
    %368 = arith.maximumf %366, %367 : vector<8x64xf32>
    %c1_161 = arith.constant 1 : index
    %c0_162 = arith.constant 0 : index
    %c0_163 = arith.constant 0 : index
    %369 = vector.load %arg6[%c1_161, %c0_162, %c0_163] : memref<2x64x32xf32, #tpu.memory_space<vmem>>, vector<1x64x32xf32>
    %370 = vector.shape_cast %369 : vector<1x64x32xf32> to vector<64x32xf32>
    %cst_164 = arith.constant dense<0.000000e+00> : vector<8x32xf32>
    %371 = tpu.matmul %368, %370, %cst_164 {dimension_numbers = #tpu.dot_dimension_numbers<[1], [0], [0], [1], [0, 0, 1, 1], [], []>} : vector<8x64xf32>, vector<64x32xf32>, vector<8x32xf32> -> vector<8x32xf32>
    %c1_165 = arith.constant 1 : index
    %c257_166 = arith.constant 257 : index
    %372 = vector.load %arg7[%c1_165, %c257_166] : memref<2x581xf32, #tpu.memory_space<vmem>>, vector<1x32xf32>
    %373 = vector.broadcast %372 : vector<1x32xf32> to vector<8x32xf32>
    %374 = arith.addf %371, %373 : vector<8x32xf32>
    %375 = arith.addf %361, %374 : vector<8x32xf32>
    %c1_167 = arith.constant 1 : index
    %c353_168 = arith.constant 353 : index
    %376 = vector.load %arg7[%c1_167, %c353_168] : memref<2x581xf32, #tpu.memory_space<vmem>>, vector<1x32xf32>
    %c1_169 = arith.constant 1 : index
    %c385_170 = arith.constant 385 : index
    %377 = vector.load %arg7[%c1_169, %c385_170] : memref<2x581xf32, #tpu.memory_space<vmem>>, vector<1x32xf32>
    %cst_171 = arith.constant dense<0.000000e+00> : vector<8xf32>
    %378 = vector.multi_reduction <add>, %375, %cst_171 [1] : vector<8x32xf32> to vector<8xf32>
    %379 = vector.shape_cast %378 : vector<8xf32> to vector<8x1xf32>
    %cst_172 = arith.constant 3.200000e+01 : f32
    %380 = vector.broadcast %cst_172 : f32 to vector<8x1xf32>
    %381 = arith.divf %379, %380 : vector<8x1xf32>
    %382 = vector.broadcast %381 : vector<8x1xf32> to vector<8x32xf32>
    %383 = arith.subf %375, %382 : vector<8x32xf32>
    %384 = arith.mulf %383, %383 : vector<8x32xf32>
    %cst_173 = arith.constant dense<0.000000e+00> : vector<8xf32>
    %385 = vector.multi_reduction <add>, %384, %cst_173 [1] : vector<8x32xf32> to vector<8xf32>
    %386 = vector.shape_cast %385 : vector<8xf32> to vector<8x1xf32>
    %cst_174 = arith.constant 3.200000e+01 : f32
    %387 = vector.broadcast %cst_174 : f32 to vector<8x1xf32>
    %388 = arith.divf %386, %387 : vector<8x1xf32>
    %389 = vector.broadcast %381 : vector<8x1xf32> to vector<8x32xf32>
    %390 = arith.subf %375, %389 : vector<8x32xf32>
    %cst_175 = arith.constant 9.99999974E-6 : f32
    %391 = vector.broadcast %cst_175 : f32 to vector<8x1xf32>
    %392 = arith.addf %388, %391 : vector<8x1xf32>
    %393 = math.rsqrt %392 : vector<8x1xf32>
    %394 = vector.broadcast %393 : vector<8x1xf32> to vector<8x32xf32>
    %395 = arith.mulf %390, %394 : vector<8x32xf32>
    %396 = vector.broadcast %376 : vector<1x32xf32> to vector<8x32xf32>
    %397 = arith.mulf %395, %396 : vector<8x32xf32>
    %398 = vector.broadcast %377 : vector<1x32xf32> to vector<8x32xf32>
    %399 = arith.addf %397, %398 : vector<8x32xf32>
    %c0_176 = arith.constant 0 : index
    %c417 = arith.constant 417 : index
    %400 = vector.load %arg7[%c0_176, %c417] : memref<2x581xf32, #tpu.memory_space<vmem>>, vector<1x32xf32>
    %c0_177 = arith.constant 0 : index
    %c449 = arith.constant 449 : index
    %401 = vector.load %arg7[%c0_177, %c449] : memref<2x581xf32, #tpu.memory_space<vmem>>, vector<1x32xf32>
    %cst_178 = arith.constant dense<0.000000e+00> : vector<8xf32>
    %402 = vector.multi_reduction <add>, %399, %cst_178 [1] : vector<8x32xf32> to vector<8xf32>
    %403 = vector.shape_cast %402 : vector<8xf32> to vector<8x1xf32>
    %cst_179 = arith.constant 3.200000e+01 : f32
    %404 = vector.broadcast %cst_179 : f32 to vector<8x1xf32>
    %405 = arith.divf %403, %404 : vector<8x1xf32>
    %406 = vector.broadcast %405 : vector<8x1xf32> to vector<8x32xf32>
    %407 = arith.subf %399, %406 : vector<8x32xf32>
    %408 = arith.mulf %407, %407 : vector<8x32xf32>
    %cst_180 = arith.constant dense<0.000000e+00> : vector<8xf32>
    %409 = vector.multi_reduction <add>, %408, %cst_180 [1] : vector<8x32xf32> to vector<8xf32>
    %410 = vector.shape_cast %409 : vector<8xf32> to vector<8x1xf32>
    %cst_181 = arith.constant 3.200000e+01 : f32
    %411 = vector.broadcast %cst_181 : f32 to vector<8x1xf32>
    %412 = arith.divf %410, %411 : vector<8x1xf32>
    %413 = vector.broadcast %405 : vector<8x1xf32> to vector<8x32xf32>
    %414 = arith.subf %399, %413 : vector<8x32xf32>
    %cst_182 = arith.constant 9.99999974E-6 : f32
    %415 = vector.broadcast %cst_182 : f32 to vector<8x1xf32>
    %416 = arith.addf %412, %415 : vector<8x1xf32>
    %417 = math.rsqrt %416 : vector<8x1xf32>
    %418 = vector.broadcast %417 : vector<8x1xf32> to vector<8x32xf32>
    %419 = arith.mulf %414, %418 : vector<8x32xf32>
    %420 = vector.broadcast %400 : vector<1x32xf32> to vector<8x32xf32>
    %421 = arith.mulf %419, %420 : vector<8x32xf32>
    %422 = vector.broadcast %401 : vector<1x32xf32> to vector<8x32xf32>
    %423 = arith.addf %421, %422 : vector<8x32xf32>
    %c0_183 = arith.constant 0 : index
    %c0_184 = arith.constant 0 : index
    %424 = vector.load %arg11[%c0_183, %c0_184] : memref<2x32xf32, #tpu.memory_space<vmem>>, vector<2x32xf32>
    %c0_185 = arith.constant 0 : index
    %c481 = arith.constant 481 : index
    %425 = vector.load %arg7[%c0_185, %c481] : memref<2x581xf32, #tpu.memory_space<vmem>>, vector<1x32xf32>
    %c0_186 = arith.constant 0 : index
    %c513 = arith.constant 513 : index
    %426 = vector.load %arg7[%c0_186, %c513] : memref<2x581xf32, #tpu.memory_space<vmem>>, vector<1x1xf32>
    %427 = vector.broadcast %425 : vector<1x32xf32> to vector<2x32xf32>
    %428 = arith.mulf %424, %427 : vector<2x32xf32>
    %cst_187 = arith.constant dense<0.000000e+00> : vector<2xf32>
    %429 = vector.multi_reduction <add>, %428, %cst_187 [1] : vector<2x32xf32> to vector<2xf32>
    %430 = vector.shape_cast %429 : vector<2xf32> to vector<2x1xf32>
    %431 = vector.broadcast %426 : vector<1x1xf32> to vector<2x1xf32>
    %432 = arith.addf %430, %431 : vector<2x1xf32>
    %433 = arith.negf %432 : vector<2x1xf32>
    %434 = math.exp %433 : vector<2x1xf32>
    %cst_188 = arith.constant 1.000000e+00 : f32
    %435 = vector.broadcast %cst_188 : f32 to vector<2x1xf32>
    %436 = arith.addf %435, %434 : vector<2x1xf32>
    %437 = arith.divf %435, %436 : vector<2x1xf32>
    %cst_189 = arith.constant dense<0xFF800000> : vector<1xf32>
    %438 = vector.multi_reduction <maximumf>, %437, %cst_189 [0] : vector<2x1xf32> to vector<1xf32>
    %439 = vector.shape_cast %438 : vector<1xf32> to vector<1x1xf32>
    %440 = vector.broadcast %439 : vector<1x1xf32> to vector<2x1xf32>
    %441 = arith.subf %437, %440 : vector<2x1xf32>
    %442 = math.exp %441 : vector<2x1xf32>
    %cst_190 = arith.constant dense<0.000000e+00> : vector<1xf32>
    %443 = vector.multi_reduction <add>, %442, %cst_190 [0] : vector<2x1xf32> to vector<1xf32>
    %444 = vector.shape_cast %443 : vector<1xf32> to vector<1x1xf32>
    %445 = vector.broadcast %444 : vector<1x1xf32> to vector<2x1xf32>
    %446 = arith.divf %442, %445 : vector<2x1xf32>
    %447 = vector.broadcast %446 : vector<2x1xf32> to vector<2x32xf32>
    %448 = arith.mulf %447, %424 : vector<2x32xf32>
    %cst_191 = arith.constant dense<0.000000e+00> : vector<32xf32>
    %449 = vector.multi_reduction <add>, %448, %cst_191 [0] : vector<2x32xf32> to vector<32xf32>
    %450 = vector.shape_cast %449 : vector<32xf32> to vector<1x32xf32>
    %c0_192 = arith.constant 0 : index
    %c514 = arith.constant 514 : index
    %451 = vector.load %arg7[%c0_192, %c514] : memref<2x581xf32, #tpu.memory_space<vmem>>, vector<1x32xf32>
    %c0_193 = arith.constant 0 : index
    %c546 = arith.constant 546 : index
    %452 = vector.load %arg7[%c0_193, %c546] : memref<2x581xf32, #tpu.memory_space<vmem>>, vector<1x1xf32>
    %453 = vector.broadcast %451 : vector<1x32xf32> to vector<8x32xf32>
    %454 = arith.mulf %423, %453 : vector<8x32xf32>
    %cst_194 = arith.constant dense<0.000000e+00> : vector<8xf32>
    %455 = vector.multi_reduction <add>, %454, %cst_194 [1] : vector<8x32xf32> to vector<8xf32>
    %456 = vector.shape_cast %455 : vector<8xf32> to vector<8x1xf32>
    %457 = vector.broadcast %452 : vector<1x1xf32> to vector<8x1xf32>
    %458 = arith.addf %456, %457 : vector<8x1xf32>
    %459 = arith.negf %458 : vector<8x1xf32>
    %460 = math.exp %459 : vector<8x1xf32>
    %cst_195 = arith.constant 1.000000e+00 : f32
    %461 = vector.broadcast %cst_195 : f32 to vector<8x1xf32>
    %462 = arith.addf %461, %460 : vector<8x1xf32>
    %463 = arith.divf %461, %462 : vector<8x1xf32>
    %cst_196 = arith.constant dense<0xFF800000> : vector<1xf32>
    %464 = vector.multi_reduction <maximumf>, %463, %cst_196 [0] : vector<8x1xf32> to vector<1xf32>
    %465 = vector.shape_cast %464 : vector<1xf32> to vector<1x1xf32>
    %466 = vector.broadcast %465 : vector<1x1xf32> to vector<8x1xf32>
    %467 = arith.subf %463, %466 : vector<8x1xf32>
    %468 = math.exp %467 : vector<8x1xf32>
    %cst_197 = arith.constant dense<0.000000e+00> : vector<1xf32>
    %469 = vector.multi_reduction <add>, %468, %cst_197 [0] : vector<8x1xf32> to vector<1xf32>
    %470 = vector.shape_cast %469 : vector<1xf32> to vector<1x1xf32>
    %471 = vector.broadcast %470 : vector<1x1xf32> to vector<8x1xf32>
    %472 = arith.divf %468, %471 : vector<8x1xf32>
    %473 = vector.broadcast %472 : vector<8x1xf32> to vector<8x32xf32>
    %474 = arith.mulf %473, %423 : vector<8x32xf32>
    %cst_198 = arith.constant dense<0.000000e+00> : vector<32xf32>
    %475 = vector.multi_reduction <add>, %474, %cst_198 [0] : vector<8x32xf32> to vector<32xf32>
    %476 = vector.shape_cast %475 : vector<32xf32> to vector<1x32xf32>
    %c0_199 = arith.constant 0 : index
    %c0_200 = arith.constant 0 : index
    %477 = vector.load %arg8[%c0_199, %c0_200] : memref<64x34xf32, #tpu.memory_space<vmem>>, vector<32x32xf32>
    %cst_201 = arith.constant dense<0.000000e+00> : vector<1x32xf32>
    %478 = tpu.matmul %450, %477, %cst_201 {dimension_numbers = #tpu.dot_dimension_numbers<[1], [0], [0], [1], [0, 0, 1, 1], [], []>} : vector<1x32xf32>, vector<32x32xf32>, vector<1x32xf32> -> vector<1x32xf32>
    %c32_202 = arith.constant 32 : index
    %c0_203 = arith.constant 0 : index
    %479 = vector.load %arg8[%c32_202, %c0_203] : memref<64x34xf32, #tpu.memory_space<vmem>>, vector<32x32xf32>
    %cst_204 = arith.constant dense<0.000000e+00> : vector<1x32xf32>
    %480 = tpu.matmul %476, %479, %cst_204 {dimension_numbers = #tpu.dot_dimension_numbers<[1], [0], [0], [1], [0, 0, 1, 1], [], []>} : vector<1x32xf32>, vector<32x32xf32>, vector<1x32xf32> -> vector<1x32xf32>
    %481 = arith.addf %478, %480 : vector<1x32xf32>
    %c0_205 = arith.constant 0 : index
    %c547 = arith.constant 547 : index
    %482 = vector.load %arg7[%c0_205, %c547] : memref<2x581xf32, #tpu.memory_space<vmem>>, vector<1x32xf32>
    %483 = arith.addf %481, %482 : vector<1x32xf32>
    %cst_206 = arith.constant 0.000000e+00 : f32
    %484 = vector.broadcast %cst_206 : f32 to vector<1x32xf32>
    %485 = arith.cmpf ogt, %483, %484 : vector<1x32xf32>
    %cst_207 = arith.constant 0.000000e+00 : f32
    %486 = vector.broadcast %cst_207 : f32 to vector<1x32xf32>
    %487 = arith.minimumf %483, %486 : vector<1x32xf32>
    %488 = math.exp %487 : vector<1x32xf32>
    %cst_208 = arith.constant 1.000000e+00 : f32
    %489 = vector.broadcast %cst_208 : f32 to vector<1x32xf32>
    %490 = arith.subf %488, %489 : vector<1x32xf32>
    %491 = arith.select %485, %483, %490 : vector<1x32xi1>, vector<1x32xf32>
    %c0_209 = arith.constant 0 : index
    %c32_210 = arith.constant 32 : index
    %492 = vector.load %arg8[%c0_209, %c32_210] : memref<64x34xf32, #tpu.memory_space<vmem>>, vector<32x2xf32>
    %cst_211 = arith.constant dense<0.000000e+00> : vector<1x2xf32>
    %493 = tpu.matmul %491, %492, %cst_211 {dimension_numbers = #tpu.dot_dimension_numbers<[1], [0], [0], [1], [0, 0, 1, 1], [], []>} : vector<1x32xf32>, vector<32x2xf32>, vector<1x2xf32> -> vector<1x2xf32>
    %c0_212 = arith.constant 0 : index
    %c579 = arith.constant 579 : index
    %494 = vector.load %arg7[%c0_212, %c579] : memref<2x581xf32, #tpu.memory_space<vmem>>, vector<1x2xf32>
    %495 = arith.addf %493, %494 : vector<1x2xf32>
    %cst_213 = arith.constant dense<0xFF800000> : vector<1xf32>
    %496 = vector.multi_reduction <maximumf>, %495, %cst_213 [1] : vector<1x2xf32> to vector<1xf32>
    %497 = vector.shape_cast %496 : vector<1xf32> to vector<1x1xf32>
    %498 = vector.broadcast %497 : vector<1x1xf32> to vector<1x2xf32>
    %499 = arith.subf %495, %498 : vector<1x2xf32>
    %500 = math.exp %499 : vector<1x2xf32>
    %cst_214 = arith.constant dense<0.000000e+00> : vector<1xf32>
    %501 = vector.multi_reduction <add>, %500, %cst_214 [1] : vector<1x2xf32> to vector<1xf32>
    %502 = vector.shape_cast %501 : vector<1xf32> to vector<1x1xf32>
    %503 = vector.broadcast %502 : vector<1x1xf32> to vector<1x2xf32>
    %504 = arith.divf %500, %503 : vector<1x2xf32>
    %c0_215 = arith.constant 0 : index
    %c0_216 = arith.constant 0 : index
    %505 = vector.load %arg9[%c0_215, %c0_216] : memref<1x2xf32, #tpu.memory_space<vmem>>, vector<1x2xf32>
    tpu.vector_store %arg9[%c0_215, %c0_216], %504 {strides = array<i32>} : memref<1x2xf32, #tpu.memory_space<vmem>>, vector<1x2xf32>,
    return
  }
}

</mosaic_0001>

<llo_original>
// kernel: _forward_impl.1
$region0: #{_forward_impl.1}
  #allocation0 [shape = 'u32[]', space=smem, size = 0x4, offset = 0x4, fixed_abs, tag = 'smem constant byte address 0x4 - core index']
  #allocation1 [shape = 'u32[144,128]{1,0:T(1,128)}', space=vmem, size = 0x12000, scoped, tag = 'internal scratch']
  #allocation2 [shape = 'f32[8,32]{1,0:T(8,128)}', space=vmem, size = 0x1000, scoped, tag = 'scratch operand']
  #allocation3 [shape = 'f32[2,32]{1,0:T(2,128)}', space=vmem, size = 0x400, scoped, tag = 'scratch operand']
  %s0 = inlined_call_operand.vmem [shape: s32[10,1], index: 0, kind: input, shape index: {}]
  %s1 = inlined_call_operand.vmem [shape: s32[8,1], index: 1, kind: input, shape index: {}]
  %s2 = inlined_call_operand.vmem [shape: s32[2,20], index: 2, kind: input, shape index: {}]
  %s3 = inlined_call_operand.vmem [shape: f32[188,32], index: 3, kind: input, shape index: {}]
  %s4 = inlined_call_operand.vmem [shape: f32[2,32,32], index: 4, kind: input, shape index: {}]
  %s5 = inlined_call_operand.vmem [shape: f32[2,32,192], index: 5, kind: input, shape index: {}]
  %s6 = inlined_call_operand.vmem [shape: f32[2,64,32], index: 6, kind: input, shape index: {}]
  %s7 = inlined_call_operand.vmem [shape: f32[2,581], index: 7, kind: input, shape index: {}]
  %s8 = inlined_call_operand.vmem [shape: f32[64,34], index: 8, kind: input, shape index: {}]
  %s9 = inlined_call_operand.hbm [shape: f32[1,2], index: 9, kind: output, shape index: {}]
  %s10 = sld [smem:[#allocation0]]
  $region46: #{_forward_impl.1} parent=0
    _
  %s12 = ssub.s32 1, %s10
  %s13 = scalar_select 0, %s12, %s10
  $region1: #{_forward_impl.1} parent=0
    #allocation4 [shape = 'u8[512]{0}', space=vmem, size = 0x400, scoped, tag = 'output window, operand 0, single buffered']
    #allocation5 [shape = 's32[1]{0}', space=sflag, size = 0x4, scoped, tag = 'scoped memory for _forward_impl.1']
    %14 = vsyncpa [#allocation5], 0
    // Predicated region
    $region2: #{_forward_impl.1} parent=1 // pred_check
      _
    $region3: #{_forward_impl.1} parent=1 // pred_check_branch
      %16 = sbr.rel (0) target = $region5
    $region4: #{_forward_impl.1} parent=1 // pred_region
      _
    $region5: #{_forward_impl.1} parent=1 // pred_fallthru
      _
    // Predicated region
    $region6: #{_forward_impl.1} parent=1 // pred_check
      _
    $region7: #{_forward_impl.1} parent=1 // pred_check_branch
      %18 = sbr.rel (0) target = $region9
    $region8: #{_forward_impl.1} parent=1 // pred_region
      _
    $region9: #{_forward_impl.1} parent=1 // pred_fallthru
      _
    // Predicated region
    $region10: #{_forward_impl.1} parent=1 // pred_check
      _
    $region11: #{_forward_impl.1} parent=1 // pred_check_branch
      %20 = sbr.rel (0) target = $region13
    $region12: #{_forward_impl.1} parent=1 // pred_region
      _
    $region13: #{_forward_impl.1} parent=1 // pred_fallthru
      _
    // Predicated region
    $region14: #{_forward_impl.1} parent=1 // pred_check
      _
    $region15: #{_forward_impl.1} parent=1 // pred_check_branch
      %22 = sbr.rel (0) target = $region17
    $region16: #{_forward_impl.1} parent=1 // pred_region
      _
    $region17: #{_forward_impl.1} parent=1 // pred_fallthru
      _
    // Predicated region
    $region18: #{_forward_impl.1} parent=1 // pred_check
      _
    $region19: #{_forward_impl.1} parent=1 // pred_check_branch
      %24 = sbr.rel (0) target = $region21
    $region20: #{_forward_impl.1} parent=1 // pred_region
      _
    $region21: #{_forward_impl.1} parent=1 // pred_fallthru
      _
    // Predicated region
    $region22: #{_forward_impl.1} parent=1 // pred_check
      _
    $region23: #{_forward_impl.1} parent=1 // pred_check_branch
      %26 = sbr.rel (0) target = $region25
    $region24: #{_forward_impl.1} parent=1 // pred_region
      _
    $region25: #{_forward_impl.1} parent=1 // pred_fallthru
      _
    // Predicated region
    $region26: #{_forward_impl.1} parent=1 // pred_check
      _
    $region27: #{_forward_impl.1} parent=1 // pred_check_branch
      %28 = sbr.rel (0) target = $region29
    $region28: #{_forward_impl.1} parent=1 // pred_region
      _
    $region29: #{_forward_impl.1} parent=1 // pred_fallthru
      _
    // Predicated region
    $region30: #{_forward_impl.1} parent=1 // pred_check
      _
    $region31: #{_forward_impl.1} parent=1 // pred_check_branch
      %30 = sbr.rel (0) target = $region33
    $region32: #{_forward_impl.1} parent=1 // pred_region
      _
    $region33: #{_forward_impl.1} parent=1 // pred_fallthru
      _
    // Predicated region
    $region34: #{_forward_impl.1} parent=1 // pred_check
      _
    $region35: #{_forward_impl.1} parent=1 // pred_check_branch
      %32 = sbr.rel (0) target = $region37
    $region36: #{_forward_impl.1} parent=1 // pred_region
      _
    $region37: #{_forward_impl.1} parent=1 // pred_fallthru
      _
    %v33 = vld [vmem:[%s0] sm:$0xff]
    %v34 = vld [vmem:[%s0 + $0x8] sm:$0x3]
    %v35 = vlaneseq
    %v36 = vand.u32 %v35, 127
    %37 = vset.pattern.permute.xlu0 0
    %38 = vperm.xlu0 %37, %v33
    %v39 = vpop.permute.xlu0 %38
    %40 = vset.pattern.permute.xlu0 0
    %41 = vperm.xlu0 %40, %v34
    %v42 = vpop.permute.xlu0 %41
    %vm43 = vcmp.eq.s32.totalorder %v39, %v36
    %vm44 = vcmp.eq.s32.totalorder %v42, %v36
    %v45 = vsel %vm43, 1.0, 0.0
    %v46 = vsel %vm44, 1.0, 0.0
    %v47 = vld [vmem:[%s3] sm:$0xff]
    %v48 = vld [vmem:[%s3 + $0x8] sm:$0xff]
    %v49 = vld [vmem:[%s3 + $0x10] sm:$0xff]
    %v50 = vld [vmem:[%s3 + $0x18] sm:$0xff]
    %v51 = vld [vmem:[%s3 + $0x20] sm:$0xff]
    %v52 = vld [vmem:[%s3 + $0x28] sm:$0xff]
    %v53 = vld [vmem:[%s3 + $0x30] sm:$0xff]
    %vm54 = vcmask 457728
    %v56 = vsel %vm54, %v45, 0
    %v59 = vsel %vm54, %v46, 0
    %61 = vmatprep.subr.mxu0 0.0
    %62 = vmatpush1.msra.mxu0 %v47
    %63 = vmatprep.subr.mxu0 0.0
    %64 = vmatpush1.msra.mxu0 %v48
    %65 = vmatprep.subr.mxu0 0.0
    %66 = vmatpush1.msra.mxu0 %v49
    %67 = vmatprep.subr.mxu0 0.0
    %68 = vmatpush1.msra.mxu0 %v50
    %69 = vmatprep.subr.mxu0 0.0
    %70 = vmatpush1.msra.mxu0 %v51
    %71 = vmatprep.subr.mxu0 0.0
    %72 = vmatpush1.msra.mxu0 %v52
    %73 = vmatprep.subr.mxu0 0.0
    %74 = vmatpush1.msra.mxu0 %v53
    %75 = vmatprep.subr.mxu0 0.0
    %76 = vmatpush1.msra.mxu0 0.0
    %77 = vmatprep.subr.mxu0 0.0
    %78 = vmatpush1.msra.mxu0 0.0
    %79 = vmatprep.subr.mxu0 0.0
    %80 = vmatpush1.msra.mxu0 0.0
    %81 = vmatprep.subr.mxu0 0.0
    %82 = vmatpush1.msra.mxu0 0.0
    %83 = vmatprep.subr.mxu0 0.0
    %84 = vmatpush1.msra.mxu0 0.0
    %85 = vmatprep.subr.mxu0 0.0
    %86 = vmatpush1.msra.mxu0 0.0
    %87 = vmatprep.subr.mxu0 0.0
    %88 = vmatpush1.msra.mxu0 0.0
    %89 = vmatprep.subr.mxu0 0.0
    %90 = vmatpush1.msra.mxu0 0.0
    %91 = vmatprep.subr.mxu0 0.0
    %92 = vmatpush1.msra.mxu0 0.0
    %93 = vmatprep.subr.mxu0 0.0
    %94 = vmatpush1.msra.mxu0 0.0
    %95 = vmatprep.subr.mxu0 0.0
    %96 = vmatpush1.msra.mxu0 0.0
    %97 = vmatprep.subr.mxu0 0.0
    %98 = vmatpush1.msra.mxu0 0.0
    %99 = vmatprep.subr.mxu0 0.0
    %100 = vmatpush1.msra.mxu0 0.0
    %101 = vmatprep.subr.mxu0 0.0
    %102 = vmatpush1.msra.mxu0 0.0
    %103 = vmatprep.subr.mxu0 0.0
    %104 = vmatpush1.msra.mxu0 0.0
    %105 = vmatprep.subr.mxu0 0.0
    %106 = vmatpush1.msra.mxu0 0.0
    %107 = vmatprep.subr.mxu0 0.0
    %108 = vmatpush1.msra.mxu0 0.0
    %109 = vmatprep.subr.mxu0 0.0
    %110 = vmatpush1.msra.mxu0 0.0
    %111 = vmatprep.subr.mxu0 0.0
    %112 = vmatpush1.msra.mxu0 0.0
    %113 = vmatprep.subr.mxu0 0.0
    %114 = vmatpush1.msra.mxu0 0.0
    %115 = vmatprep.subr.mxu0 0.0
    %116 = vmatpush1.msra.mxu0 0.0
    %117 = vmatprep.subr.mxu0 0.0
    %118 = vmatpush1.msra.mxu0 0.0
    %119 = vmatprep.subr.mxu0 0.0
    %120 = vmatpush1.msra.mxu0 0.0
    %121 = vmatprep.subr.mxu0 0.0
    %122 = vmatpush1.msra.mxu0 0.0
    %123 = vmatprep.subr.mxu0 0.0
    %124 = vmatpush1.msra.mxu0 0.0
    %125 = vmatprep.mubr.f32.mxu0 0.0
    %126 = vmatmul.mubr.f32.gmra.mrb[0].mxu0 %v56
    %v127 = vpop.f32.mrb[0].mxu0
    %v128 = vadd.f32 0.0, %v127
    %v129 = vpop.f32.mrb[0].mxu0
    %130 = vmatprep.mubr.f32.mxu0 0.0
    %131 = vmatmul.mubr.f32.gmra.mrb[0].mxu0 %v59
    %v132 = vpop.f32.mrb[0].mxu0
    %v133 = vadd.f32 0.0, %v132
    %v134 = vpop.f32.mrb[0].mxu0
    %135 = vdwg.mxu0
    %v136 = vld [vmem:[%s1] sm:$0xff]
    %137 = vset.pattern.permute.xlu0 0
    %138 = vperm.xlu0 %137, %v136
    %v139 = vpop.permute.xlu0 %138
    %vm140 = vcmp.eq.s32.totalorder %v139, %v36
    %v141 = vsel %vm140, 1.0, 0.0
    %v142 = vld [vmem:[%s3 + $0x38] sm:$0xff]
    %v143 = vld [vmem:[%s3 + $0x40] sm:$0xff]
    %v144 = vld [vmem:[%s3 + $0x48] sm:$0xff]
    %v145 = vld [vmem:[%s3 + $0x50] sm:$0xff]
    %v146 = vld [vmem:[%s3 + $0x58] sm:$0xff]
    %vm147 = vcmask 261120
    %v149 = vsel %vm147, %v141, 0
    %151 = vmatprep.subr.mxu0 0.0
    %152 = vmatpush1.msra.mxu0 %v142
    %153 = vmatprep.subr.mxu0 0.0
    %154 = vmatpush1.msra.mxu0 %v143
    %155 = vmatprep.subr.mxu0 0.0
    %156 = vmatpush1.msra.mxu0 %v144
    %157 = vmatprep.subr.mxu0 0.0
    %158 = vmatpush1.msra.mxu0 %v145
    %159 = vmatprep.subr.mxu0 0.0
    %160 = vmatpush1.msra.mxu0 0.0
    %161 = vmatprep.subr.mxu0 0.0
    %162 = vmatpush1.msra.mxu0 0.0
    %163 = vmatprep.subr.mxu0 0.0
    %164 = vmatpush1.msra.mxu0 0.0
    %165 = vmatprep.subr.mxu0 0.0
    %166 = vmatpush1.msra.mxu0 0.0
    %167 = vmatprep.subr.mxu0 0.0
    %168 = vmatpush1.msra.mxu0 0.0
    %169 = vmatprep.subr.mxu0 0.0
    %170 = vmatpush1.msra.mxu0 0.0
    %171 = vmatprep.subr.mxu0 0.0
    %172 = vmatpush1.msra.mxu0 0.0
    %173 = vmatprep.subr.mxu0 0.0
    %174 = vmatpush1.msra.mxu0 0.0
    %175 = vmatprep.subr.mxu0 0.0
    %176 = vmatpush1.msra.mxu0 0.0
    %177 = vmatprep.subr.mxu0 0.0
    %178 = vmatpush1.msra.mxu0 0.0
    %179 = vmatprep.subr.mxu0 0.0
    %180 = vmatpush1.msra.mxu0 0.0
    %181 = vmatprep.subr.mxu0 0.0
    %182 = vmatpush1.msra.mxu0 0.0
    %183 = vmatprep.subr.mxu0 0.0
    %184 = vmatpush1.msra.mxu0 0.0
    %185 = vmatprep.subr.mxu0 0.0
    %186 = vmatpush1.msra.mxu0 0.0
    %187 = vmatprep.subr.mxu0 0.0
    %188 = vmatpush1.msra.mxu0 0.0
    %189 = vmatprep.subr.mxu0 0.0
    %190 = vmatpush1.msra.mxu0 0.0
    %191 = vmatprep.subr.mxu0 0.0
    %192 = vmatpush1.msra.mxu0 0.0
    %193 = vmatprep.subr.mxu0 0.0
    %194 = vmatpush1.msra.mxu0 0.0
    %195 = vmatprep.subr.mxu0 0.0
    %196 = vmatpush1.msra.mxu0 0.0
    %197 = vmatprep.subr.mxu0 0.0
    %198 = vmatpush1.msra.mxu0 0.0
    %199 = vmatprep.subr.mxu0 0.0
    %200 = vmatpush1.msra.mxu0 0.0
    %201 = vmatprep.subr.mxu0 0.0
    %202 = vmatpush1.msra.mxu0 0.0
    %203 = vmatprep.subr.mxu0 0.0
    %204 = vmatpush1.msra.mxu0 0.0
    %205 = vmatprep.subr.mxu0 0.0
    %206 = vmatpush1.msra.mxu0 0.0
    %207 = vmatprep.subr.mxu0 0.0
    %208 = vmatpush1.msra.mxu0 0.0
    %209 = vmatprep.subr.mxu0 0.0
    %210 = vmatpush1.msra.mxu0 0.0
    %211 = vmatprep.subr.mxu0 0.0
    %212 = vmatpush1.msra.mxu0 0.0
    %213 = vmatprep.subr.mxu0 0.0
    %214 = vmatpush1.msra.mxu0 0.0
    %215 = vmatprep.mubr.f32.mxu0 0.0
    %216 = vmatmul.mubr.f32.gmra.mrb[0].mxu0 %v149
    %v217 = vpop.f32.mrb[0].mxu0
    %v218 = vadd.f32 %v146, %v217
    %v219 = vpop.f32.mrb[0].mxu0
    %220 = vdwg.mxu0
    %v221 = vlaneseq
    %v222 = vshrl.u32 %v221, 7
    %v223 = vadd.s32 %v222, 8
    %v224 = vld [vmem:[%s2] sm:$0x1]
    %v225 = vlaneseq
    %v226 = vshrl.u32 %v225, 7
    %v227 = vsub.s32 0, %v226
    %v228 = vrot.slane %v224, %v227
    %vm229 = vcmp.eq.s32.totalorder %v222, %v228
    %vm230 = vcmp.eq.s32.totalorder %v223, %v228
    %v231 = vsel %vm229, 1.0, 0.0
    %v232 = vsel %vm230, 1.0, 0.0
    %v233 = vld [vmem:[%s2 + $0x1] sm:$0x1]
    %v234 = vlaneseq
    %v235 = vshrl.u32 %v234, 7
    %v236 = vsub.s32 0, %v235
    %v237 = vrot.slane %v233, %v236
    %vm238 = vcmp.eq.s32.totalorder %v222, %v237
    %vm239 = vcmp.eq.s32.totalorder %v223, %v237
    %v240 = vsel %vm238, 1.0, 0.0
    %v241 = vsel %vm239, 1.0, 0.0
    %vm242 = vcmp.eq.s32.totalorder %v222, %v36
    %vm243 = vcmp.eq.s32.totalorder %v223, %v36
    %v244 = vsel %vm242, 1.0, 0.0
    %v245 = vsel %vm243, 1.0, 0.0
    %vm246 = vcmask 162816
    %v248 = vsel %vm246, %v240, 0
    %v251 = vsel %vm246, %v241, 0
    %v254 = vsel %vm246, %v231, 0
    %v257 = vsel %vm246, %v232, 0
    %259 = vmatprep.subr.mxu0 0.0
    %260 = vmatpush1.xpose.msra.mxu0 %v254
    %261 = vmatprep.subr.mxu0 0.0
    %262 = vmatpush1.xpose.msra.mxu0 %v257
    %263 = vmatprep.subr.mxu0 0.0
    %264 = vmatpush1.xpose.msra.mxu0 0.0
    %265 = vmatprep.subr.mxu0 0.0
    %266 = vmatpush1.xpose.msra.mxu0 0.0
    %267 = vmatprep.subr.mxu0 0.0
    %268 = vmatpush1.xpose.msra.mxu0 0.0
    %269 = vmatprep.subr.mxu0 0.0
    %270 = vmatpush1.xpose.msra.mxu0 0.0
    %271 = vmatprep.subr.mxu0 0.0
    %272 = vmatpush1.xpose.msra.mxu0 0.0
    %273 = vmatprep.subr.mxu0 0.0
    %274 = vmatpush1.xpose.msra.mxu0 0.0
    %275 = vmatprep.subr.mxu0 0.0
    %276 = vmatpush1.xpose.msra.mxu0 0.0
    %277 = vmatprep.subr.mxu0 0.0
    %278 = vmatpush1.xpose.msra.mxu0 0.0
    %279 = vmatprep.subr.mxu0 0.0
    %280 = vmatpush1.xpose.msra.mxu0 0.0
    %281 = vmatprep.subr.mxu0 0.0
    %282 = vmatpush1.xpose.msra.mxu0 0.0
    %283 = vmatprep.subr.mxu0 0.0
    %284 = vmatpush1.xpose.msra.mxu0 0.0
    %285 = vmatprep.subr.mxu0 0.0
    %286 = vmatpush1.xpose.msra.mxu0 0.0
    %287 = vmatprep.subr.mxu0 0.0
    %288 = vmatpush1.xpose.msra.mxu0 0.0
    %289 = vmatprep.subr.mxu0 0.0
    %290 = vmatpush1.xpose.msra.mxu0 0.0
    %291 = vmatprep.subr.mxu0 0.0
    %292 = vmatpush1.xpose.msra.mxu0 0.0
    %293 = vmatprep.subr.mxu0 0.0
    %294 = vmatpush1.xpose.msra.mxu0 0.0
    %295 = vmatprep.subr.mxu0 0.0
    %296 = vmatpush1.xpose.msra.mxu0 0.0
    %297 = vmatprep.subr.mxu0 0.0
    %298 = vmatpush1.xpose.msra.mxu0 0.0
    %299 = vmatprep.subr.mxu0 0.0
    %300 = vmatpush1.xpose.msra.mxu0 0.0
    %301 = vmatprep.subr.mxu0 0.0
    %302 = vmatpush1.xpose.msra.mxu0 0.0
    %303 = vmatprep.subr.mxu0 0.0
    %304 = vmatpush1.xpose.msra.mxu0 0.0
    %305 = vmatprep.subr.mxu0 0.0
    %306 = vmatpush1.xpose.msra.mxu0 0.0
    %307 = vmatprep.subr.mxu0 0.0
    %308 = vmatpush1.xpose.msra.mxu0 0.0
    %309 = vmatprep.subr.mxu0 0.0
    %310 = vmatpush1.xpose.msra.mxu0 0.0
    %311 = vmatprep.subr.mxu0 0.0
    %312 = vmatpush1.xpose.msra.mxu0 0.0
    %313 = vmatprep.subr.mxu0 0.0
    %314 = vmatpush1.xpose.msra.mxu0 0.0
    %315 = vmatprep.subr.mxu0 0.0
    %316 = vmatpush1.xpose.msra.mxu0 0.0
    %317 = vmatprep.subr.mxu0 0.0
    %318 = vmatpush1.xpose.msra.mxu0 0.0
    %319 = vmatprep.subr.mxu0 0.0
    %320 = vmatpush1.xpose.msra.mxu0 0.0
    %321 = vmatprep.subr.mxu0 0.0
    %322 = vmatpush1.xpose.msra.mxu0 0.0
    %323 = vmatprep.mubr.f32.mxu0 0.0
    %324 = vmatmul.mubr.f32.gmra.mrb[0].mxu0 %v248
    %v325 = vpop.f32.mrb[0].mxu0
    %v326 = vadd.f32 %v244, %v325
    %v327 = vpop.f32.mrb[0].mxu0
    %328 = vmatprep.mubr.f32.mxu0 0.0
    %329 = vmatmul.mubr.f32.gmra.mrb[0].mxu0 %v251
    %v330 = vpop.f32.mrb[0].mxu0
    %v331 = vadd.f32 %v245, %v330
    %v332 = vpop.f32.mrb[0].mxu0
    %333 = vdwg.mxu0
    %vm334 = vcmask 80896
    %v335 = vsel %vm334, %v326, 0.0
    %336 = vadd.xlane.f32.xlu0 %v335
    %v337 = vpop.xlane.xlu0 %336
    %vm338 = vcmask 74752
    %v339 = vsel %vm338, %v331, 0.0
    %340 = vadd.xlane.f32.xlu0 %v339
    %v341 = vpop.xlane.xlu0 %340
    %vm342 = vcmp.gt.f32.partialorder %v337, 0.0
    %vm343 = vcmp.gt.f32.partialorder %v341, 0.0
    %v344 = vrsqrt.pop %v337
    %v345 = vrsqrt.pop %v341
    %v346 = vsel %vm342, %v344, 0.0
    %v347 = vsel %vm343, %v345, 0.0
    %v348 = vld [vmem:[%s4] sm:$0xff]
    %v349 = vld [vmem:[%s4 + $0x8] sm:$0xff]
    %v350 = vld [vmem:[%s4 + $0x10] sm:$0xff]
    %v351 = vld [vmem:[%s4 + $0x18] sm:$0xff]
    %v353 = vsel %vm147, %v128, 0
    %v356 = vsel %vm147, %v133, 0
    %358 = vmatprep.subr.mxu0 0.0
    %359 = vmatpush1.msra.mxu0 %v348
    %360 = vmatprep.subr.mxu0 0.0
    %361 = vmatpush1.msra.mxu0 %v349
    %362 = vmatprep.subr.mxu0 0.0
    %363 = vmatpush1.msra.mxu0 %v350
    %364 = vmatprep.subr.mxu0 0.0
    %365 = vmatpush1.msra.mxu0 %v351
    %366 = vmatprep.subr.mxu0 0.0
    %367 = vmatpush1.msra.mxu0 0.0
    %368 = vmatprep.subr.mxu0 0.0
    %369 = vmatpush1.msra.mxu0 0.0
    %370 = vmatprep.subr.mxu0 0.0
    %371 = vmatpush1.msra.mxu0 0.0
    %372 = vmatprep.subr.mxu0 0.0
    %373 = vmatpush1.msra.mxu0 0.0
    %374 = vmatprep.subr.mxu0 0.0
    %375 = vmatpush1.msra.mxu0 0.0
    %376 = vmatprep.subr.mxu0 0.0
    %377 = vmatpush1.msra.mxu0 0.0
    %378 = vmatprep.subr.mxu0 0.0
    %379 = vmatpush1.msra.mxu0 0.0
    %380 = vmatprep.subr.mxu0 0.0
    %381 = vmatpush1.msra.mxu0 0.0
    %382 = vmatprep.subr.mxu0 0.0
    %383 = vmatpush1.msra.mxu0 0.0
    %384 = vmatprep.subr.mxu0 0.0
    %385 = vmatpush1.msra.mxu0 0.0
    %386 = vmatprep.subr.mxu0 0.0
    %387 = vmatpush1.msra.mxu0 0.0
    %388 = vmatprep.subr.mxu0 0.0
    %389 = vmatpush1.msra.mxu0 0.0
    %390 = vmatprep.subr.mxu0 0.0
    %391 = vmatpush1.msra.mxu0 0.0
    %392 = vmatprep.subr.mxu0 0.0
    %393 = vmatpush1.msra.mxu0 0.0
    %394 = vmatprep.subr.mxu0 0.0
    %395 = vmatpush1.msra.mxu0 0.0
    %396 = vmatprep.subr.mxu0 0.0
    %397 = vmatpush1.msra.mxu0 0.0
    %398 = vmatprep.subr.mxu0 0.0
    %399 = vmatpush1.msra.mxu0 0.0
    %400 = vmatprep.subr.mxu0 0.0
    %401 = vmatpush1.msra.mxu0 0.0
    %402 = vmatprep.subr.mxu0 0.0
    %403 = vmatpush1.msra.mxu0 0.0
    %404 = vmatprep.subr.mxu0 0.0
    %405 = vmatpush1.msra.mxu0 0.0
    %406 = vmatprep.subr.mxu0 0.0
    %407 = vmatpush1.msra.mxu0 0.0
    %408 = vmatprep.subr.mxu0 0.0
    %409 = vmatpush1.msra.mxu0 0.0
    %410 = vmatprep.subr.mxu0 0.0
    %411 = vmatpush1.msra.mxu0 0.0
    %412 = vmatprep.subr.mxu0 0.0
    %413 = vmatpush1.msra.mxu0 0.0
    %414 = vmatprep.subr.mxu0 0.0
    %415 = vmatpush1.msra.mxu0 0.0
    %416 = vmatprep.subr.mxu0 0.0
    %417 = vmatpush1.msra.mxu0 0.0
    %418 = vmatprep.subr.mxu0 0.0
    %419 = vmatpush1.msra.mxu0 0.0
    %420 = vmatprep.subr.mxu0 0.0
    %421 = vmatpush1.msra.mxu0 0.0
    %422 = vmatprep.mubr.f32.mxu0 0.0
    %423 = vmatmul.mubr.f32.gmra.mrb[0].mxu0 %v353
    %v424 = vpop.f32.mrb[0].mxu0
    %v425 = vadd.f32 0.0, %v424
    %v426 = vpop.f32.mrb[0].mxu0
    %427 = vmatprep.mubr.f32.mxu0 0.0
    %428 = vmatmul.mubr.f32.gmra.mrb[0].mxu0 %v356
    %v429 = vpop.f32.mrb[0].mxu0
    %v430 = vadd.f32 0.0, %v429
    %v431 = vpop.f32.mrb[0].mxu0
    %432 = vdwg.mxu0
    %v433 = vmul.f32 %v346, %v425
    %v434 = vmul.f32 %v347, %v430
    %v436 = vsel %vm334, %v326, 0
    %v439 = vsel %vm334, %v331, 0
    %vm441 = vcmask 1041408
    %v443 = vsel %vm441, %v434, 0
    %445 = vmatprep.subr.mxu0 0.0
    %446 = vmatpush1.msra.mxu0 %v433
    %447 = vmatprep.subr.mxu0 0.0
    %448 = vmatpush1.msra.mxu0 %v443
    %449 = vmatprep.subr.mxu0 0.0
    %450 = vmatpush1.msra.mxu0 0.0
    %451 = vmatprep.subr.mxu0 0.0
    %452 = vmatpush1.msra.mxu0 0.0
    %453 = vmatprep.subr.mxu0 0.0
    %454 = vmatpush1.msra.mxu0 0.0
    %455 = vmatprep.subr.mxu0 0.0
    %456 = vmatpush1.msra.mxu0 0.0
    %457 = vmatprep.subr.mxu0 0.0
    %458 = vmatpush1.msra.mxu0 0.0
    %459 = vmatprep.subr.mxu0 0.0
    %460 = vmatpush1.msra.mxu0 0.0
    %461 = vmatprep.subr.mxu0 0.0
    %462 = vmatpush1.msra.mxu0 0.0
    %463 = vmatprep.subr.mxu0 0.0
    %464 = vmatpush1.msra.mxu0 0.0
    %465 = vmatprep.subr.mxu0 0.0
    %466 = vmatpush1.msra.mxu0 0.0
    %467 = vmatprep.subr.mxu0 0.0
    %468 = vmatpush1.msra.mxu0 0.0
    %469 = vmatprep.subr.mxu0 0.0
    %470 = vmatpush1.msra.mxu0 0.0
    %471 = vmatprep.subr.mxu0 0.0
    %472 = vmatpush1.msra.mxu0 0.0
    %473 = vmatprep.subr.mxu0 0.0
    %474 = vmatpush1.msra.mxu0 0.0
    %475 = vmatprep.subr.mxu0 0.0
    %476 = vmatpush1.msra.mxu0 0.0
    %477 = vmatprep.subr.mxu0 0.0
    %478 = vmatpush1.msra.mxu0 0.0
    %479 = vmatprep.subr.mxu0 0.0
    %480 = vmatpush1.msra.mxu0 0.0
    %481 = vmatprep.subr.mxu0 0.0
    %482 = vmatpush1.msra.mxu0 0.0
    %483 = vmatprep.subr.mxu0 0.0
    %484 = vmatpush1.msra.mxu0 0.0
    %485 = vmatprep.subr.mxu0 0.0
    %486 = vmatpush1.msra.mxu0 0.0
    %487 = vmatprep.subr.mxu0 0.0
    %488 = vmatpush1.msra.mxu0 0.0
    %489 = vmatprep.subr.mxu0 0.0
    %490 = vmatpush1.msra.mxu0 0.0
    %491 = vmatprep.subr.mxu0 0.0
    %492 = vmatpush1.msra.mxu0 0.0
    %493 = vmatprep.subr.mxu0 0.0
    %494 = vmatpush1.msra.mxu0 0.0
    %495 = vmatprep.subr.mxu0 0.0
    %496 = vmatpush1.msra.mxu0 0.0
    %497 = vmatprep.subr.mxu0 0.0
    %498 = vmatpush1.msra.mxu0 0.0
    %499 = vmatprep.subr.mxu0 0.0
    %500 = vmatpush1.msra.mxu0 0.0
    %501 = vmatprep.subr.mxu0 0.0
    %502 = vmatpush1.msra.mxu0 0.0
    %503 = vmatprep.subr.mxu0 0.0
    %504 = vmatpush1.msra.mxu0 0.0
    %505 = vmatprep.subr.mxu0 0.0
    %506 = vmatpush1.msra.mxu0 0.0
    %507 = vmatprep.subr.mxu0 0.0
    %508 = vmatpush1.msra.mxu0 0.0
    %509 = vmatprep.mubr.f32.mxu0 0.0
    %510 = vmatmul.mubr.f32.gmra.mrb[0].mxu0 %v436
    %v511 = vpop.f32.mrb[0].mxu0
    %v512 = vadd.f32 0.0, %v511
    %v513 = vpop.f32.mrb[0].mxu0
    %514 = vmatprep.mubr.f32.mxu0 0.0
    %515 = vmatmul.mubr.f32.gmra.mrb[0].mxu0 %v439
    %v516 = vpop.f32.mrb[0].mxu0
    %v517 = vadd.f32 0.0, %v516
    %v518 = vpop.f32.mrb[0].mxu0
    %519 = vdwg.mxu0
    %v520 = vmul.f32 %v346, %v512
    %v521 = vmul.f32 %v347, %v517
    %v522 = vld [vmem:[%s7] sm:$0x1]
    %v523 = vlaneseq
    %v524 = vshrl.u32 %v523, 7
    %v525 = vsub.s32 0, %v524
    %v526 = vrot.slane %v522, %v525
    %v527 = vadd.f32 %v520, %v526
    %v528 = vadd.f32 %v521, %v526
    %v529 = vmax.f32 %v527, 0.0
    %v530 = vmax.f32 %v528, 0.0
    %532 = vrot.lane.b32.xlu0 %v526, 96
    %v533 = vpop.permute.xlu0 %532
    %v535 = vmul.f32 %v529, %v533
    %v536 = vmul.f32 %v530, %v533
    %v537 = vsel %vm147, %v535, 0.0
    %538 = vadd.xlane.f32.xlu0 %v537
    %v539 = vpop.xlane.xlu0 %538
    %vm540 = vcmask 254976
    %v541 = vsel %vm540, %v536, 0.0
    %542 = vadd.xlane.f32.xlu0 %v541
    %v543 = vpop.xlane.xlu0 %542
    %v544 = vadd.f32 %v539, %v526
    %v545 = vadd.f32 %v543, %v526
    %v546 = vxor.u32 %v544, 2147483648
    %v547 = vxor.u32 %v545, 2147483648
    %v548 = vmul.f32 %v546, 1.442695
    %v549 = vpow.pop %v548
    %v550 = vmul.f32 %v547, 1.442695
    %v551 = vpow.pop %v550
    %v552 = vadd.f32 %v549, 1.0
    %v553 = vadd.f32 %v551, 1.0
    %v554 = vrcp.pop %v552
    %v555 = vmul.f32 1.0, %v554
    %v556 = vrcp.pop %v553
    %v557 = vmul.f32 1.0, %v556
    %vm558 = vcmask 531968
    %v559 = vsel %vm558, %v555, -inf
    %vm560 = vcmask 525824
    %v561 = vsel %vm560, %v557, -inf
    %v562 = vmax.f32 %v559, %v561
    %v563 = vrot.slane %v562, 4
    %v564 = vmax.f32 %v562, %v563
    %v565 = vrot.slane %v564, 2
    %v566 = vmax.f32 %v564, %v565
    %v567 = vrot.slane %v566, 1
    %v568 = vmax.f32 %v566, %v567
    %v569 = vsub.f32 %v555, %v568
    %v570 = vsub.f32 %v557, %v568
    %v571 = vmul.f32 %v569, 1.442695
    %v572 = vpow.pop %v571
    %v573 = vmul.f32 %v570, 1.442695
    %v574 = vpow.pop %v573
    %v575 = vsel %vm558, %v572, 0.0
    %v576 = vsel %vm560, %v574, 0.0
    %v577 = vadd.f32 %v575, %v576
    %v578 = vrot.slane %v577, 4
    %v579 = vadd.f32 %v577, %v578
    %v580 = vrot.slane %v579, 2
    %v581 = vadd.f32 %v579, %v580
    %v582 = vrot.slane %v581, 1
    %v583 = vadd.f32 %v581, %v582
    %v584 = vrcp.pop %v583
    %v585 = vmul.f32 %v572, %v584
    %v586 = vmul.f32 %v574, %v584
    %588 = vset.pattern.permute.xlu0 64
    %589 = vperm.xlu0 %588, %v585
    %v590 = vpop.permute.xlu0 %589
    %593 = vset.pattern.permute.xlu0 64
    %594 = vperm.xlu0 %593, %v586
    %v595 = vpop.permute.xlu0 %594
    %v597 = vmul.f32 %v590, %v529
    %v598 = vmul.f32 %v595, %v530
    %v599 = vsel %vm147, %v597, 0.0
    %v600 = vsel %vm540, %v598, 0.0
    %v601 = vadd.f32 %v599, %v600
    %v602 = vrot.slane %v601, 4
    %v603 = vadd.f32 %v601, %v602
    %v604 = vrot.slane %v603, 2
    %v605 = vadd.f32 %v603, %v604
    %v606 = vrot.slane %v605, 1
    %v607 = vadd.f32 %v605, %v606
    %vm608 = vcmask 253952
    %609 = vst.msk [vmem:[#allocation3] sm:$0x1] %vm608, %v607
    %s610 = scalar_lea.vmem %s4, 32
    %v611 = vld [vmem:[%s610] sm:$0xff]
    %v612 = vld [vmem:[%s610 + $0x8] sm:$0xff]
    %v613 = vld [vmem:[%s610 + $0x10] sm:$0xff]
    %v614 = vld [vmem:[%s610 + $0x18] sm:$0xff]
    %v616 = vsel %vm147, %v529, 0
    %v619 = vsel %vm147, %v530, 0
    %621 = vmatprep.subr.mxu0 0.0
    %622 = vmatpush1.msra.mxu0 %v611
    %623 = vmatprep.subr.mxu0 0.0
    %624 = vmatpush1.msra.mxu0 %v612
    %625 = vmatprep.subr.mxu0 0.0
    %626 = vmatpush1.msra.mxu0 %v613
    %627 = vmatprep.subr.mxu0 0.0
    %628 = vmatpush1.msra.mxu0 %v614
    %629 = vmatprep.subr.mxu0 0.0
    %630 = vmatpush1.msra.mxu0 0.0
    %631 = vmatprep.subr.mxu0 0.0
    %632 = vmatpush1.msra.mxu0 0.0
    %633 = vmatprep.subr.mxu0 0.0
    %634 = vmatpush1.msra.mxu0 0.0
    %635 = vmatprep.subr.mxu0 0.0
    %636 = vmatpush1.msra.mxu0 0.0
    %637 = vmatprep.subr.mxu0 0.0
    %638 = vmatpush1.msra.mxu0 0.0
    %639 = vmatprep.subr.mxu0 0.0
    %640 = vmatpush1.msra.mxu0 0.0
    %641 = vmatprep.subr.mxu0 0.0
    %642 = vmatpush1.msra.mxu0 0.0
    %643 = vmatprep.subr.mxu0 0.0
    %644 = vmatpush1.msra.mxu0 0.0
    %645 = vmatprep.subr.mxu0 0.0
    %646 = vmatpush1.msra.mxu0 0.0
    %647 = vmatprep.subr.mxu0 0.0
    %648 = vmatpush1.msra.mxu0 0.0
    %649 = vmatprep.subr.mxu0 0.0
    %650 = vmatpush1.msra.mxu0 0.0
    %651 = vmatprep.subr.mxu0 0.0
    %652 = vmatpush1.msra.mxu0 0.0
    %653 = vmatprep.subr.mxu0 0.0
    %654 = vmatpush1.msra.mxu0 0.0
    %655 = vmatprep.subr.mxu0 0.0
    %656 = vmatpush1.msra.mxu0 0.0
    %657 = vmatprep.subr.mxu0 0.0
    %658 = vmatpush1.msra.mxu0 0.0
    %659 = vmatprep.subr.mxu0 0.0
    %660 = vmatpush1.msra.mxu0 0.0
    %661 = vmatprep.subr.mxu0 0.0
    %662 = vmatpush1.msra.mxu0 0.0
    %663 = vmatprep.subr.mxu0 0.0
    %664 = vmatpush1.msra.mxu0 0.0
    %665 = vmatprep.subr.mxu0 0.0
    %666 = vmatpush1.msra.mxu0 0.0
    %667 = vmatprep.subr.mxu0 0.0
    %668 = vmatpush1.msra.mxu0 0.0
    %669 = vmatprep.subr.mxu0 0.0
    %670 = vmatpush1.msra.mxu0 0.0
    %671 = vmatprep.subr.mxu0 0.0
    %672 = vmatpush1.msra.mxu0 0.0
    %673 = vmatprep.subr.mxu0 0.0
    %674 = vmatpush1.msra.mxu0 0.0
    %675 = vmatprep.subr.mxu0 0.0
    %676 = vmatpush1.msra.mxu0 0.0
    %677 = vmatprep.subr.mxu0 0.0
    %678 = vmatpush1.msra.mxu0 0.0
    %679 = vmatprep.subr.mxu0 0.0
    %680 = vmatpush1.msra.mxu0 0.0
    %681 = vmatprep.subr.mxu0 0.0
    %682 = vmatpush1.msra.mxu0 0.0
    %683 = vmatprep.subr.mxu0 0.0
    %684 = vmatpush1.msra.mxu0 0.0
    %685 = vmatprep.mubr.f32.mxu0 0.0
    %686 = vmatmul.mubr.f32.gmra.mrb[0].mxu0 %v616
    %v687 = vpop.f32.mrb[0].mxu0
    %v688 = vadd.f32 0.0, %v687
    %v689 = vpop.f32.mrb[0].mxu0
    %690 = vmatprep.mubr.f32.mxu0 0.0
    %691 = vmatmul.mubr.f32.gmra.mrb[0].mxu0 %v619
    %v692 = vpop.f32.mrb[0].mxu0
    %v693 = vadd.f32 0.0, %v692
    %v694 = vpop.f32.mrb[0].mxu0
    %695 = vdwg.mxu0
    %v696 = vmul.f32 %v346, %v688
    %v697 = vmul.f32 %v347, %v693
    %v699 = vsel %vm441, %v697, 0
    %701 = vmatprep.subr.mxu0 0.0
    %702 = vmatpush1.msra.mxu0 %v696
    %703 = vmatprep.subr.mxu0 0.0
    %704 = vmatpush1.msra.mxu0 %v699
    %705 = vmatprep.subr.mxu0 0.0
    %706 = vmatpush1.msra.mxu0 0.0
    %707 = vmatprep.subr.mxu0 0.0
    %708 = vmatpush1.msra.mxu0 0.0
    %709 = vmatprep.subr.mxu0 0.0
    %710 = vmatpush1.msra.mxu0 0.0
    %711 = vmatprep.subr.mxu0 0.0
    %712 = vmatpush1.msra.mxu0 0.0
    %713 = vmatprep.subr.mxu0 0.0
    %714 = vmatpush1.msra.mxu0 0.0
    %715 = vmatprep.subr.mxu0 0.0
    %716 = vmatpush1.msra.mxu0 0.0
    %717 = vmatprep.subr.mxu0 0.0
    %718 = vmatpush1.msra.mxu0 0.0
    %719 = vmatprep.subr.mxu0 0.0
    %720 = vmatpush1.msra.mxu0 0.0
    %721 = vmatprep.subr.mxu0 0.0
    %722 = vmatpush1.msra.mxu0 0.0
    %723 = vmatprep.subr.mxu0 0.0
    %724 = vmatpush1.msra.mxu0 0.0
    %725 = vmatprep.subr.mxu0 0.0
    %726 = vmatpush1.msra.mxu0 0.0
    %727 = vmatprep.subr.mxu0 0.0
    %728 = vmatpush1.msra.mxu0 0.0
    %729 = vmatprep.subr.mxu0 0.0
    %730 = vmatpush1.msra.mxu0 0.0
    %731 = vmatprep.subr.mxu0 0.0
    %732 = vmatpush1.msra.mxu0 0.0
    %733 = vmatprep.subr.mxu0 0.0
    %734 = vmatpush1.msra.mxu0 0.0
    %735 = vmatprep.subr.mxu0 0.0
    %736 = vmatpush1.msra.mxu0 0.0
    %737 = vmatprep.subr.mxu0 0.0
    %738 = vmatpush1.msra.mxu0 0.0
    %739 = vmatprep.subr.mxu0 0.0
    %740 = vmatpush1.msra.mxu0 0.0
    %741 = vmatprep.subr.mxu0 0.0
    %742 = vmatpush1.msra.mxu0 0.0
    %743 = vmatprep.subr.mxu0 0.0
    %744 = vmatpush1.msra.mxu0 0.0
    %745 = vmatprep.subr.mxu0 0.0
    %746 = vmatpush1.msra.mxu0 0.0
    %747 = vmatprep.subr.mxu0 0.0
    %748 = vmatpush1.msra.mxu0 0.0
    %749 = vmatprep.subr.mxu0 0.0
    %750 = vmatpush1.msra.mxu0 0.0
    %751 = vmatprep.subr.mxu0 0.0
    %752 = vmatpush1.msra.mxu0 0.0
    %753 = vmatprep.subr.mxu0 0.0
    %754 = vmatpush1.msra.mxu0 0.0
    %755 = vmatprep.subr.mxu0 0.0
    %756 = vmatpush1.msra.mxu0 0.0
    %757 = vmatprep.subr.mxu0 0.0
    %758 = vmatpush1.msra.mxu0 0.0
    %759 = vmatprep.subr.mxu0 0.0
    %760 = vmatpush1.msra.mxu0 0.0
    %761 = vmatprep.subr.mxu0 0.0
    %762 = vmatpush1.msra.mxu0 0.0
    %763 = vmatprep.subr.mxu0 0.0
    %764 = vmatpush1.msra.mxu0 0.0
    %765 = vmatprep.mubr.f32.mxu0 0.0
    %766 = vmatmul.mubr.f32.gmra.mrb[0].mxu0 %v436
    %v767 = vpop.f32.mrb[0].mxu0
    %v768 = vadd.f32 0.0, %v767
    %v769 = vpop.f32.mrb[0].mxu0
    %770 = vmatprep.mubr.f32.mxu0 0.0
    %771 = vmatmul.mubr.f32.gmra.mrb[0].mxu0 %v439
    %v772 = vpop.f32.mrb[0].mxu0
    %v773 = vadd.f32 0.0, %v772
    %v774 = vpop.f32.mrb[0].mxu0
    %775 = vdwg.mxu0
    %v776 = vmul.f32 %v346, %v768
    %v777 = vmul.f32 %v347, %v773
    %v778 = vld [vmem:[%s7 + $0x1] sm:$0x1]
    %v779 = vlaneseq
    %v780 = vshrl.u32 %v779, 7
    %v781 = vsub.s32 0, %v780
    %v782 = vrot.slane %v778, %v781
    %v783 = vadd.f32 %v776, %v782
    %v784 = vadd.f32 %v777, %v782
    %v785 = vmax.f32 %v783, 0.0
    %v786 = vmax.f32 %v784, 0.0
    %788 = vrot.lane.b32.xlu0 %v782, 96
    %v789 = vpop.permute.xlu0 %788
    %v791 = vmul.f32 %v785, %v789
    %v792 = vmul.f32 %v786, %v789
    %v793 = vsel %vm147, %v791, 0.0
    %794 = vadd.xlane.f32.xlu0 %v793
    %v795 = vpop.xlane.xlu0 %794
    %v796 = vsel %vm540, %v792, 0.0
    %797 = vadd.xlane.f32.xlu0 %v796
    %v798 = vpop.xlane.xlu0 %797
    %v799 = vadd.f32 %v795, %v782
    %v800 = vadd.f32 %v798, %v782
    %v801 = vxor.u32 %v799, 2147483648
    %v802 = vxor.u32 %v800, 2147483648
    %v803 = vmul.f32 %v801, 1.442695
    %v804 = vpow.pop %v803
    %v805 = vmul.f32 %v802, 1.442695
    %v806 = vpow.pop %v805
    %v807 = vadd.f32 %v804, 1.0
    %v808 = vadd.f32 %v806, 1.0
    %v809 = vrcp.pop %v807
    %v810 = vmul.f32 1.0, %v809
    %v811 = vrcp.pop %v808
    %v812 = vmul.f32 1.0, %v811
    %v813 = vsel %vm558, %v810, -inf
    %v814 = vsel %vm560, %v812, -inf
    %v815 = vmax.f32 %v813, %v814
    %v816 = vrot.slane %v815, 4
    %v817 = vmax.f32 %v815, %v816
    %v818 = vrot.slane %v817, 2
    %v819 = vmax.f32 %v817, %v818
    %v820 = vrot.slane %v819, 1
    %v821 = vmax.f32 %v819, %v820
    %v822 = vsub.f32 %v810, %v821
    %v823 = vsub.f32 %v812, %v821
    %v824 = vmul.f32 %v822, 1.442695
    %v825 = vpow.pop %v824
    %v826 = vmul.f32 %v823, 1.442695
    %v827 = vpow.pop %v826
    %v828 = vsel %vm558, %v825, 0.0
    %v829 = vsel %vm560, %v827, 0.0
    %v830 = vadd.f32 %v828, %v829
    %v831 = vrot.slane %v830, 4
    %v832 = vadd.f32 %v830, %v831
    %v833 = vrot.slane %v832, 2
    %v834 = vadd.f32 %v832, %v833
    %v835 = vrot.slane %v834, 1
    %v836 = vadd.f32 %v834, %v835
    %v837 = vrcp.pop %v836
    %v838 = vmul.f32 %v825, %v837
    %v839 = vmul.f32 %v827, %v837
    %841 = vset.pattern.permute.xlu0 64
    %842 = vperm.xlu0 %841, %v838
    %v843 = vpop.permute.xlu0 %842
    %846 = vset.pattern.permute.xlu0 64
    %847 = vperm.xlu0 %846, %v839
    %v848 = vpop.permute.xlu0 %847
    %v850 = vmul.f32 %v843, %v785
    %v851 = vmul.f32 %v848, %v786
    %v852 = vsel %vm147, %v850, 0.0
    %v853 = vsel %vm540, %v851, 0.0
    %v854 = vadd.f32 %v852, %v853
    %v855 = vrot.slane %v854, 4
    %v856 = vadd.f32 %v854, %v855
    %v857 = vrot.slane %v856, 2
    %v858 = vadd.f32 %v856, %v857
    %v859 = vrot.slane %v858, 1
    %v860 = vadd.f32 %v858, %v859
    %861 = vst.msk [vmem:[#allocation3 + $0x1] sm:$0x1] %vm608, %v860
    %v862 = vld [vmem:[%s5] sm:$0xff]
    %v863 = vld [vmem:[%s5 + $0x8] sm:$0xff]
    %v864 = vld [vmem:[%s5 + $0x10] sm:$0xff]
    %v865 = vld [vmem:[%s5 + $0x18] sm:$0xff]
    %v866 = vld [vmem:[%s5 + $0x20] sm:$0xff]
    %v867 = vld [vmem:[%s5 + $0x28] sm:$0xff]
    %v868 = vld [vmem:[%s5 + $0x30] sm:$0xff]
    %v869 = vld [vmem:[%s5 + $0x38] sm:$0xff]
    %v870 = vld [vmem:[%s7] sm:$0x5]
    %v872 = vlaneseq
    %v873 = vshrl.u32 %v872, 7
    %v874 = vsub.s32 0, %v873
    %v875 = vrot.slane %v870, %v874
    %v876 = vlaneseq
    %v877 = vshrl.u32 %v876, 7
    %v878 = vsub.s32 2, %v877
    %v879 = vrot.slane %v870, %v878
    %v882 = vlaneseq
    %v883 = vshrl.u32 %v882, 7
    %v884 = vsub.s32 0, %v883
    %v885 = vrot.slane %v875, %v884
    %v886 = vlaneseq
    %v887 = vshrl.u32 %v886, 7
    %v888 = vsub.s32 0, %v887
    %v889 = vrot.slane %v879, %v888
    %892 = vrot.lane.b32.xlu0 %v885, 63
    %v893 = vpop.permute.xlu0 %892
    %894 = vrot.lane.b32.xlu0 %v889, 63
    %v895 = vpop.permute.xlu0 %894
    %vm896 = vcmask 515072
    %v897 = vsel %vm896, %v893, %v895
    %v900 = vsel %vm147, %v218, 0
    %902 = vmatprep.subr.mxu0 0.0
    %903 = vmatpush1.msra.mxu0 %v862
    %904 = vmatprep.subr.mxu0 0.0
    %905 = vmatpush1.msra.mxu0 %v864
    %906 = vmatprep.subr.mxu0 0.0
    %907 = vmatpush1.msra.mxu0 %v866
    %908 = vmatprep.subr.mxu0 0.0
    %909 = vmatpush1.msra.mxu0 %v868
    %910 = vmatprep.subr.mxu0 0.0
    %911 = vmatpush1.msra.mxu0 0.0
    %912 = vmatprep.subr.mxu0 0.0
    %913 = vmatpush1.msra.mxu0 0.0
    %914 = vmatprep.subr.mxu0 0.0
    %915 = vmatpush1.msra.mxu0 0.0
    %916 = vmatprep.subr.mxu0 0.0
    %917 = vmatpush1.msra.mxu0 0.0
    %918 = vmatprep.subr.mxu0 0.0
    %919 = vmatpush1.msra.mxu0 0.0
    %920 = vmatprep.subr.mxu0 0.0
    %921 = vmatpush1.msra.mxu0 0.0
    %922 = vmatprep.subr.mxu0 0.0
    %923 = vmatpush1.msra.mxu0 0.0
    %924 = vmatprep.subr.mxu0 0.0
    %925 = vmatpush1.msra.mxu0 0.0
    %926 = vmatprep.subr.mxu0 0.0
    %927 = vmatpush1.msra.mxu0 0.0
    %928 = vmatprep.subr.mxu0 0.0
    %929 = vmatpush1.msra.mxu0 0.0
    %930 = vmatprep.subr.mxu0 0.0
    %931 = vmatpush1.msra.mxu0 0.0
    %932 = vmatprep.subr.mxu0 0.0
    %933 = vmatpush1.msra.mxu0 0.0
    %934 = vmatprep.subr.mxu0 0.0
    %935 = vmatpush1.msra.mxu0 0.0
    %936 = vmatprep.subr.mxu0 0.0
    %937 = vmatpush1.msra.mxu0 0.0
    %938 = vmatprep.subr.mxu0 0.0
    %939 = vmatpush1.msra.mxu0 0.0
    %940 = vmatprep.subr.mxu0 0.0
    %941 = vmatpush1.msra.mxu0 0.0
    %942 = vmatprep.subr.mxu0 0.0
    %943 = vmatpush1.msra.mxu0 0.0
    %944 = vmatprep.subr.mxu0 0.0
    %945 = vmatpush1.msra.mxu0 0.0
    %946 = vmatprep.subr.mxu0 0.0
    %947 = vmatpush1.msra.mxu0 0.0
    %948 = vmatprep.subr.mxu0 0.0
    %949 = vmatpush1.msra.mxu0 0.0
    %950 = vmatprep.subr.mxu0 0.0
    %951 = vmatpush1.msra.mxu0 0.0
    %952 = vmatprep.subr.mxu0 0.0
    %953 = vmatpush1.msra.mxu0 0.0
    %954 = vmatprep.subr.mxu0 0.0
    %955 = vmatpush1.msra.mxu0 0.0
    %956 = vmatprep.subr.mxu0 0.0
    %957 = vmatpush1.msra.mxu0 0.0
    %958 = vmatprep.subr.mxu0 0.0
    %959 = vmatpush1.msra.mxu0 0.0
    %960 = vmatprep.subr.mxu0 0.0
    %961 = vmatpush1.msra.mxu0 0.0
    %962 = vmatprep.subr.mxu0 0.0
    %963 = vmatpush1.msra.mxu0 0.0
    %964 = vmatprep.subr.mxu0 0.0
    %965 = vmatpush1.msra.mxu0 0.0
    %966 = vmatprep.mubr.f32.mxu0 0.0
    %967 = vmatmul.mubr.f32.gmra.mrb[0].mxu0 %v900
    %v968 = vpop.f32.mrb[0].mxu0
    %v969 = vadd.f32 %v897, %v968
    %v970 = vpop.f32.mrb[0].mxu0
    %971 = vdwg.mxu0
    %973 = vrot.lane.b32.xlu0 %v969, 96
    %v974 = vpop.permute.xlu0 %973
    %vm975 = vcmask 64512
    %v976 = vsel %vm975, %v969, 0
    %v978 = vsel %vm975, %v974, 0
    %980 = vmatprep.subr.mxu0 0.0
    %981 = vmatpush1.xpose.msra.mxu0 %v978
    %982 = vmatprep.subr.mxu0 0.0
    %983 = vmatpush1.xpose.msra.mxu0 0.0
    %984 = vmatprep.subr.mxu0 0.0
    %985 = vmatpush1.xpose.msra.mxu0 0.0
    %986 = vmatprep.subr.mxu0 0.0
    %987 = vmatpush1.xpose.msra.mxu0 0.0
    %988 = vmatprep.subr.mxu0 0.0
    %989 = vmatpush1.xpose.msra.mxu0 0.0
    %990 = vmatprep.subr.mxu0 0.0
    %991 = vmatpush1.xpose.msra.mxu0 0.0
    %992 = vmatprep.subr.mxu0 0.0
    %993 = vmatpush1.xpose.msra.mxu0 0.0
    %994 = vmatprep.subr.mxu0 0.0
    %995 = vmatpush1.xpose.msra.mxu0 0.0
    %996 = vmatprep.subr.mxu0 0.0
    %997 = vmatpush1.xpose.msra.mxu0 0.0
    %998 = vmatprep.subr.mxu0 0.0
    %999 = vmatpush1.xpose.msra.mxu0 0.0
    %1000 = vmatprep.subr.mxu0 0.0
    %1001 = vmatpush1.xpose.msra.mxu0 0.0
    %1002 = vmatprep.subr.mxu0 0.0
    %1003 = vmatpush1.xpose.msra.mxu0 0.0
    %1004 = vmatprep.subr.mxu0 0.0
    %1005 = vmatpush1.xpose.msra.mxu0 0.0
    %1006 = vmatprep.subr.mxu0 0.0
    %1007 = vmatpush1.xpose.msra.mxu0 0.0
    %1008 = vmatprep.subr.mxu0 0.0
    %1009 = vmatpush1.xpose.msra.mxu0 0.0
    %1010 = vmatprep.subr.mxu0 0.0
    %1011 = vmatpush1.xpose.msra.mxu0 0.0
    %1012 = vmatprep.subr.mxu0 0.0
    %1013 = vmatpush1.xpose.msra.mxu0 0.0
    %1014 = vmatprep.subr.mxu0 0.0
    %1015 = vmatpush1.xpose.msra.mxu0 0.0
    %1016 = vmatprep.subr.mxu0 0.0
    %1017 = vmatpush1.xpose.msra.mxu0 0.0
    %1018 = vmatprep.subr.mxu0 0.0
    %1019 = vmatpush1.xpose.msra.mxu0 0.0
    %1020 = vmatprep.subr.mxu0 0.0
    %1021 = vmatpush1.xpose.msra.mxu0 0.0
    %1022 = vmatprep.subr.mxu0 0.0
    %1023 = vmatpush1.xpose.msra.mxu0 0.0
    %1024 = vmatprep.subr.mxu0 0.0
    %1025 = vmatpush1.xpose.msra.mxu0 0.0
    %1026 = vmatprep.subr.mxu0 0.0
    %1027 = vmatpush1.xpose.msra.mxu0 0.0
    %1028 = vmatprep.subr.mxu0 0.0
    %1029 = vmatpush1.xpose.msra.mxu0 0.0
    %1030 = vmatprep.subr.mxu0 0.0
    %1031 = vmatpush1.xpose.msra.mxu0 0.0
    %1032 = vmatprep.subr.mxu0 0.0
    %1033 = vmatpush1.xpose.msra.mxu0 0.0
    %1034 = vmatprep.subr.mxu0 0.0
    %1035 = vmatpush1.xpose.msra.mxu0 0.0
    %1036 = vmatprep.subr.mxu0 0.0
    %1037 = vmatpush1.xpose.msra.mxu0 0.0
    %1038 = vmatprep.subr.mxu0 0.0
    %1039 = vmatpush1.xpose.msra.mxu0 0.0
    %1040 = vmatprep.subr.mxu0 0.0
    %1041 = vmatpush1.xpose.msra.mxu0 0.0
    %1042 = vmatprep.subr.mxu0 0.0
    %1043 = vmatpush1.xpose.msra.mxu0 0.0
    %1044 = vmatprep.mubr.f32.mxu0 0.0
    %1045 = vmatmul.mubr.f32.gmra.mrb[0].mxu0 %v976
    %v1046 = vpop.f32.mrb[0].mxu0
    %v1047 = vadd.f32 0.0, %v1046
    %v1048 = vpop.f32.mrb[0].mxu0
    %1049 = vdwg.mxu0
    %v1050 = vsel %vm975, %v1047, -inf
    %1051 = vmax.xlane.f32.xlu0 %v1050
    %v1052 = vpop.xlane.xlu0 %1051
    %v1053 = vsub.f32 %v1047, %v1052
    %v1054 = vmul.f32 %v1053, 1.442695
    %v1055 = vpow.pop %v1054
    %v1056 = vsel %vm975, %v1055, 0.0
    %1057 = vadd.xlane.f32.xlu0 %v1056
    %v1058 = vpop.xlane.xlu0 %1057
    %v1059 = vrcp.pop %v1058
    %v1060 = vmul.f32 %v1055, %v1059
    %1061 = vrot.lane.b32.xlu0 %v969, 64
    %v1062 = vpop.permute.xlu0 %1061
    %v1065 = vsel %vm975, %v1060, 0
    %1067 = vmatprep.subr.mxu0 0.0
    %1068 = vmatpush1.msra.mxu0 %v1062
    %1069 = vmatprep.subr.mxu0 0.0
    %1070 = vmatpush1.msra.mxu0 0.0
    %1071 = vmatprep.subr.mxu0 0.0
    %1072 = vmatpush1.msra.mxu0 0.0
    %1073 = vmatprep.subr.mxu0 0.0
    %1074 = vmatpush1.msra.mxu0 0.0
    %1075 = vmatprep.subr.mxu0 0.0
    %1076 = vmatpush1.msra.mxu0 0.0
    %1077 = vmatprep.subr.mxu0 0.0
    %1078 = vmatpush1.msra.mxu0 0.0
    %1079 = vmatprep.subr.mxu0 0.0
    %1080 = vmatpush1.msra.mxu0 0.0
    %1081 = vmatprep.subr.mxu0 0.0
    %1082 = vmatpush1.msra.mxu0 0.0
    %1083 = vmatprep.subr.mxu0 0.0
    %1084 = vmatpush1.msra.mxu0 0.0
    %1085 = vmatprep.subr.mxu0 0.0
    %1086 = vmatpush1.msra.mxu0 0.0
    %1087 = vmatprep.subr.mxu0 0.0
    %1088 = vmatpush1.msra.mxu0 0.0
    %1089 = vmatprep.subr.mxu0 0.0
    %1090 = vmatpush1.msra.mxu0 0.0
    %1091 = vmatprep.subr.mxu0 0.0
    %1092 = vmatpush1.msra.mxu0 0.0
    %1093 = vmatprep.subr.mxu0 0.0
    %1094 = vmatpush1.msra.mxu0 0.0
    %1095 = vmatprep.subr.mxu0 0.0
    %1096 = vmatpush1.msra.mxu0 0.0
    %1097 = vmatprep.subr.mxu0 0.0
    %1098 = vmatpush1.msra.mxu0 0.0
    %1099 = vmatprep.subr.mxu0 0.0
    %1100 = vmatpush1.msra.mxu0 0.0
    %1101 = vmatprep.subr.mxu0 0.0
    %1102 = vmatpush1.msra.mxu0 0.0
    %1103 = vmatprep.subr.mxu0 0.0
    %1104 = vmatpush1.msra.mxu0 0.0
    %1105 = vmatprep.subr.mxu0 0.0
    %1106 = vmatpush1.msra.mxu0 0.0
    %1107 = vmatprep.subr.mxu0 0.0
    %1108 = vmatpush1.msra.mxu0 0.0
    %1109 = vmatprep.subr.mxu0 0.0
    %1110 = vmatpush1.msra.mxu0 0.0
    %1111 = vmatprep.subr.mxu0 0.0
    %1112 = vmatpush1.msra.mxu0 0.0
    %1113 = vmatprep.subr.mxu0 0.0
    %1114 = vmatpush1.msra.mxu0 0.0
    %1115 = vmatprep.subr.mxu0 0.0
    %1116 = vmatpush1.msra.mxu0 0.0
    %1117 = vmatprep.subr.mxu0 0.0
    %1118 = vmatpush1.msra.mxu0 0.0
    %1119 = vmatprep.subr.mxu0 0.0
    %1120 = vmatpush1.msra.mxu0 0.0
    %1121 = vmatprep.subr.mxu0 0.0
    %1122 = vmatpush1.msra.mxu0 0.0
    %1123 = vmatprep.subr.mxu0 0.0
    %1124 = vmatpush1.msra.mxu0 0.0
    %1125 = vmatprep.subr.mxu0 0.0
    %1126 = vmatpush1.msra.mxu0 0.0
    %1127 = vmatprep.subr.mxu0 0.0
    %1128 = vmatpush1.msra.mxu0 0.0
    %1129 = vmatprep.subr.mxu0 0.0
    %1130 = vmatpush1.msra.mxu0 0.0
    %1131 = vmatprep.mubr.f32.mxu0 0.0
    %1132 = vmatmul.mubr.f32.gmra.mrb[0].mxu0 %v1065
    %v1133 = vpop.f32.mrb[0].mxu0
    %v1134 = vadd.f32 0.0, %v1133
    %v1135 = vpop.f32.mrb[0].mxu0
    %1136 = vdwg.mxu0
    %1137 = vst.msk [vmem:[#allocation2] sm:$0xff] %vm975, %v1134
    %1138 = vrot.lane.b32.xlu0 %v969, 120
    %v1139 = vpop.permute.xlu0 %1138
    %1140 = vrot.lane.b32.xlu0 %v969, 88
    %v1141 = vpop.permute.xlu0 %1140
    %v1142 = vsel %vm975, %v1139, 0
    %v1144 = vsel %vm975, %v1141, 0
    %1146 = vmatprep.subr.mxu0 0.0
    %1147 = vmatpush1.xpose.msra.mxu0 %v1144
    %1148 = vmatprep.subr.mxu0 0.0
    %1149 = vmatpush1.xpose.msra.mxu0 0.0
    %1150 = vmatprep.subr.mxu0 0.0
    %1151 = vmatpush1.xpose.msra.mxu0 0.0
    %1152 = vmatprep.subr.mxu0 0.0
    %1153 = vmatpush1.xpose.msra.mxu0 0.0
    %1154 = vmatprep.subr.mxu0 0.0
    %1155 = vmatpush1.xpose.msra.mxu0 0.0
    %1156 = vmatprep.subr.mxu0 0.0
    %1157 = vmatpush1.xpose.msra.mxu0 0.0
    %1158 = vmatprep.subr.mxu0 0.0
    %1159 = vmatpush1.xpose.msra.mxu0 0.0
    %1160 = vmatprep.subr.mxu0 0.0
    %1161 = vmatpush1.xpose.msra.mxu0 0.0
    %1162 = vmatprep.subr.mxu0 0.0
    %1163 = vmatpush1.xpose.msra.mxu0 0.0
    %1164 = vmatprep.subr.mxu0 0.0
    %1165 = vmatpush1.xpose.msra.mxu0 0.0
    %1166 = vmatprep.subr.mxu0 0.0
    %1167 = vmatpush1.xpose.msra.mxu0 0.0
    %1168 = vmatprep.subr.mxu0 0.0
    %1169 = vmatpush1.xpose.msra.mxu0 0.0
    %1170 = vmatprep.subr.mxu0 0.0
    %1171 = vmatpush1.xpose.msra.mxu0 0.0
    %1172 = vmatprep.subr.mxu0 0.0
    %1173 = vmatpush1.xpose.msra.mxu0 0.0
    %1174 = vmatprep.subr.mxu0 0.0
    %1175 = vmatpush1.xpose.msra.mxu0 0.0
    %1176 = vmatprep.subr.mxu0 0.0
    %1177 = vmatpush1.xpose.msra.mxu0 0.0
    %1178 = vmatprep.subr.mxu0 0.0
    %1179 = vmatpush1.xpose.msra.mxu0 0.0
    %1180 = vmatprep.subr.mxu0 0.0
    %1181 = vmatpush1.xpose.msra.mxu0 0.0
    %1182 = vmatprep.subr.mxu0 0.0
    %1183 = vmatpush1.xpose.msra.mxu0 0.0
    %1184 = vmatprep.subr.mxu0 0.0
    %1185 = vmatpush1.xpose.msra.mxu0 0.0
    %1186 = vmatprep.subr.mxu0 0.0
    %1187 = vmatpush1.xpose.msra.mxu0 0.0
    %1188 = vmatprep.subr.mxu0 0.0
    %1189 = vmatpush1.xpose.msra.mxu0 0.0
    %1190 = vmatprep.subr.mxu0 0.0
    %1191 = vmatpush1.xpose.msra.mxu0 0.0
    %1192 = vmatprep.subr.mxu0 0.0
    %1193 = vmatpush1.xpose.msra.mxu0 0.0
    %1194 = vmatprep.subr.mxu0 0.0
    %1195 = vmatpush1.xpose.msra.mxu0 0.0
    %1196 = vmatprep.subr.mxu0 0.0
    %1197 = vmatpush1.xpose.msra.mxu0 0.0
    %1198 = vmatprep.subr.mxu0 0.0
    %1199 = vmatpush1.xpose.msra.mxu0 0.0
    %1200 = vmatprep.subr.mxu0 0.0
    %1201 = vmatpush1.xpose.msra.mxu0 0.0
    %1202 = vmatprep.subr.mxu0 0.0
    %1203 = vmatpush1.xpose.msra.mxu0 0.0
    %1204 = vmatprep.subr.mxu0 0.0
    %1205 = vmatpush1.xpose.msra.mxu0 0.0
    %1206 = vmatprep.subr.mxu0 0.0
    %1207 = vmatpush1.xpose.msra.mxu0 0.0
    %1208 = vmatprep.subr.mxu0 0.0
    %1209 = vmatpush1.xpose.msra.mxu0 0.0
    %1210 = vmatprep.mubr.f32.mxu0 0.0
    %1211 = vmatmul.mubr.f32.gmra.mrb[0].mxu0 %v1142
    %v1212 = vpop.f32.mrb[0].mxu0
    %v1213 = vadd.f32 0.0, %v1212
    %v1214 = vpop.f32.mrb[0].mxu0
    %1215 = vdwg.mxu0
    %v1216 = vsel %vm975, %v1213, -inf
    %1217 = vmax.xlane.f32.xlu0 %v1216
    %v1218 = vpop.xlane.xlu0 %1217
    %v1219 = vsub.f32 %v1213, %v1218
    %v1220 = vmul.f32 %v1219, 1.442695
    %v1221 = vpow.pop %v1220
    %v1222 = vsel %vm975, %v1221, 0.0
    %1223 = vadd.xlane.f32.xlu0 %v1222
    %v1224 = vpop.xlane.xlu0 %1223
    %v1225 = vrcp.pop %v1224
    %v1226 = vmul.f32 %v1221, %v1225
    %1227 = vrot.lane.b32.xlu0 %v969, 56
    %v1228 = vpop.permute.xlu0 %1227
    %v1231 = vsel %vm975, %v1226, 0
    %1233 = vmatprep.subr.mxu0 0.0
    %1234 = vmatpush1.msra.mxu0 %v1228
    %1235 = vmatprep.subr.mxu0 0.0
    %1236 = vmatpush1.msra.mxu0 0.0
    %1237 = vmatprep.subr.mxu0 0.0
    %1238 = vmatpush1.msra.mxu0 0.0
    %1239 = vmatprep.subr.mxu0 0.0
    %1240 = vmatpush1.msra.mxu0 0.0
    %1241 = vmatprep.subr.mxu0 0.0
    %1242 = vmatpush1.msra.mxu0 0.0
    %1243 = vmatprep.subr.mxu0 0.0
    %1244 = vmatpush1.msra.mxu0 0.0
    %1245 = vmatprep.subr.mxu0 0.0
    %1246 = vmatpush1.msra.mxu0 0.0
    %1247 = vmatprep.subr.mxu0 0.0
    %1248 = vmatpush1.msra.mxu0 0.0
    %1249 = vmatprep.subr.mxu0 0.0
    %1250 = vmatpush1.msra.mxu0 0.0
    %1251 = vmatprep.subr.mxu0 0.0
    %1252 = vmatpush1.msra.mxu0 0.0
    %1253 = vmatprep.subr.mxu0 0.0
    %1254 = vmatpush1.msra.mxu0 0.0
    %1255 = vmatprep.subr.mxu0 0.0
    %1256 = vmatpush1.msra.mxu0 0.0
    %1257 = vmatprep.subr.mxu0 0.0
    %1258 = vmatpush1.msra.mxu0 0.0
    %1259 = vmatprep.subr.mxu0 0.0
    %1260 = vmatpush1.msra.mxu0 0.0
    %1261 = vmatprep.subr.mxu0 0.0
    %1262 = vmatpush1.msra.mxu0 0.0
    %1263 = vmatprep.subr.mxu0 0.0
    %1264 = vmatpush1.msra.mxu0 0.0
    %1265 = vmatprep.subr.mxu0 0.0
    %1266 = vmatpush1.msra.mxu0 0.0
    %1267 = vmatprep.subr.mxu0 0.0
    %1268 = vmatpush1.msra.mxu0 0.0
    %1269 = vmatprep.subr.mxu0 0.0
    %1270 = vmatpush1.msra.mxu0 0.0
    %1271 = vmatprep.subr.mxu0 0.0
    %1272 = vmatpush1.msra.mxu0 0.0
    %1273 = vmatprep.subr.mxu0 0.0
    %1274 = vmatpush1.msra.mxu0 0.0
    %1275 = vmatprep.subr.mxu0 0.0
    %1276 = vmatpush1.msra.mxu0 0.0
    %1277 = vmatprep.subr.mxu0 0.0
    %1278 = vmatpush1.msra.mxu0 0.0
    %1279 = vmatprep.subr.mxu0 0.0
    %1280 = vmatpush1.msra.mxu0 0.0
    %1281 = vmatprep.subr.mxu0 0.0
    %1282 = vmatpush1.msra.mxu0 0.0
    %1283 = vmatprep.subr.mxu0 0.0
    %1284 = vmatpush1.msra.mxu0 0.0
    %1285 = vmatprep.subr.mxu0 0.0
    %1286 = vmatpush1.msra.mxu0 0.0
    %1287 = vmatprep.subr.mxu0 0.0
    %1288 = vmatpush1.msra.mxu0 0.0
    %1289 = vmatprep.subr.mxu0 0.0
    %1290 = vmatpush1.msra.mxu0 0.0
    %1291 = vmatprep.subr.mxu0 0.0
    %1292 = vmatpush1.msra.mxu0 0.0
    %1293 = vmatprep.subr.mxu0 0.0
    %1294 = vmatpush1.msra.mxu0 0.0
    %1295 = vmatprep.subr.mxu0 0.0
    %1296 = vmatpush1.msra.mxu0 0.0
    %1297 = vmatprep.mubr.f32.mxu0 0.0
    %1298 = vmatmul.mubr.f32.gmra.mrb[0].mxu0 %v1231
    %v1299 = vpop.f32.mrb[0].mxu0
    %v1300 = vadd.f32 0.0, %v1299
    %v1301 = vpop.f32.mrb[0].mxu0
    %1302 = vdwg.mxu0
    %1304 = vrot.lane.b32.xlu0 %v1300, 8
    %v1305 = vpop.permute.xlu0 %1304
    %vm1307 = vcmask 130112
    %1308 = vst.msk [vmem:[#allocation2] sm:$0xff] %vm1307, %v1305
    %1309 = vrot.lane.b32.xlu0 %v969, 112
    %v1310 = vpop.permute.xlu0 %1309
    %1311 = vrot.lane.b32.xlu0 %v969, 80
    %v1312 = vpop.permute.xlu0 %1311
    %v1313 = vsel %vm975, %v1310, 0
    %v1315 = vsel %vm975, %v1312, 0
    %1317 = vmatprep.subr.mxu0 0.0
    %1318 = vmatpush1.xpose.msra.mxu0 %v1315
    %1319 = vmatprep.subr.mxu0 0.0
    %1320 = vmatpush1.xpose.msra.mxu0 0.0
    %1321 = vmatprep.subr.mxu0 0.0
    %1322 = vmatpush1.xpose.msra.mxu0 0.0
    %1323 = vmatprep.subr.mxu0 0.0
    %1324 = vmatpush1.xpose.msra.mxu0 0.0
    %1325 = vmatprep.subr.mxu0 0.0
    %1326 = vmatpush1.xpose.msra.mxu0 0.0
    %1327 = vmatprep.subr.mxu0 0.0
    %1328 = vmatpush1.xpose.msra.mxu0 0.0
    %1329 = vmatprep.subr.mxu0 0.0
    %1330 = vmatpush1.xpose.msra.mxu0 0.0
    %1331 = vmatprep.subr.mxu0 0.0
    %1332 = vmatpush1.xpose.msra.mxu0 0.0
    %1333 = vmatprep.subr.mxu0 0.0
    %1334 = vmatpush1.xpose.msra.mxu0 0.0
    %1335 = vmatprep.subr.mxu0 0.0
    %1336 = vmatpush1.xpose.msra.mxu0 0.0
    %1337 = vmatprep.subr.mxu0 0.0
    %1338 = vmatpush1.xpose.msra.mxu0 0.0
    %1339 = vmatprep.subr.mxu0 0.0
    %1340 = vmatpush1.xpose.msra.mxu0 0.0
    %1341 = vmatprep.subr.mxu0 0.0
    %1342 = vmatpush1.xpose.msra.mxu0 0.0
    %1343 = vmatprep.subr.mxu0 0.0
    %1344 = vmatpush1.xpose.msra.mxu0 0.0
    %1345 = vmatprep.subr.mxu0 0.0
    %1346 = vmatpush1.xpose.msra.mxu0 0.0
    %1347 = vmatprep.subr.mxu0 0.0
    %1348 = vmatpush1.xpose.msra.mxu0 0.0
    %1349 = vmatprep.subr.mxu0 0.0
    %1350 = vmatpush1.xpose.msra.mxu0 0.0
    %1351 = vmatprep.subr.mxu0 0.0
    %1352 = vmatpush1.xpose.msra.mxu0 0.0
    %1353 = vmatprep.subr.mxu0 0.0
    %1354 = vmatpush1.xpose.msra.mxu0 0.0
    %1355 = vmatprep.subr.mxu0 0.0
    %1356 = vmatpush1.xpose.msra.mxu0 0.0
    %1357 = vmatprep.subr.mxu0 0.0
    %1358 = vmatpush1.xpose.msra.mxu0 0.0
    %1359 = vmatprep.subr.mxu0 0.0
    %1360 = vmatpush1.xpose.msra.mxu0 0.0
    %1361 = vmatprep.subr.mxu0 0.0
    %1362 = vmatpush1.xpose.msra.mxu0 0.0
    %1363 = vmatprep.subr.mxu0 0.0
    %1364 = vmatpush1.xpose.msra.mxu0 0.0
    %1365 = vmatprep.subr.mxu0 0.0
    %1366 = vmatpush1.xpose.msra.mxu0 0.0
    %1367 = vmatprep.subr.mxu0 0.0
    %1368 = vmatpush1.xpose.msra.mxu0 0.0
    %1369 = vmatprep.subr.mxu0 0.0
    %1370 = vmatpush1.xpose.msra.mxu0 0.0
    %1371 = vmatprep.subr.mxu0 0.0
    %1372 = vmatpush1.xpose.msra.mxu0 0.0
    %1373 = vmatprep.subr.mxu0 0.0
    %1374 = vmatpush1.xpose.msra.mxu0 0.0
    %1375 = vmatprep.subr.mxu0 0.0
    %1376 = vmatpush1.xpose.msra.mxu0 0.0
    %1377 = vmatprep.subr.mxu0 0.0
    %1378 = vmatpush1.xpose.msra.mxu0 0.0
    %1379 = vmatprep.subr.mxu0 0.0
    %1380 = vmatpush1.xpose.msra.mxu0 0.0
    %1381 = vmatprep.mubr.f32.mxu0 0.0
    %1382 = vmatmul.mubr.f32.gmra.mrb[0].mxu0 %v1313
    %v1383 = vpop.f32.mrb[0].mxu0
    %v1384 = vadd.f32 0.0, %v1383
    %v1385 = vpop.f32.mrb[0].mxu0
    %1386 = vdwg.mxu0
    %v1387 = vsel %vm975, %v1384, -inf
    %1388 = vmax.xlane.f32.xlu0 %v1387
    %v1389 = vpop.xlane.xlu0 %1388
    %v1390 = vsub.f32 %v1384, %v1389
    %v1391 = vmul.f32 %v1390, 1.442695
    %v1392 = vpow.pop %v1391
    %v1393 = vsel %vm975, %v1392, 0.0
    %1394 = vadd.xlane.f32.xlu0 %v1393
    %v1395 = vpop.xlane.xlu0 %1394
    %v1396 = vrcp.pop %v1395
    %v1397 = vmul.f32 %v1392, %v1396
    %1398 = vrot.lane.b32.xlu0 %v969, 48
    %v1399 = vpop.permute.xlu0 %1398
    %v1402 = vsel %vm975, %v1397, 0
    %1404 = vmatprep.subr.mxu0 0.0
    %1405 = vmatpush1.msra.mxu0 %v1399
    %1406 = vmatprep.subr.mxu0 0.0
    %1407 = vmatpush1.msra.mxu0 0.0
    %1408 = vmatprep.subr.mxu0 0.0
    %1409 = vmatpush1.msra.mxu0 0.0
    %1410 = vmatprep.subr.mxu0 0.0
    %1411 = vmatpush1.msra.mxu0 0.0
    %1412 = vmatprep.subr.mxu0 0.0
    %1413 = vmatpush1.msra.mxu0 0.0
    %1414 = vmatprep.subr.mxu0 0.0
    %1415 = vmatpush1.msra.mxu0 0.0
    %1416 = vmatprep.subr.mxu0 0.0
    %1417 = vmatpush1.msra.mxu0 0.0
    %1418 = vmatprep.subr.mxu0 0.0
    %1419 = vmatpush1.msra.mxu0 0.0
    %1420 = vmatprep.subr.mxu0 0.0
    %1421 = vmatpush1.msra.mxu0 0.0
    %1422 = vmatprep.subr.mxu0 0.0
    %1423 = vmatpush1.msra.mxu0 0.0
    %1424 = vmatprep.subr.mxu0 0.0
    %1425 = vmatpush1.msra.mxu0 0.0
    %1426 = vmatprep.subr.mxu0 0.0
    %1427 = vmatpush1.msra.mxu0 0.0
    %1428 = vmatprep.subr.mxu0 0.0
    %1429 = vmatpush1.msra.mxu0 0.0
    %1430 = vmatprep.subr.mxu0 0.0
    %1431 = vmatpush1.msra.mxu0 0.0
    %1432 = vmatprep.subr.mxu0 0.0
    %1433 = vmatpush1.msra.mxu0 0.0
    %1434 = vmatprep.subr.mxu0 0.0
    %1435 = vmatpush1.msra.mxu0 0.0
    %1436 = vmatprep.subr.mxu0 0.0
    %1437 = vmatpush1.msra.mxu0 0.0
    %1438 = vmatprep.subr.mxu0 0.0
    %1439 = vmatpush1.msra.mxu0 0.0
    %1440 = vmatprep.subr.mxu0 0.0
    %1441 = vmatpush1.msra.mxu0 0.0
    %1442 = vmatprep.subr.mxu0 0.0
    %1443 = vmatpush1.msra.mxu0 0.0
    %1444 = vmatprep.subr.mxu0 0.0
    %1445 = vmatpush1.msra.mxu0 0.0
    %1446 = vmatprep.subr.mxu0 0.0
    %1447 = vmatpush1.msra.mxu0 0.0
    %1448 = vmatprep.subr.mxu0 0.0
    %1449 = vmatpush1.msra.mxu0 0.0
    %1450 = vmatprep.subr.mxu0 0.0
    %1451 = vmatpush1.msra.mxu0 0.0
    %1452 = vmatprep.subr.mxu0 0.0
    %1453 = vmatpush1.msra.mxu0 0.0
    %1454 = vmatprep.subr.mxu0 0.0
    %1455 = vmatpush1.msra.mxu0 0.0
    %1456 = vmatprep.subr.mxu0 0.0
    %1457 = vmatpush1.msra.mxu0 0.0
    %1458 = vmatprep.subr.mxu0 0.0
    %1459 = vmatpush1.msra.mxu0 0.0
    %1460 = vmatprep.subr.mxu0 0.0
    %1461 = vmatpush1.msra.mxu0 0.0
    %1462 = vmatprep.subr.mxu0 0.0
    %1463 = vmatpush1.msra.mxu0 0.0
    %1464 = vmatprep.subr.mxu0 0.0
    %1465 = vmatpush1.msra.mxu0 0.0
    %1466 = vmatprep.subr.mxu0 0.0
    %1467 = vmatpush1.msra.mxu0 0.0
    %1468 = vmatprep.mubr.f32.mxu0 0.0
    %1469 = vmatmul.mubr.f32.gmra.mrb[0].mxu0 %v1402
    %v1470 = vpop.f32.mrb[0].mxu0
    %v1471 = vadd.f32 0.0, %v1470
    %v1472 = vpop.f32.mrb[0].mxu0
    %1473 = vdwg.mxu0
    %1475 = vrot.lane.b32.xlu0 %v1471, 16
    %v1476 = vpop.permute.xlu0 %1475
    %vm1478 = vcmask 195712
    %1479 = vst.msk [vmem:[#allocation2] sm:$0xff] %vm1478, %v1476
    %1480 = vrot.lane.b32.xlu0 %v969, 104
    %v1481 = vpop.permute.xlu0 %1480
    %1482 = vrot.lane.b32.xlu0 %v969, 72
    %v1483 = vpop.permute.xlu0 %1482
    %v1484 = vsel %vm975, %v1481, 0
    %v1486 = vsel %vm975, %v1483, 0
    %1488 = vmatprep.subr.mxu0 0.0
    %1489 = vmatpush1.xpose.msra.mxu0 %v1486
    %1490 = vmatprep.subr.mxu0 0.0
    %1491 = vmatpush1.xpose.msra.mxu0 0.0
    %1492 = vmatprep.subr.mxu0 0.0
    %1493 = vmatpush1.xpose.msra.mxu0 0.0
    %1494 = vmatprep.subr.mxu0 0.0
    %1495 = vmatpush1.xpose.msra.mxu0 0.0
    %1496 = vmatprep.subr.mxu0 0.0
    %1497 = vmatpush1.xpose.msra.mxu0 0.0
    %1498 = vmatprep.subr.mxu0 0.0
    %1499 = vmatpush1.xpose.msra.mxu0 0.0
    %1500 = vmatprep.subr.mxu0 0.0
    %1501 = vmatpush1.xpose.msra.mxu0 0.0
    %1502 = vmatprep.subr.mxu0 0.0
    %1503 = vmatpush1.xpose.msra.mxu0 0.0
    %1504 = vmatprep.subr.mxu0 0.0
    %1505 = vmatpush1.xpose.msra.mxu0 0.0
    %1506 = vmatprep.subr.mxu0 0.0
    %1507 = vmatpush1.xpose.msra.mxu0 0.0
    %1508 = vmatprep.subr.mxu0 0.0
    %1509 = vmatpush1.xpose.msra.mxu0 0.0
    %1510 = vmatprep.subr.mxu0 0.0
    %1511 = vmatpush1.xpose.msra.mxu0 0.0
    %1512 = vmatprep.subr.mxu0 0.0
    %1513 = vmatpush1.xpose.msra.mxu0 0.0
    %1514 = vmatprep.subr.mxu0 0.0
    %1515 = vmatpush1.xpose.msra.mxu0 0.0
    %1516 = vmatprep.subr.mxu0 0.0
    %1517 = vmatpush1.xpose.msra.mxu0 0.0
    %1518 = vmatprep.subr.mxu0 0.0
    %1519 = vmatpush1.xpose.msra.mxu0 0.0
    %1520 = vmatprep.subr.mxu0 0.0
    %1521 = vmatpush1.xpose.msra.mxu0 0.0
    %1522 = vmatprep.subr.mxu0 0.0
    %1523 = vmatpush1.xpose.msra.mxu0 0.0
    %1524 = vmatprep.subr.mxu0 0.0
    %1525 = vmatpush1.xpose.msra.mxu0 0.0
    %1526 = vmatprep.subr.mxu0 0.0
    %1527 = vmatpush1.xpose.msra.mxu0 0.0
    %1528 = vmatprep.subr.mxu0 0.0
    %1529 = vmatpush1.xpose.msra.mxu0 0.0
    %1530 = vmatprep.subr.mxu0 0.0
    %1531 = vmatpush1.xpose.msra.mxu0 0.0
    %1532 = vmatprep.subr.mxu0 0.0
    %1533 = vmatpush1.xpose.msra.mxu0 0.0
    %1534 = vmatprep.subr.mxu0 0.0
    %1535 = vmatpush1.xpose.msra.mxu0 0.0
    %1536 = vmatprep.subr.mxu0 0.0
    %1537 = vmatpush1.xpose.msra.mxu0 0.0
    %1538 = vmatprep.subr.mxu0 0.0
    %1539 = vmatpush1.xpose.msra.mxu0 0.0
    %1540 = vmatprep.subr.mxu0 0.0
    %1541 = vmatpush1.xpose.msra.mxu0 0.0
    %1542 = vmatprep.subr.mxu0 0.0
    %1543 = vmatpush1.xpose.msra.mxu0 0.0
    %1544 = vmatprep.subr.mxu0 0.0
    %1545 = vmatpush1.xpose.msra.mxu0 0.0
    %1546 = vmatprep.subr.mxu0 0.0
    %1547 = vmatpush1.xpose.msra.mxu0 0.0
    %1548 = vmatprep.subr.mxu0 0.0
    %1549 = vmatpush1.xpose.msra.mxu0 0.0
    %1550 = vmatprep.subr.mxu0 0.0
    %1551 = vmatpush1.xpose.msra.mxu0 0.0
    %1552 = vmatprep.mubr.f32.mxu0 0.0
    %1553 = vmatmul.mubr.f32.gmra.mrb[0].mxu0 %v1484
    %v1554 = vpop.f32.mrb[0].mxu0
    %v1555 = vadd.f32 0.0, %v1554
    %v1556 = vpop.f32.mrb[0].mxu0
    %1557 = vdwg.mxu0
    %v1558 = vsel %vm975, %v1555, -inf
    %1559 = vmax.xlane.f32.xlu0 %v1558
    %v1560 = vpop.xlane.xlu0 %1559
    %v1561 = vsub.f32 %v1555, %v1560
    %v1562 = vmul.f32 %v1561, 1.442695
    %v1563 = vpow.pop %v1562
    %v1564 = vsel %vm975, %v1563, 0.0
    %1565 = vadd.xlane.f32.xlu0 %v1564
    %v1566 = vpop.xlane.xlu0 %1565
    %v1567 = vrcp.pop %v1566
    %v1568 = vmul.f32 %v1563, %v1567
    %1569 = vrot.lane.b32.xlu0 %v969, 40
    %v1570 = vpop.permute.xlu0 %1569
    %v1573 = vsel %vm975, %v1568, 0
    %1575 = vmatprep.subr.mxu0 0.0
    %1576 = vmatpush1.msra.mxu0 %v1570
    %1577 = vmatprep.subr.mxu0 0.0
    %1578 = vmatpush1.msra.mxu0 0.0
    %1579 = vmatprep.subr.mxu0 0.0
    %1580 = vmatpush1.msra.mxu0 0.0
    %1581 = vmatprep.subr.mxu0 0.0
    %1582 = vmatpush1.msra.mxu0 0.0
    %1583 = vmatprep.subr.mxu0 0.0
    %1584 = vmatpush1.msra.mxu0 0.0
    %1585 = vmatprep.subr.mxu0 0.0
    %1586 = vmatpush1.msra.mxu0 0.0
    %1587 = vmatprep.subr.mxu0 0.0
    %1588 = vmatpush1.msra.mxu0 0.0
    %1589 = vmatprep.subr.mxu0 0.0
    %1590 = vmatpush1.msra.mxu0 0.0
    %1591 = vmatprep.subr.mxu0 0.0
    %1592 = vmatpush1.msra.mxu0 0.0
    %1593 = vmatprep.subr.mxu0 0.0
    %1594 = vmatpush1.msra.mxu0 0.0
    %1595 = vmatprep.subr.mxu0 0.0
    %1596 = vmatpush1.msra.mxu0 0.0
    %1597 = vmatprep.subr.mxu0 0.0
    %1598 = vmatpush1.msra.mxu0 0.0
    %1599 = vmatprep.subr.mxu0 0.0
    %1600 = vmatpush1.msra.mxu0 0.0
    %1601 = vmatprep.subr.mxu0 0.0
    %1602 = vmatpush1.msra.mxu0 0.0
    %1603 = vmatprep.subr.mxu0 0.0
    %1604 = vmatpush1.msra.mxu0 0.0
    %1605 = vmatprep.subr.mxu0 0.0
    %1606 = vmatpush1.msra.mxu0 0.0
    %1607 = vmatprep.subr.mxu0 0.0
    %1608 = vmatpush1.msra.mxu0 0.0
    %1609 = vmatprep.subr.mxu0 0.0
    %1610 = vmatpush1.msra.mxu0 0.0
    %1611 = vmatprep.subr.mxu0 0.0
    %1612 = vmatpush1.msra.mxu0 0.0
    %1613 = vmatprep.subr.mxu0 0.0
    %1614 = vmatpush1.msra.mxu0 0.0
    %1615 = vmatprep.subr.mxu0 0.0
    %1616 = vmatpush1.msra.mxu0 0.0
    %1617 = vmatprep.subr.mxu0 0.0
    %1618 = vmatpush1.msra.mxu0 0.0
    %1619 = vmatprep.subr.mxu0 0.0
    %1620 = vmatpush1.msra.mxu0 0.0
    %1621 = vmatprep.subr.mxu0 0.0
    %1622 = vmatpush1.msra.mxu0 0.0
    %1623 = vmatprep.subr.mxu0 0.0
    %1624 = vmatpush1.msra.mxu0 0.0
    %1625 = vmatprep.subr.mxu0 0.0
    %1626 = vmatpush1.msra.mxu0 0.0
    %1627 = vmatprep.subr.mxu0 0.0
    %1628 = vmatpush1.msra.mxu0 0.0
    %1629 = vmatprep.subr.mxu0 0.0
    %1630 = vmatpush1.msra.mxu0 0.0
    %1631 = vmatprep.subr.mxu0 0.0
    %1632 = vmatpush1.msra.mxu0 0.0
    %1633 = vmatprep.subr.mxu0 0.0
    %1634 = vmatpush1.msra.mxu0 0.0
    %1635 = vmatprep.subr.mxu0 0.0
    %1636 = vmatpush1.msra.mxu0 0.0
    %1637 = vmatprep.subr.mxu0 0.0
    %1638 = vmatpush1.msra.mxu0 0.0
    %1639 = vmatprep.mubr.f32.mxu0 0.0
    %1640 = vmatmul.mubr.f32.gmra.mrb[0].mxu0 %v1573
    %v1641 = vpop.f32.mrb[0].mxu0
    %v1642 = vadd.f32 0.0, %v1641
    %v1643 = vpop.f32.mrb[0].mxu0
    %1644 = vdwg.mxu0
    %1646 = vrot.lane.b32.xlu0 %v1642, 24
    %v1647 = vpop.permute.xlu0 %1646
    %vm1649 = vcmask 261312
    %1650 = vst.msk [vmem:[#allocation2] sm:$0xff] %vm1649, %v1647
    %v1651 = vld [vmem:[#allocation2] sm:$0xff]
    %v1652 = vld [vmem:[%s7 + $0x2] sm:$0x1]
    %v1653 = vlaneseq
    %v1654 = vshrl.u32 %v1653, 7
    %v1655 = vsub.s32 0, %v1654
    %v1656 = vrot.slane %v1652, %v1655
    %1661 = vrot.lane.b32.xlu0 %v862, 32
    %v1662 = vpop.permute.xlu0 %1661
    %1663 = vrot.lane.b32.xlu0 %v864, 32
    %v1664 = vpop.permute.xlu0 %1663
    %1665 = vrot.lane.b32.xlu0 %v866, 32
    %v1666 = vpop.permute.xlu0 %1665
    %1667 = vrot.lane.b32.xlu0 %v868, 32
    %v1668 = vpop.permute.xlu0 %1667
    %1674 = vrot.lane.b32.xlu0 %v1656, 95
    %v1675 = vpop.permute.xlu0 %1674
    %v1678 = vsel %vm147, %v1651, 0
    %1680 = vmatprep.subr.mxu0 0.0
    %1681 = vmatpush1.msra.mxu0 %v1662
    %1682 = vmatprep.subr.mxu0 0.0
    %1683 = vmatpush1.msra.mxu0 %v1664
    %1684 = vmatprep.subr.mxu0 0.0
    %1685 = vmatpush1.msra.mxu0 %v1666
    %1686 = vmatprep.subr.mxu0 0.0
    %1687 = vmatpush1.msra.mxu0 %v1668
    %1688 = vmatprep.subr.mxu0 0.0
    %1689 = vmatpush1.msra.mxu0 0.0
    %1690 = vmatprep.subr.mxu0 0.0
    %1691 = vmatpush1.msra.mxu0 0.0
    %1692 = vmatprep.subr.mxu0 0.0
    %1693 = vmatpush1.msra.mxu0 0.0
    %1694 = vmatprep.subr.mxu0 0.0
    %1695 = vmatpush1.msra.mxu0 0.0
    %1696 = vmatprep.subr.mxu0 0.0
    %1697 = vmatpush1.msra.mxu0 0.0
    %1698 = vmatprep.subr.mxu0 0.0
    %1699 = vmatpush1.msra.mxu0 0.0
    %1700 = vmatprep.subr.mxu0 0.0
    %1701 = vmatpush1.msra.mxu0 0.0
    %1702 = vmatprep.subr.mxu0 0.0
    %1703 = vmatpush1.msra.mxu0 0.0
    %1704 = vmatprep.subr.mxu0 0.0
    %1705 = vmatpush1.msra.mxu0 0.0
    %1706 = vmatprep.subr.mxu0 0.0
    %1707 = vmatpush1.msra.mxu0 0.0
    %1708 = vmatprep.subr.mxu0 0.0
    %1709 = vmatpush1.msra.mxu0 0.0
    %1710 = vmatprep.subr.mxu0 0.0
    %1711 = vmatpush1.msra.mxu0 0.0
    %1712 = vmatprep.subr.mxu0 0.0
    %1713 = vmatpush1.msra.mxu0 0.0
    %1714 = vmatprep.subr.mxu0 0.0
    %1715 = vmatpush1.msra.mxu0 0.0
    %1716 = vmatprep.subr.mxu0 0.0
    %1717 = vmatpush1.msra.mxu0 0.0
    %1718 = vmatprep.subr.mxu0 0.0
    %1719 = vmatpush1.msra.mxu0 0.0
    %1720 = vmatprep.subr.mxu0 0.0
    %1721 = vmatpush1.msra.mxu0 0.0
    %1722 = vmatprep.subr.mxu0 0.0
    %1723 = vmatpush1.msra.mxu0 0.0
    %1724 = vmatprep.subr.mxu0 0.0
    %1725 = vmatpush1.msra.mxu0 0.0
    %1726 = vmatprep.subr.mxu0 0.0
    %1727 = vmatpush1.msra.mxu0 0.0
    %1728 = vmatprep.subr.mxu0 0.0
    %1729 = vmatpush1.msra.mxu0 0.0
    %1730 = vmatprep.subr.mxu0 0.0
    %1731 = vmatpush1.msra.mxu0 0.0
    %1732 = vmatprep.subr.mxu0 0.0
    %1733 = vmatpush1.msra.mxu0 0.0
    %1734 = vmatprep.subr.mxu0 0.0
    %1735 = vmatpush1.msra.mxu0 0.0
    %1736 = vmatprep.subr.mxu0 0.0
    %1737 = vmatpush1.msra.mxu0 0.0
    %1738 = vmatprep.subr.mxu0 0.0
    %1739 = vmatpush1.msra.mxu0 0.0
    %1740 = vmatprep.subr.mxu0 0.0
    %1741 = vmatpush1.msra.mxu0 0.0
    %1742 = vmatprep.subr.mxu0 0.0
    %1743 = vmatpush1.msra.mxu0 0.0
    %1744 = vmatprep.mubr.f32.mxu0 0.0
    %1745 = vmatmul.mubr.f32.gmra.mrb[0].mxu0 %v1678
    %v1746 = vpop.f32.mrb[0].mxu0
    %v1747 = vadd.f32 %v1675, %v1746
    %v1748 = vpop.f32.mrb[0].mxu0
    %1749 = vdwg.mxu0
    %v1750 = vadd.f32 %v218, %v1747
    %v1751 = vld [vmem:[%s7 + $0x4] sm:$0x1]
    %v1752 = vsel %vm147, %v1750, 0.0
    %1753 = vadd.xlane.f32.xlu0 %v1752
    %v1754 = vpop.xlane.xlu0 %1753
    %v1755 = vrcp.pop 32.0
    %v1756 = vmul.f32 %v1754, %v1755
    %v1757 = vsub.f32 %v1750, %v1756
    %v1758 = vmul.f32 %v1757, %v1757
    %v1759 = vsel %vm147, %v1758, 0.0
    %1760 = vadd.xlane.f32.xlu0 %v1759
    %v1761 = vpop.xlane.xlu0 %1760
    %v1762 = vmul.f32 %v1761, %v1755
    %v1763 = vadd.f32 %v1762, 1e-05
    %v1764 = vrsqrt.pop %v1763
    %v1765 = vmul.f32 %v1757, %v1764
    %v1766 = vlaneseq
    %v1767 = vshrl.u32 %v1766, 7
    %v1768 = vsub.s32 0, %v1767
    %v1769 = vrot.slane %v1751, %v1768
    %1771 = vrot.lane.b32.xlu0 %v1769, 95
    %v1772 = vpop.permute.xlu0 %1771
    %v1774 = vmul.f32 %v1765, %v1772
    %1775 = vrot.lane.b32.xlu0 %v1769, 63
    %v1776 = vpop.permute.xlu0 %1775
    %v1778 = vadd.f32 %v1774, %v1776
    %v1779 = vld [vmem:[%s7 + $0x2] sm:$0x5]
    %v1781 = vlaneseq
    %v1782 = vshrl.u32 %v1781, 7
    %v1783 = vsub.s32 0, %v1782
    %v1784 = vrot.slane %v1779, %v1783
    %v1785 = vlaneseq
    %v1786 = vshrl.u32 %v1785, 7
    %v1787 = vsub.s32 2, %v1786
    %v1788 = vrot.slane %v1779, %v1787
    %v1791 = vlaneseq
    %v1792 = vshrl.u32 %v1791, 7
    %v1793 = vsub.s32 0, %v1792
    %v1794 = vrot.slane %v1784, %v1793
    %v1795 = vlaneseq
    %v1796 = vshrl.u32 %v1795, 7
    %v1797 = vsub.s32 0, %v1796
    %v1798 = vrot.slane %v1788, %v1797
    %1801 = vrot.lane.b32.xlu0 %v1794, 63
    %v1802 = vpop.permute.xlu0 %1801
    %1803 = vrot.lane.b32.xlu0 %v1798, 63
    %v1804 = vpop.permute.xlu0 %1803
    %v1805 = vsel %vm896, %v1802, %v1804
    %v1808 = vsel %vm147, %v1778, 0
    %1810 = vmatprep.subr.mxu0 0.0
    %1811 = vmatpush1.msra.mxu0 %v863
    %1812 = vmatprep.subr.mxu0 0.0
    %1813 = vmatpush1.msra.mxu0 %v865
    %1814 = vmatprep.subr.mxu0 0.0
    %1815 = vmatpush1.msra.mxu0 %v867
    %1816 = vmatprep.subr.mxu0 0.0
    %1817 = vmatpush1.msra.mxu0 %v869
    %1818 = vmatprep.subr.mxu0 0.0
    %1819 = vmatpush1.msra.mxu0 0.0
    %1820 = vmatprep.subr.mxu0 0.0
    %1821 = vmatpush1.msra.mxu0 0.0
    %1822 = vmatprep.subr.mxu0 0.0
    %1823 = vmatpush1.msra.mxu0 0.0
    %1824 = vmatprep.subr.mxu0 0.0
    %1825 = vmatpush1.msra.mxu0 0.0
    %1826 = vmatprep.subr.mxu0 0.0
    %1827 = vmatpush1.msra.mxu0 0.0
    %1828 = vmatprep.subr.mxu0 0.0
    %1829 = vmatpush1.msra.mxu0 0.0
    %1830 = vmatprep.subr.mxu0 0.0
    %1831 = vmatpush1.msra.mxu0 0.0
    %1832 = vmatprep.subr.mxu0 0.0
    %1833 = vmatpush1.msra.mxu0 0.0
    %1834 = vmatprep.subr.mxu0 0.0
    %1835 = vmatpush1.msra.mxu0 0.0
    %1836 = vmatprep.subr.mxu0 0.0
    %1837 = vmatpush1.msra.mxu0 0.0
    %1838 = vmatprep.subr.mxu0 0.0
    %1839 = vmatpush1.msra.mxu0 0.0
    %1840 = vmatprep.subr.mxu0 0.0
    %1841 = vmatpush1.msra.mxu0 0.0
    %1842 = vmatprep.subr.mxu0 0.0
    %1843 = vmatpush1.msra.mxu0 0.0
    %1844 = vmatprep.subr.mxu0 0.0
    %1845 = vmatpush1.msra.mxu0 0.0
    %1846 = vmatprep.subr.mxu0 0.0
    %1847 = vmatpush1.msra.mxu0 0.0
    %1848 = vmatprep.subr.mxu0 0.0
    %1849 = vmatpush1.msra.mxu0 0.0
    %1850 = vmatprep.subr.mxu0 0.0
    %1851 = vmatpush1.msra.mxu0 0.0
    %1852 = vmatprep.subr.mxu0 0.0
    %1853 = vmatpush1.msra.mxu0 0.0
    %1854 = vmatprep.subr.mxu0 0.0
    %1855 = vmatpush1.msra.mxu0 0.0
    %1856 = vmatprep.subr.mxu0 0.0
    %1857 = vmatpush1.msra.mxu0 0.0
    %1858 = vmatprep.subr.mxu0 0.0
    %1859 = vmatpush1.msra.mxu0 0.0
    %1860 = vmatprep.subr.mxu0 0.0
    %1861 = vmatpush1.msra.mxu0 0.0
    %1862 = vmatprep.subr.mxu0 0.0
    %1863 = vmatpush1.msra.mxu0 0.0
    %1864 = vmatprep.subr.mxu0 0.0
    %1865 = vmatpush1.msra.mxu0 0.0
    %1866 = vmatprep.subr.mxu0 0.0
    %1867 = vmatpush1.msra.mxu0 0.0
    %1868 = vmatprep.subr.mxu0 0.0
    %1869 = vmatpush1.msra.mxu0 0.0
    %1870 = vmatprep.subr.mxu0 0.0
    %1871 = vmatpush1.msra.mxu0 0.0
    %1872 = vmatprep.subr.mxu0 0.0
    %1873 = vmatpush1.msra.mxu0 0.0
    %1874 = vmatprep.mubr.f32.mxu0 0.0
    %1875 = vmatmul.mubr.f32.gmra.mrb[0].mxu0 %v1808
    %v1876 = vpop.f32.mrb[0].mxu0
    %v1877 = vadd.f32 %v1805, %v1876
    %v1878 = vpop.f32.mrb[0].mxu0
    %1879 = vdwg.mxu0
    %v1880 = vmax.f32 %v1877, 0.0
    %v1881 = vld [vmem:[%s6] sm:$0xff]
    %v1882 = vld [vmem:[%s6 + $0x8] sm:$0xff]
    %v1883 = vld [vmem:[%s6 + $0x10] sm:$0xff]
    %v1884 = vld [vmem:[%s6 + $0x18] sm:$0xff]
    %v1885 = vld [vmem:[%s6 + $0x20] sm:$0xff]
    %v1886 = vld [vmem:[%s6 + $0x28] sm:$0xff]
    %v1887 = vld [vmem:[%s6 + $0x30] sm:$0xff]
    %v1888 = vld [vmem:[%s6 + $0x38] sm:$0xff]
    %1889 = vrot.lane.b32.xlu0 %v1769, 127
    %v1890 = vpop.permute.xlu0 %1889
    %vm1892 = vcmask 523264
    %v1894 = vsel %vm1892, %v1880, 0
    %1896 = vmatprep.subr.mxu0 0.0
    %1897 = vmatpush1.msra.mxu0 %v1881
    %1898 = vmatprep.subr.mxu0 0.0
    %1899 = vmatpush1.msra.mxu0 %v1882
    %1900 = vmatprep.subr.mxu0 0.0
    %1901 = vmatpush1.msra.mxu0 %v1883
    %1902 = vmatprep.subr.mxu0 0.0
    %1903 = vmatpush1.msra.mxu0 %v1884
    %1904 = vmatprep.subr.mxu0 0.0
    %1905 = vmatpush1.msra.mxu0 %v1885
    %1906 = vmatprep.subr.mxu0 0.0
    %1907 = vmatpush1.msra.mxu0 %v1886
    %1908 = vmatprep.subr.mxu0 0.0
    %1909 = vmatpush1.msra.mxu0 %v1887
    %1910 = vmatprep.subr.mxu0 0.0
    %1911 = vmatpush1.msra.mxu0 %v1888
    %1912 = vmatprep.subr.mxu0 0.0
    %1913 = vmatpush1.msra.mxu0 0.0
    %1914 = vmatprep.subr.mxu0 0.0
    %1915 = vmatpush1.msra.mxu0 0.0
    %1916 = vmatprep.subr.mxu0 0.0
    %1917 = vmatpush1.msra.mxu0 0.0
    %1918 = vmatprep.subr.mxu0 0.0
    %1919 = vmatpush1.msra.mxu0 0.0
    %1920 = vmatprep.subr.mxu0 0.0
    %1921 = vmatpush1.msra.mxu0 0.0
    %1922 = vmatprep.subr.mxu0 0.0
    %1923 = vmatpush1.msra.mxu0 0.0
    %1924 = vmatprep.subr.mxu0 0.0
    %1925 = vmatpush1.msra.mxu0 0.0
    %1926 = vmatprep.subr.mxu0 0.0
    %1927 = vmatpush1.msra.mxu0 0.0
    %1928 = vmatprep.subr.mxu0 0.0
    %1929 = vmatpush1.msra.mxu0 0.0
    %1930 = vmatprep.subr.mxu0 0.0
    %1931 = vmatpush1.msra.mxu0 0.0
    %1932 = vmatprep.subr.mxu0 0.0
    %1933 = vmatpush1.msra.mxu0 0.0
    %1934 = vmatprep.subr.mxu0 0.0
    %1935 = vmatpush1.msra.mxu0 0.0
    %1936 = vmatprep.subr.mxu0 0.0
    %1937 = vmatpush1.msra.mxu0 0.0
    %1938 = vmatprep.subr.mxu0 0.0
    %1939 = vmatpush1.msra.mxu0 0.0
    %1940 = vmatprep.subr.mxu0 0.0
    %1941 = vmatpush1.msra.mxu0 0.0
    %1942 = vmatprep.subr.mxu0 0.0
    %1943 = vmatpush1.msra.mxu0 0.0
    %1944 = vmatprep.subr.mxu0 0.0
    %1945 = vmatpush1.msra.mxu0 0.0
    %1946 = vmatprep.subr.mxu0 0.0
    %1947 = vmatpush1.msra.mxu0 0.0
    %1948 = vmatprep.subr.mxu0 0.0
    %1949 = vmatpush1.msra.mxu0 0.0
    %1950 = vmatprep.subr.mxu0 0.0
    %1951 = vmatpush1.msra.mxu0 0.0
    %1952 = vmatprep.subr.mxu0 0.0
    %1953 = vmatpush1.msra.mxu0 0.0
    %1954 = vmatprep.subr.mxu0 0.0
    %1955 = vmatpush1.msra.mxu0 0.0
    %1956 = vmatprep.subr.mxu0 0.0
    %1957 = vmatpush1.msra.mxu0 0.0
    %1958 = vmatprep.subr.mxu0 0.0
    %1959 = vmatpush1.msra.mxu0 0.0
    %1960 = vmatprep.mubr.f32.mxu0 0.0
    %1961 = vmatmul.mubr.f32.gmra.mrb[0].mxu0 %v1894
    %v1962 = vpop.f32.mrb[0].mxu0
    %v1963 = vadd.f32 %v1890, %v1962
    %v1964 = vpop.f32.mrb[0].mxu0
    %1965 = vdwg.mxu0
    %v1966 = vadd.f32 %v1778, %v1963
    %v1967 = vld [vmem:[%s7 + $0x4] sm:$0x5]
    %v1968 = vld [vmem:[%s7 + $0x6] sm:$0x1]
    %v1969 = vsel %vm147, %v1966, 0.0
    %1970 = vadd.xlane.f32.xlu0 %v1969
    %v1971 = vpop.xlane.xlu0 %1970
    %v1972 = vmul.f32 %v1971, %v1755
    %v1973 = vsub.f32 %v1966, %v1972
    %v1974 = vmul.f32 %v1973, %v1973
    %v1975 = vsel %vm147, %v1974, 0.0
    %1976 = vadd.xlane.f32.xlu0 %v1975
    %v1977 = vpop.xlane.xlu0 %1976
    %v1978 = vmul.f32 %v1977, %v1755
    %v1979 = vadd.f32 %v1978, 1e-05
    %v1980 = vrsqrt.pop %v1979
    %v1981 = vmul.f32 %v1973, %v1980
    %v1983 = vlaneseq
    %v1984 = vshrl.u32 %v1983, 7
    %v1985 = vsub.s32 0, %v1984
    %v1986 = vrot.slane %v1967, %v1985
    %v1987 = vlaneseq
    %v1988 = vshrl.u32 %v1987, 7
    %v1989 = vsub.s32 2, %v1988
    %v1990 = vrot.slane %v1967, %v1989
    %v1993 = vlaneseq
    %v1994 = vshrl.u32 %v1993, 7
    %v1995 = vsub.s32 0, %v1994
    %v1996 = vrot.slane %v1986, %v1995
    %v1997 = vlaneseq
    %v1998 = vshrl.u32 %v1997, 7
    %v1999 = vsub.s32 0, %v1998
    %v2000 = vrot.slane %v1990, %v1999
    %2003 = vrot.lane.b32.xlu0 %v1996, 31
    %v2004 = vpop.permute.xlu0 %2003
    %2005 = vrot.lane.b32.xlu0 %v2000, 31
    %v2006 = vpop.permute.xlu0 %2005
    %vm2007 = vcmask 252928
    %v2008 = vsel %vm2007, %v2004, %v2006
    %v2010 = vmul.f32 %v1981, %v2008
    %v2011 = vlaneseq
    %v2012 = vshrl.u32 %v2011, 7
    %v2013 = vsub.s32 0, %v2012
    %v2014 = vrot.slane %v1968, %v2013
    %2016 = vrot.lane.b32.xlu0 %v2014, 127
    %v2017 = vpop.permute.xlu0 %2016
    %v2019 = vadd.f32 %v2010, %v2017
    %s2020 = scalar_lea.vmem %s5, 64
    %v2021 = vld [vmem:[%s2020] sm:$0xff]
    %v2022 = vld [vmem:[%s2020 + $0x8] sm:$0xff]
    %v2023 = vld [vmem:[%s2020 + $0x10] sm:$0xff]
    %v2024 = vld [vmem:[%s2020 + $0x18] sm:$0xff]
    %v2025 = vld [vmem:[%s2020 + $0x20] sm:$0xff]
    %v2026 = vld [vmem:[%s2020 + $0x28] sm:$0xff]
    %v2027 = vld [vmem:[%s2020 + $0x30] sm:$0xff]
    %v2028 = vld [vmem:[%s2020 + $0x38] sm:$0xff]
    %v2029 = vld [vmem:[%s7 + $0x1] sm:$0x5]
    %v2031 = vlaneseq
    %v2032 = vshrl.u32 %v2031, 7
    %v2033 = vsub.s32 0, %v2032
    %v2034 = vrot.slane %v2029, %v2033
    %v2035 = vlaneseq
    %v2036 = vshrl.u32 %v2035, 7
    %v2037 = vsub.s32 2, %v2036
    %v2038 = vrot.slane %v2029, %v2037
    %v2041 = vlaneseq
    %v2042 = vshrl.u32 %v2041, 7
    %v2043 = vsub.s32 0, %v2042
    %v2044 = vrot.slane %v2034, %v2043
    %v2045 = vlaneseq
    %v2046 = vshrl.u32 %v2045, 7
    %v2047 = vsub.s32 0, %v2046
    %v2048 = vrot.slane %v2038, %v2047
    %2051 = vrot.lane.b32.xlu0 %v2044, 63
    %v2052 = vpop.permute.xlu0 %2051
    %2053 = vrot.lane.b32.xlu0 %v2048, 63
    %v2054 = vpop.permute.xlu0 %2053
    %v2055 = vsel %vm896, %v2052, %v2054
    %v2058 = vsel %vm147, %v2019, 0
    %2060 = vmatprep.subr.mxu0 0.0
    %2061 = vmatpush1.msra.mxu0 %v2021
    %2062 = vmatprep.subr.mxu0 0.0
    %2063 = vmatpush1.msra.mxu0 %v2023
    %2064 = vmatprep.subr.mxu0 0.0
    %2065 = vmatpush1.msra.mxu0 %v2025
    %2066 = vmatprep.subr.mxu0 0.0
    %2067 = vmatpush1.msra.mxu0 %v2027
    %2068 = vmatprep.subr.mxu0 0.0
    %2069 = vmatpush1.msra.mxu0 0.0
    %2070 = vmatprep.subr.mxu0 0.0
    %2071 = vmatpush1.msra.mxu0 0.0
    %2072 = vmatprep.subr.mxu0 0.0
    %2073 = vmatpush1.msra.mxu0 0.0
    %2074 = vmatprep.subr.mxu0 0.0
    %2075 = vmatpush1.msra.mxu0 0.0
    %2076 = vmatprep.subr.mxu0 0.0
    %2077 = vmatpush1.msra.mxu0 0.0
    %2078 = vmatprep.subr.mxu0 0.0
    %2079 = vmatpush1.msra.mxu0 0.0
    %2080 = vmatprep.subr.mxu0 0.0
    %2081 = vmatpush1.msra.mxu0 0.0
    %2082 = vmatprep.subr.mxu0 0.0
    %2083 = vmatpush1.msra.mxu0 0.0
    %2084 = vmatprep.subr.mxu0 0.0
    %2085 = vmatpush1.msra.mxu0 0.0
    %2086 = vmatprep.subr.mxu0 0.0
    %2087 = vmatpush1.msra.mxu0 0.0
    %2088 = vmatprep.subr.mxu0 0.0
    %2089 = vmatpush1.msra.mxu0 0.0
    %2090 = vmatprep.subr.mxu0 0.0
    %2091 = vmatpush1.msra.mxu0 0.0
    %2092 = vmatprep.subr.mxu0 0.0
    %2093 = vmatpush1.msra.mxu0 0.0
    %2094 = vmatprep.subr.mxu0 0.0
    %2095 = vmatpush1.msra.mxu0 0.0
    %2096 = vmatprep.subr.mxu0 0.0
    %2097 = vmatpush1.msra.mxu0 0.0
    %2098 = vmatprep.subr.mxu0 0.0
    %2099 = vmatpush1.msra.mxu0 0.0
    %2100 = vmatprep.subr.mxu0 0.0
    %2101 = vmatpush1.msra.mxu0 0.0
    %2102 = vmatprep.subr.mxu0 0.0
    %2103 = vmatpush1.msra.mxu0 0.0
    %2104 = vmatprep.subr.mxu0 0.0
    %2105 = vmatpush1.msra.mxu0 0.0
    %2106 = vmatprep.subr.mxu0 0.0
    %2107 = vmatpush1.msra.mxu0 0.0
    %2108 = vmatprep.subr.mxu0 0.0
    %2109 = vmatpush1.msra.mxu0 0.0
    %2110 = vmatprep.subr.mxu0 0.0
    %2111 = vmatpush1.msra.mxu0 0.0
    %2112 = vmatprep.subr.mxu0 0.0
    %2113 = vmatpush1.msra.mxu0 0.0
    %2114 = vmatprep.subr.mxu0 0.0
    %2115 = vmatpush1.msra.mxu0 0.0
    %2116 = vmatprep.subr.mxu0 0.0
    %2117 = vmatpush1.msra.mxu0 0.0
    %2118 = vmatprep.subr.mxu0 0.0
    %2119 = vmatpush1.msra.mxu0 0.0
    %2120 = vmatprep.subr.mxu0 0.0
    %2121 = vmatpush1.msra.mxu0 0.0
    %2122 = vmatprep.subr.mxu0 0.0
    %2123 = vmatpush1.msra.mxu0 0.0
    %2124 = vmatprep.mubr.f32.mxu0 0.0
    %2125 = vmatmul.mubr.f32.gmra.mrb[0].mxu0 %v2058
    %v2126 = vpop.f32.mrb[0].mxu0
    %v2127 = vadd.f32 %v2055, %v2126
    %v2128 = vpop.f32.mrb[0].mxu0
    %2129 = vdwg.mxu0
    %2131 = vrot.lane.b32.xlu0 %v2127, 96
    %v2132 = vpop.permute.xlu0 %2131
    %v2133 = vsel %vm975, %v2127, 0
    %v2135 = vsel %vm975, %v2132, 0
    %2137 = vmatprep.subr.mxu0 0.0
    %2138 = vmatpush1.xpose.msra.mxu0 %v2135
    %2139 = vmatprep.subr.mxu0 0.0
    %2140 = vmatpush1.xpose.msra.mxu0 0.0
    %2141 = vmatprep.subr.mxu0 0.0
    %2142 = vmatpush1.xpose.msra.mxu0 0.0
    %2143 = vmatprep.subr.mxu0 0.0
    %2144 = vmatpush1.xpose.msra.mxu0 0.0
    %2145 = vmatprep.subr.mxu0 0.0
    %2146 = vmatpush1.xpose.msra.mxu0 0.0
    %2147 = vmatprep.subr.mxu0 0.0
    %2148 = vmatpush1.xpose.msra.mxu0 0.0
    %2149 = vmatprep.subr.mxu0 0.0
    %2150 = vmatpush1.xpose.msra.mxu0 0.0
    %2151 = vmatprep.subr.mxu0 0.0
    %2152 = vmatpush1.xpose.msra.mxu0 0.0
    %2153 = vmatprep.subr.mxu0 0.0
    %2154 = vmatpush1.xpose.msra.mxu0 0.0
    %2155 = vmatprep.subr.mxu0 0.0
    %2156 = vmatpush1.xpose.msra.mxu0 0.0
    %2157 = vmatprep.subr.mxu0 0.0
    %2158 = vmatpush1.xpose.msra.mxu0 0.0
    %2159 = vmatprep.subr.mxu0 0.0
    %2160 = vmatpush1.xpose.msra.mxu0 0.0
    %2161 = vmatprep.subr.mxu0 0.0
    %2162 = vmatpush1.xpose.msra.mxu0 0.0
    %2163 = vmatprep.subr.mxu0 0.0
    %2164 = vmatpush1.xpose.msra.mxu0 0.0
    %2165 = vmatprep.subr.mxu0 0.0
    %2166 = vmatpush1.xpose.msra.mxu0 0.0
    %2167 = vmatprep.subr.mxu0 0.0
    %2168 = vmatpush1.xpose.msra.mxu0 0.0
    %2169 = vmatprep.subr.mxu0 0.0
    %2170 = vmatpush1.xpose.msra.mxu0 0.0
    %2171 = vmatprep.subr.mxu0 0.0
    %2172 = vmatpush1.xpose.msra.mxu0 0.0
    %2173 = vmatprep.subr.mxu0 0.0
    %2174 = vmatpush1.xpose.msra.mxu0 0.0
    %2175 = vmatprep.subr.mxu0 0.0
    %2176 = vmatpush1.xpose.msra.mxu0 0.0
    %2177 = vmatprep.subr.mxu0 0.0
    %2178 = vmatpush1.xpose.msra.mxu0 0.0
    %2179 = vmatprep.subr.mxu0 0.0
    %2180 = vmatpush1.xpose.msra.mxu0 0.0
    %2181 = vmatprep.subr.mxu0 0.0
    %2182 = vmatpush1.xpose.msra.mxu0 0.0
    %2183 = vmatprep.subr.mxu0 0.0
    %2184 = vmatpush1.xpose.msra.mxu0 0.0
    %2185 = vmatprep.subr.mxu0 0.0
    %2186 = vmatpush1.xpose.msra.mxu0 0.0
    %2187 = vmatprep.subr.mxu0 0.0
    %2188 = vmatpush1.xpose.msra.mxu0 0.0
    %2189 = vmatprep.subr.mxu0 0.0
    %2190 = vmatpush1.xpose.msra.mxu0 0.0
    %2191 = vmatprep.subr.mxu0 0.0
    %2192 = vmatpush1.xpose.msra.mxu0 0.0
    %2193 = vmatprep.subr.mxu0 0.0
    %2194 = vmatpush1.xpose.msra.mxu0 0.0
    %2195 = vmatprep.subr.mxu0 0.0
    %2196 = vmatpush1.xpose.msra.mxu0 0.0
    %2197 = vmatprep.subr.mxu0 0.0
    %2198 = vmatpush1.xpose.msra.mxu0 0.0
    %2199 = vmatprep.subr.mxu0 0.0
    %2200 = vmatpush1.xpose.msra.mxu0 0.0
    %2201 = vmatprep.mubr.f32.mxu0 0.0
    %2202 = vmatmul.mubr.f32.gmra.mrb[0].mxu0 %v2133
    %v2203 = vpop.f32.mrb[0].mxu0
    %v2204 = vadd.f32 0.0, %v2203
    %v2205 = vpop.f32.mrb[0].mxu0
    %2206 = vdwg.mxu0
    %v2207 = vsel %vm975, %v2204, -inf
    %2208 = vmax.xlane.f32.xlu0 %v2207
    %v2209 = vpop.xlane.xlu0 %2208
    %v2210 = vsub.f32 %v2204, %v2209
    %v2211 = vmul.f32 %v2210, 1.442695
    %v2212 = vpow.pop %v2211
    %v2213 = vsel %vm975, %v2212, 0.0
    %2214 = vadd.xlane.f32.xlu0 %v2213
    %v2215 = vpop.xlane.xlu0 %2214
    %v2216 = vrcp.pop %v2215
    %v2217 = vmul.f32 %v2212, %v2216
    %2218 = vrot.lane.b32.xlu0 %v2127, 64
    %v2219 = vpop.permute.xlu0 %2218
    %v2222 = vsel %vm975, %v2217, 0
    %2224 = vmatprep.subr.mxu0 0.0
    %2225 = vmatpush1.msra.mxu0 %v2219
    %2226 = vmatprep.subr.mxu0 0.0
    %2227 = vmatpush1.msra.mxu0 0.0
    %2228 = vmatprep.subr.mxu0 0.0
    %2229 = vmatpush1.msra.mxu0 0.0
    %2230 = vmatprep.subr.mxu0 0.0
    %2231 = vmatpush1.msra.mxu0 0.0
    %2232 = vmatprep.subr.mxu0 0.0
    %2233 = vmatpush1.msra.mxu0 0.0
    %2234 = vmatprep.subr.mxu0 0.0
    %2235 = vmatpush1.msra.mxu0 0.0
    %2236 = vmatprep.subr.mxu0 0.0
    %2237 = vmatpush1.msra.mxu0 0.0
    %2238 = vmatprep.subr.mxu0 0.0
    %2239 = vmatpush1.msra.mxu0 0.0
    %2240 = vmatprep.subr.mxu0 0.0
    %2241 = vmatpush1.msra.mxu0 0.0
    %2242 = vmatprep.subr.mxu0 0.0
    %2243 = vmatpush1.msra.mxu0 0.0
    %2244 = vmatprep.subr.mxu0 0.0
    %2245 = vmatpush1.msra.mxu0 0.0
    %2246 = vmatprep.subr.mxu0 0.0
    %2247 = vmatpush1.msra.mxu0 0.0
    %2248 = vmatprep.subr.mxu0 0.0
    %2249 = vmatpush1.msra.mxu0 0.0
    %2250 = vmatprep.subr.mxu0 0.0
    %2251 = vmatpush1.msra.mxu0 0.0
    %2252 = vmatprep.subr.mxu0 0.0
    %2253 = vmatpush1.msra.mxu0 0.0
    %2254 = vmatprep.subr.mxu0 0.0
    %2255 = vmatpush1.msra.mxu0 0.0
    %2256 = vmatprep.subr.mxu0 0.0
    %2257 = vmatpush1.msra.mxu0 0.0
    %2258 = vmatprep.subr.mxu0 0.0
    %2259 = vmatpush1.msra.mxu0 0.0
    %2260 = vmatprep.subr.mxu0 0.0
    %2261 = vmatpush1.msra.mxu0 0.0
    %2262 = vmatprep.subr.mxu0 0.0
    %2263 = vmatpush1.msra.mxu0 0.0
    %2264 = vmatprep.subr.mxu0 0.0
    %2265 = vmatpush1.msra.mxu0 0.0
    %2266 = vmatprep.subr.mxu0 0.0
    %2267 = vmatpush1.msra.mxu0 0.0
    %2268 = vmatprep.subr.mxu0 0.0
    %2269 = vmatpush1.msra.mxu0 0.0
    %2270 = vmatprep.subr.mxu0 0.0
    %2271 = vmatpush1.msra.mxu0 0.0
    %2272 = vmatprep.subr.mxu0 0.0
    %2273 = vmatpush1.msra.mxu0 0.0
    %2274 = vmatprep.subr.mxu0 0.0
    %2275 = vmatpush1.msra.mxu0 0.0
    %2276 = vmatprep.subr.mxu0 0.0
    %2277 = vmatpush1.msra.mxu0 0.0
    %2278 = vmatprep.subr.mxu0 0.0
    %2279 = vmatpush1.msra.mxu0 0.0
    %2280 = vmatprep.subr.mxu0 0.0
    %2281 = vmatpush1.msra.mxu0 0.0
    %2282 = vmatprep.subr.mxu0 0.0
    %2283 = vmatpush1.msra.mxu0 0.0
    %2284 = vmatprep.subr.mxu0 0.0
    %2285 = vmatpush1.msra.mxu0 0.0
    %2286 = vmatprep.subr.mxu0 0.0
    %2287 = vmatpush1.msra.mxu0 0.0
    %2288 = vmatprep.mubr.f32.mxu0 0.0
    %2289 = vmatmul.mubr.f32.gmra.mrb[0].mxu0 %v2222
    %v2290 = vpop.f32.mrb[0].mxu0
    %v2291 = vadd.f32 0.0, %v2290
    %v2292 = vpop.f32.mrb[0].mxu0
    %2293 = vdwg.mxu0
    %2294 = vst.msk [vmem:[#allocation2] sm:$0xff] %vm975, %v2291
    %2295 = vrot.lane.b32.xlu0 %v2127, 120
    %v2296 = vpop.permute.xlu0 %2295
    %2297 = vrot.lane.b32.xlu0 %v2127, 88
    %v2298 = vpop.permute.xlu0 %2297
    %v2299 = vsel %vm975, %v2296, 0
    %v2301 = vsel %vm975, %v2298, 0
    %2303 = vmatprep.subr.mxu0 0.0
    %2304 = vmatpush1.xpose.msra.mxu0 %v2301
    %2305 = vmatprep.subr.mxu0 0.0
    %2306 = vmatpush1.xpose.msra.mxu0 0.0
    %2307 = vmatprep.subr.mxu0 0.0
    %2308 = vmatpush1.xpose.msra.mxu0 0.0
    %2309 = vmatprep.subr.mxu0 0.0
    %2310 = vmatpush1.xpose.msra.mxu0 0.0
    %2311 = vmatprep.subr.mxu0 0.0
    %2312 = vmatpush1.xpose.msra.mxu0 0.0
    %2313 = vmatprep.subr.mxu0 0.0
    %2314 = vmatpush1.xpose.msra.mxu0 0.0
    %2315 = vmatprep.subr.mxu0 0.0
    %2316 = vmatpush1.xpose.msra.mxu0 0.0
    %2317 = vmatprep.subr.mxu0 0.0
    %2318 = vmatpush1.xpose.msra.mxu0 0.0
    %2319 = vmatprep.subr.mxu0 0.0
    %2320 = vmatpush1.xpose.msra.mxu0 0.0
    %2321 = vmatprep.subr.mxu0 0.0
    %2322 = vmatpush1.xpose.msra.mxu0 0.0
    %2323 = vmatprep.subr.mxu0 0.0
    %2324 = vmatpush1.xpose.msra.mxu0 0.0
    %2325 = vmatprep.subr.mxu0 0.0
    %2326 = vmatpush1.xpose.msra.mxu0 0.0
    %2327 = vmatprep.subr.mxu0 0.0
    %2328 = vmatpush1.xpose.msra.mxu0 0.0
    %2329 = vmatprep.subr.mxu0 0.0
    %2330 = vmatpush1.xpose.msra.mxu0 0.0
    %2331 = vmatprep.subr.mxu0 0.0
    %2332 = vmatpush1.xpose.msra.mxu0 0.0
    %2333 = vmatprep.subr.mxu0 0.0
    %2334 = vmatpush1.xpose.msra.mxu0 0.0
    %2335 = vmatprep.subr.mxu0 0.0
    %2336 = vmatpush1.xpose.msra.mxu0 0.0
    %2337 = vmatprep.subr.mxu0 0.0
    %2338 = vmatpush1.xpose.msra.mxu0 0.0
    %2339 = vmatprep.subr.mxu0 0.0
    %2340 = vmatpush1.xpose.msra.mxu0 0.0
    %2341 = vmatprep.subr.mxu0 0.0
    %2342 = vmatpush1.xpose.msra.mxu0 0.0
    %2343 = vmatprep.subr.mxu0 0.0
    %2344 = vmatpush1.xpose.msra.mxu0 0.0
    %2345 = vmatprep.subr.mxu0 0.0
    %2346 = vmatpush1.xpose.msra.mxu0 0.0
    %2347 = vmatprep.subr.mxu0 0.0
    %2348 = vmatpush1.xpose.msra.mxu0 0.0
    %2349 = vmatprep.subr.mxu0 0.0
    %2350 = vmatpush1.xpose.msra.mxu0 0.0
    %2351 = vmatprep.subr.mxu0 0.0
    %2352 = vmatpush1.xpose.msra.mxu0 0.0
    %2353 = vmatprep.subr.mxu0 0.0
    %2354 = vmatpush1.xpose.msra.mxu0 0.0
    %2355 = vmatprep.subr.mxu0 0.0
    %2356 = vmatpush1.xpose.msra.mxu0 0.0
    %2357 = vmatprep.subr.mxu0 0.0
    %2358 = vmatpush1.xpose.msra.mxu0 0.0
    %2359 = vmatprep.subr.mxu0 0.0
    %2360 = vmatpush1.xpose.msra.mxu0 0.0
    %2361 = vmatprep.subr.mxu0 0.0
    %2362 = vmatpush1.xpose.msra.mxu0 0.0
    %2363 = vmatprep.subr.mxu0 0.0
    %2364 = vmatpush1.xpose.msra.mxu0 0.0
    %2365 = vmatprep.subr.mxu0 0.0
    %2366 = vmatpush1.xpose.msra.mxu0 0.0
    %2367 = vmatprep.mubr.f32.mxu0 0.0
    %2368 = vmatmul.mubr.f32.gmra.mrb[0].mxu0 %v2299
    %v2369 = vpop.f32.mrb[0].mxu0
    %v2370 = vadd.f32 0.0, %v2369
    %v2371 = vpop.f32.mrb[0].mxu0
    %2372 = vdwg.mxu0
    %v2373 = vsel %vm975, %v2370, -inf
    %2374 = vmax.xlane.f32.xlu0 %v2373
    %v2375 = vpop.xlane.xlu0 %2374
    %v2376 = vsub.f32 %v2370, %v2375
    %v2377 = vmul.f32 %v2376, 1.442695
    %v2378 = vpow.pop %v2377
    %v2379 = vsel %vm975, %v2378, 0.0
    %2380 = vadd.xlane.f32.xlu0 %v2379
    %v2381 = vpop.xlane.xlu0 %2380
    %v2382 = vrcp.pop %v2381
    %v2383 = vmul.f32 %v2378, %v2382
    %2384 = vrot.lane.b32.xlu0 %v2127, 56
    %v2385 = vpop.permute.xlu0 %2384
    %v2388 = vsel %vm975, %v2383, 0
    %2390 = vmatprep.subr.mxu0 0.0
    %2391 = vmatpush1.msra.mxu0 %v2385
    %2392 = vmatprep.subr.mxu0 0.0
    %2393 = vmatpush1.msra.mxu0 0.0
    %2394 = vmatprep.subr.mxu0 0.0
    %2395 = vmatpush1.msra.mxu0 0.0
    %2396 = vmatprep.subr.mxu0 0.0
    %2397 = vmatpush1.msra.mxu0 0.0
    %2398 = vmatprep.subr.mxu0 0.0
    %2399 = vmatpush1.msra.mxu0 0.0
    %2400 = vmatprep.subr.mxu0 0.0
    %2401 = vmatpush1.msra.mxu0 0.0
    %2402 = vmatprep.subr.mxu0 0.0
    %2403 = vmatpush1.msra.mxu0 0.0
    %2404 = vmatprep.subr.mxu0 0.0
    %2405 = vmatpush1.msra.mxu0 0.0
    %2406 = vmatprep.subr.mxu0 0.0
    %2407 = vmatpush1.msra.mxu0 0.0
    %2408 = vmatprep.subr.mxu0 0.0
    %2409 = vmatpush1.msra.mxu0 0.0
    %2410 = vmatprep.subr.mxu0 0.0
    %2411 = vmatpush1.msra.mxu0 0.0
    %2412 = vmatprep.subr.mxu0 0.0
    %2413 = vmatpush1.msra.mxu0 0.0
    %2414 = vmatprep.subr.mxu0 0.0
    %2415 = vmatpush1.msra.mxu0 0.0
    %2416 = vmatprep.subr.mxu0 0.0
    %2417 = vmatpush1.msra.mxu0 0.0
    %2418 = vmatprep.subr.mxu0 0.0
    %2419 = vmatpush1.msra.mxu0 0.0
    %2420 = vmatprep.subr.mxu0 0.0
    %2421 = vmatpush1.msra.mxu0 0.0
    %2422 = vmatprep.subr.mxu0 0.0
    %2423 = vmatpush1.msra.mxu0 0.0
    %2424 = vmatprep.subr.mxu0 0.0
    %2425 = vmatpush1.msra.mxu0 0.0
    %2426 = vmatprep.subr.mxu0 0.0
    %2427 = vmatpush1.msra.mxu0 0.0
    %2428 = vmatprep.subr.mxu0 0.0
    %2429 = vmatpush1.msra.mxu0 0.0
    %2430 = vmatprep.subr.mxu0 0.0
    %2431 = vmatpush1.msra.mxu0 0.0
    %2432 = vmatprep.subr.mxu0 0.0
    %2433 = vmatpush1.msra.mxu0 0.0
    %2434 = vmatprep.subr.mxu0 0.0
    %2435 = vmatpush1.msra.mxu0 0.0
    %2436 = vmatprep.subr.mxu0 0.0
    %2437 = vmatpush1.msra.mxu0 0.0
    %2438 = vmatprep.subr.mxu0 0.0
    %2439 = vmatpush1.msra.mxu0 0.0
    %2440 = vmatprep.subr.mxu0 0.0
    %2441 = vmatpush1.msra.mxu0 0.0
    %2442 = vmatprep.subr.mxu0 0.0
    %2443 = vmatpush1.msra.mxu0 0.0
    %2444 = vmatprep.subr.mxu0 0.0
    %2445 = vmatpush1.msra.mxu0 0.0
    %2446 = vmatprep.subr.mxu0 0.0
    %2447 = vmatpush1.msra.mxu0 0.0
    %2448 = vmatprep.subr.mxu0 0.0
    %2449 = vmatpush1.msra.mxu0 0.0
    %2450 = vmatprep.subr.mxu0 0.0
    %2451 = vmatpush1.msra.mxu0 0.0
    %2452 = vmatprep.subr.mxu0 0.0
    %2453 = vmatpush1.msra.mxu0 0.0
    %2454 = vmatprep.mubr.f32.mxu0 0.0
    %2455 = vmatmul.mubr.f32.gmra.mrb[0].mxu0 %v2388
    %v2456 = vpop.f32.mrb[0].mxu0
    %v2457 = vadd.f32 0.0, %v2456
    %v2458 = vpop.f32.mrb[0].mxu0
    %2459 = vdwg.mxu0
    %2461 = vrot.lane.b32.xlu0 %v2457, 8
    %v2462 = vpop.permute.xlu0 %2461
    %2464 = vst.msk [vmem:[#allocation2] sm:$0xff] %vm1307, %v2462
    %2465 = vrot.lane.b32.xlu0 %v2127, 112
    %v2466 = vpop.permute.xlu0 %2465
    %2467 = vrot.lane.b32.xlu0 %v2127, 80
    %v2468 = vpop.permute.xlu0 %2467
    %v2469 = vsel %vm975, %v2466, 0
    %v2471 = vsel %vm975, %v2468, 0
    %2473 = vmatprep.subr.mxu0 0.0
    %2474 = vmatpush1.xpose.msra.mxu0 %v2471
    %2475 = vmatprep.subr.mxu0 0.0
    %2476 = vmatpush1.xpose.msra.mxu0 0.0
    %2477 = vmatprep.subr.mxu0 0.0
    %2478 = vmatpush1.xpose.msra.mxu0 0.0
    %2479 = vmatprep.subr.mxu0 0.0
    %2480 = vmatpush1.xpose.msra.mxu0 0.0
    %2481 = vmatprep.subr.mxu0 0.0
    %2482 = vmatpush1.xpose.msra.mxu0 0.0
    %2483 = vmatprep.subr.mxu0 0.0
    %2484 = vmatpush1.xpose.msra.mxu0 0.0
    %2485 = vmatprep.subr.mxu0 0.0
    %2486 = vmatpush1.xpose.msra.mxu0 0.0
    %2487 = vmatprep.subr.mxu0 0.0
    %2488 = vmatpush1.xpose.msra.mxu0 0.0
    %2489 = vmatprep.subr.mxu0 0.0
    %2490 = vmatpush1.xpose.msra.mxu0 0.0
    %2491 = vmatprep.subr.mxu0 0.0
    %2492 = vmatpush1.xpose.msra.mxu0 0.0
    %2493 = vmatprep.subr.mxu0 0.0
    %2494 = vmatpush1.xpose.msra.mxu0 0.0
    %2495 = vmatprep.subr.mxu0 0.0
    %2496 = vmatpush1.xpose.msra.mxu0 0.0
    %2497 = vmatprep.subr.mxu0 0.0
    %2498 = vmatpush1.xpose.msra.mxu0 0.0
    %2499 = vmatprep.subr.mxu0 0.0
    %2500 = vmatpush1.xpose.msra.mxu0 0.0
    %2501 = vmatprep.subr.mxu0 0.0
    %2502 = vmatpush1.xpose.msra.mxu0 0.0
    %2503 = vmatprep.subr.mxu0 0.0
    %2504 = vmatpush1.xpose.msra.mxu0 0.0
    %2505 = vmatprep.subr.mxu0 0.0
    %2506 = vmatpush1.xpose.msra.mxu0 0.0
    %2507 = vmatprep.subr.mxu0 0.0
    %2508 = vmatpush1.xpose.msra.mxu0 0.0
    %2509 = vmatprep.subr.mxu0 0.0
    %2510 = vmatpush1.xpose.msra.mxu0 0.0
    %2511 = vmatprep.subr.mxu0 0.0
    %2512 = vmatpush1.xpose.msra.mxu0 0.0
    %2513 = vmatprep.subr.mxu0 0.0
    %2514 = vmatpush1.xpose.msra.mxu0 0.0
    %2515 = vmatprep.subr.mxu0 0.0
    %2516 = vmatpush1.xpose.msra.mxu0 0.0
    %2517 = vmatprep.subr.mxu0 0.0
    %2518 = vmatpush1.xpose.msra.mxu0 0.0
    %2519 = vmatprep.subr.mxu0 0.0
    %2520 = vmatpush1.xpose.msra.mxu0 0.0
    %2521 = vmatprep.subr.mxu0 0.0
    %2522 = vmatpush1.xpose.msra.mxu0 0.0
    %2523 = vmatprep.subr.mxu0 0.0
    %2524 = vmatpush1.xpose.msra.mxu0 0.0
    %2525 = vmatprep.subr.mxu0 0.0
    %2526 = vmatpush1.xpose.msra.mxu0 0.0
    %2527 = vmatprep.subr.mxu0 0.0
    %2528 = vmatpush1.xpose.msra.mxu0 0.0
    %2529 = vmatprep.subr.mxu0 0.0
    %2530 = vmatpush1.xpose.msra.mxu0 0.0
    %2531 = vmatprep.subr.mxu0 0.0
    %2532 = vmatpush1.xpose.msra.mxu0 0.0
    %2533 = vmatprep.subr.mxu0 0.0
    %2534 = vmatpush1.xpose.msra.mxu0 0.0
    %2535 = vmatprep.subr.mxu0 0.0
    %2536 = vmatpush1.xpose.msra.mxu0 0.0
    %2537 = vmatprep.mubr.f32.mxu0 0.0
    %2538 = vmatmul.mubr.f32.gmra.mrb[0].mxu0 %v2469
    %v2539 = vpop.f32.mrb[0].mxu0
    %v2540 = vadd.f32 0.0, %v2539
    %v2541 = vpop.f32.mrb[0].mxu0
    %2542 = vdwg.mxu0
    %v2543 = vsel %vm975, %v2540, -inf
    %2544 = vmax.xlane.f32.xlu0 %v2543
    %v2545 = vpop.xlane.xlu0 %2544
    %v2546 = vsub.f32 %v2540, %v2545
    %v2547 = vmul.f32 %v2546, 1.442695
    %v2548 = vpow.pop %v2547
    %v2549 = vsel %vm975, %v2548, 0.0
    %2550 = vadd.xlane.f32.xlu0 %v2549
    %v2551 = vpop.xlane.xlu0 %2550
    %v2552 = vrcp.pop %v2551
    %v2553 = vmul.f32 %v2548, %v2552
    %2554 = vrot.lane.b32.xlu0 %v2127, 48
    %v2555 = vpop.permute.xlu0 %2554
    %v2558 = vsel %vm975, %v2553, 0
    %2560 = vmatprep.subr.mxu0 0.0
    %2561 = vmatpush1.msra.mxu0 %v2555
    %2562 = vmatprep.subr.mxu0 0.0
    %2563 = vmatpush1.msra.mxu0 0.0
    %2564 = vmatprep.subr.mxu0 0.0
    %2565 = vmatpush1.msra.mxu0 0.0
    %2566 = vmatprep.subr.mxu0 0.0
    %2567 = vmatpush1.msra.mxu0 0.0
    %2568 = vmatprep.subr.mxu0 0.0
    %2569 = vmatpush1.msra.mxu0 0.0
    %2570 = vmatprep.subr.mxu0 0.0
    %2571 = vmatpush1.msra.mxu0 0.0
    %2572 = vmatprep.subr.mxu0 0.0
    %2573 = vmatpush1.msra.mxu0 0.0
    %2574 = vmatprep.subr.mxu0 0.0
    %2575 = vmatpush1.msra.mxu0 0.0
    %2576 = vmatprep.subr.mxu0 0.0
    %2577 = vmatpush1.msra.mxu0 0.0
    %2578 = vmatprep.subr.mxu0 0.0
    %2579 = vmatpush1.msra.mxu0 0.0
    %2580 = vmatprep.subr.mxu0 0.0
    %2581 = vmatpush1.msra.mxu0 0.0
    %2582 = vmatprep.subr.mxu0 0.0
    %2583 = vmatpush1.msra.mxu0 0.0
    %2584 = vmatprep.subr.mxu0 0.0
    %2585 = vmatpush1.msra.mxu0 0.0
    %2586 = vmatprep.subr.mxu0 0.0
    %2587 = vmatpush1.msra.mxu0 0.0
    %2588 = vmatprep.subr.mxu0 0.0
    %2589 = vmatpush1.msra.mxu0 0.0
    %2590 = vmatprep.subr.mxu0 0.0
    %2591 = vmatpush1.msra.mxu0 0.0
    %2592 = vmatprep.subr.mxu0 0.0
    %2593 = vmatpush1.msra.mxu0 0.0
    %2594 = vmatprep.subr.mxu0 0.0
    %2595 = vmatpush1.msra.mxu0 0.0
    %2596 = vmatprep.subr.mxu0 0.0
    %2597 = vmatpush1.msra.mxu0 0.0
    %2598 = vmatprep.subr.mxu0 0.0
    %2599 = vmatpush1.msra.mxu0 0.0
    %2600 = vmatprep.subr.mxu0 0.0
    %2601 = vmatpush1.msra.mxu0 0.0
    %2602 = vmatprep.subr.mxu0 0.0
    %2603 = vmatpush1.msra.mxu0 0.0
    %2604 = vmatprep.subr.mxu0 0.0
    %2605 = vmatpush1.msra.mxu0 0.0
    %2606 = vmatprep.subr.mxu0 0.0
    %2607 = vmatpush1.msra.mxu0 0.0
    %2608 = vmatprep.subr.mxu0 0.0
    %2609 = vmatpush1.msra.mxu0 0.0
    %2610 = vmatprep.subr.mxu0 0.0
    %2611 = vmatpush1.msra.mxu0 0.0
    %2612 = vmatprep.subr.mxu0 0.0
    %2613 = vmatpush1.msra.mxu0 0.0
    %2614 = vmatprep.subr.mxu0 0.0
    %2615 = vmatpush1.msra.mxu0 0.0
    %2616 = vmatprep.subr.mxu0 0.0
    %2617 = vmatpush1.msra.mxu0 0.0
    %2618 = vmatprep.subr.mxu0 0.0
    %2619 = vmatpush1.msra.mxu0 0.0
    %2620 = vmatprep.subr.mxu0 0.0
    %2621 = vmatpush1.msra.mxu0 0.0
    %2622 = vmatprep.subr.mxu0 0.0
    %2623 = vmatpush1.msra.mxu0 0.0
    %2624 = vmatprep.mubr.f32.mxu0 0.0
    %2625 = vmatmul.mubr.f32.gmra.mrb[0].mxu0 %v2558
    %v2626 = vpop.f32.mrb[0].mxu0
    %v2627 = vadd.f32 0.0, %v2626
    %v2628 = vpop.f32.mrb[0].mxu0
    %2629 = vdwg.mxu0
    %2631 = vrot.lane.b32.xlu0 %v2627, 16
    %v2632 = vpop.permute.xlu0 %2631
    %2634 = vst.msk [vmem:[#allocation2] sm:$0xff] %vm1478, %v2632
    %2635 = vrot.lane.b32.xlu0 %v2127, 104
    %v2636 = vpop.permute.xlu0 %2635
    %2637 = vrot.lane.b32.xlu0 %v2127, 72
    %v2638 = vpop.permute.xlu0 %2637
    %v2639 = vsel %vm975, %v2636, 0
    %v2641 = vsel %vm975, %v2638, 0
    %2643 = vmatprep.subr.mxu0 0.0
    %2644 = vmatpush1.xpose.msra.mxu0 %v2641
    %2645 = vmatprep.subr.mxu0 0.0
    %2646 = vmatpush1.xpose.msra.mxu0 0.0
    %2647 = vmatprep.subr.mxu0 0.0
    %2648 = vmatpush1.xpose.msra.mxu0 0.0
    %2649 = vmatprep.subr.mxu0 0.0
    %2650 = vmatpush1.xpose.msra.mxu0 0.0
    %2651 = vmatprep.subr.mxu0 0.0
    %2652 = vmatpush1.xpose.msra.mxu0 0.0
    %2653 = vmatprep.subr.mxu0 0.0
    %2654 = vmatpush1.xpose.msra.mxu0 0.0
    %2655 = vmatprep.subr.mxu0 0.0
    %2656 = vmatpush1.xpose.msra.mxu0 0.0
    %2657 = vmatprep.subr.mxu0 0.0
    %2658 = vmatpush1.xpose.msra.mxu0 0.0
    %2659 = vmatprep.subr.mxu0 0.0
    %2660 = vmatpush1.xpose.msra.mxu0 0.0
    %2661 = vmatprep.subr.mxu0 0.0
    %2662 = vmatpush1.xpose.msra.mxu0 0.0
    %2663 = vmatprep.subr.mxu0 0.0
    %2664 = vmatpush1.xpose.msra.mxu0 0.0
    %2665 = vmatprep.subr.mxu0 0.0
    %2666 = vmatpush1.xpose.msra.mxu0 0.0
    %2667 = vmatprep.subr.mxu0 0.0
    %2668 = vmatpush1.xpose.msra.mxu0 0.0
    %2669 = vmatprep.subr.mxu0 0.0
    %2670 = vmatpush1.xpose.msra.mxu0 0.0
    %2671 = vmatprep.subr.mxu0 0.0
    %2672 = vmatpush1.xpose.msra.mxu0 0.0
    %2673 = vmatprep.subr.mxu0 0.0
    %2674 = vmatpush1.xpose.msra.mxu0 0.0
    %2675 = vmatprep.subr.mxu0 0.0
    %2676 = vmatpush1.xpose.msra.mxu0 0.0
    %2677 = vmatprep.subr.mxu0 0.0
    %2678 = vmatpush1.xpose.msra.mxu0 0.0
    %2679 = vmatprep.subr.mxu0 0.0
    %2680 = vmatpush1.xpose.msra.mxu0 0.0
    %2681 = vmatprep.subr.mxu0 0.0
    %2682 = vmatpush1.xpose.msra.mxu0 0.0
    %2683 = vmatprep.subr.mxu0 0.0
    %2684 = vmatpush1.xpose.msra.mxu0 0.0
    %2685 = vmatprep.subr.mxu0 0.0
    %2686 = vmatpush1.xpose.msra.mxu0 0.0
    %2687 = vmatprep.subr.mxu0 0.0
    %2688 = vmatpush1.xpose.msra.mxu0 0.0
    %2689 = vmatprep.subr.mxu0 0.0
    %2690 = vmatpush1.xpose.msra.mxu0 0.0
    %2691 = vmatprep.subr.mxu0 0.0
    %2692 = vmatpush1.xpose.msra.mxu0 0.0
    %2693 = vmatprep.subr.mxu0 0.0
    %2694 = vmatpush1.xpose.msra.mxu0 0.0
    %2695 = vmatprep.subr.mxu0 0.0
    %2696 = vmatpush1.xpose.msra.mxu0 0.0
    %2697 = vmatprep.subr.mxu0 0.0
    %2698 = vmatpush1.xpose.msra.mxu0 0.0
    %2699 = vmatprep.subr.mxu0 0.0
    %2700 = vmatpush1.xpose.msra.mxu0 0.0
    %2701 = vmatprep.subr.mxu0 0.0
    %2702 = vmatpush1.xpose.msra.mxu0 0.0
    %2703 = vmatprep.subr.mxu0 0.0
    %2704 = vmatpush1.xpose.msra.mxu0 0.0
    %2705 = vmatprep.subr.mxu0 0.0
    %2706 = vmatpush1.xpose.msra.mxu0 0.0
    %2707 = vmatprep.mubr.f32.mxu0 0.0
    %2708 = vmatmul.mubr.f32.gmra.mrb[0].mxu0 %v2639
    %v2709 = vpop.f32.mrb[0].mxu0
    %v2710 = vadd.f32 0.0, %v2709
    %v2711 = vpop.f32.mrb[0].mxu0
    %2712 = vdwg.mxu0
    %v2713 = vsel %vm975, %v2710, -inf
    %2714 = vmax.xlane.f32.xlu0 %v2713
    %v2715 = vpop.xlane.xlu0 %2714
    %v2716 = vsub.f32 %v2710, %v2715
    %v2717 = vmul.f32 %v2716, 1.442695
    %v2718 = vpow.pop %v2717
    %v2719 = vsel %vm975, %v2718, 0.0
    %2720 = vadd.xlane.f32.xlu0 %v2719
    %v2721 = vpop.xlane.xlu0 %2720
    %v2722 = vrcp.pop %v2721
    %v2723 = vmul.f32 %v2718, %v2722
    %2724 = vrot.lane.b32.xlu0 %v2127, 40
    %v2725 = vpop.permute.xlu0 %2724
    %v2728 = vsel %vm975, %v2723, 0
    %2730 = vmatprep.subr.mxu0 0.0
    %2731 = vmatpush1.msra.mxu0 %v2725
    %2732 = vmatprep.subr.mxu0 0.0
    %2733 = vmatpush1.msra.mxu0 0.0
    %2734 = vmatprep.subr.mxu0 0.0
    %2735 = vmatpush1.msra.mxu0 0.0
    %2736 = vmatprep.subr.mxu0 0.0
    %2737 = vmatpush1.msra.mxu0 0.0
    %2738 = vmatprep.subr.mxu0 0.0
    %2739 = vmatpush1.msra.mxu0 0.0
    %2740 = vmatprep.subr.mxu0 0.0
    %2741 = vmatpush1.msra.mxu0 0.0
    %2742 = vmatprep.subr.mxu0 0.0
    %2743 = vmatpush1.msra.mxu0 0.0
    %2744 = vmatprep.subr.mxu0 0.0
    %2745 = vmatpush1.msra.mxu0 0.0
    %2746 = vmatprep.subr.mxu0 0.0
    %2747 = vmatpush1.msra.mxu0 0.0
    %2748 = vmatprep.subr.mxu0 0.0
    %2749 = vmatpush1.msra.mxu0 0.0
    %2750 = vmatprep.subr.mxu0 0.0
    %2751 = vmatpush1.msra.mxu0 0.0
    %2752 = vmatprep.subr.mxu0 0.0
    %2753 = vmatpush1.msra.mxu0 0.0
    %2754 = vmatprep.subr.mxu0 0.0
    %2755 = vmatpush1.msra.mxu0 0.0
    %2756 = vmatprep.subr.mxu0 0.0
    %2757 = vmatpush1.msra.mxu0 0.0
    %2758 = vmatprep.subr.mxu0 0.0
    %2759 = vmatpush1.msra.mxu0 0.0
    %2760 = vmatprep.subr.mxu0 0.0
    %2761 = vmatpush1.msra.mxu0 0.0
    %2762 = vmatprep.subr.mxu0 0.0
    %2763 = vmatpush1.msra.mxu0 0.0
    %2764 = vmatprep.subr.mxu0 0.0
    %2765 = vmatpush1.msra.mxu0 0.0
    %2766 = vmatprep.subr.mxu0 0.0
    %2767 = vmatpush1.msra.mxu0 0.0
    %2768 = vmatprep.subr.mxu0 0.0
    %2769 = vmatpush1.msra.mxu0 0.0
    %2770 = vmatprep.subr.mxu0 0.0
    %2771 = vmatpush1.msra.mxu0 0.0
    %2772 = vmatprep.subr.mxu0 0.0
    %2773 = vmatpush1.msra.mxu0 0.0
    %2774 = vmatprep.subr.mxu0 0.0
    %2775 = vmatpush1.msra.mxu0 0.0
    %2776 = vmatprep.subr.mxu0 0.0
    %2777 = vmatpush1.msra.mxu0 0.0
    %2778 = vmatprep.subr.mxu0 0.0
    %2779 = vmatpush1.msra.mxu0 0.0
    %2780 = vmatprep.subr.mxu0 0.0
    %2781 = vmatpush1.msra.mxu0 0.0
    %2782 = vmatprep.subr.mxu0 0.0
    %2783 = vmatpush1.msra.mxu0 0.0
    %2784 = vmatprep.subr.mxu0 0.0
    %2785 = vmatpush1.msra.mxu0 0.0
    %2786 = vmatprep.subr.mxu0 0.0
    %2787 = vmatpush1.msra.mxu0 0.0
    %2788 = vmatprep.subr.mxu0 0.0
    %2789 = vmatpush1.msra.mxu0 0.0
    %2790 = vmatprep.subr.mxu0 0.0
    %2791 = vmatpush1.msra.mxu0 0.0
    %2792 = vmatprep.subr.mxu0 0.0
    %2793 = vmatpush1.msra.mxu0 0.0
    %2794 = vmatprep.mubr.f32.mxu0 0.0
    %2795 = vmatmul.mubr.f32.gmra.mrb[0].mxu0 %v2728
    %v2796 = vpop.f32.mrb[0].mxu0
    %v2797 = vadd.f32 0.0, %v2796
    %v2798 = vpop.f32.mrb[0].mxu0
    %2799 = vdwg.mxu0
    %2801 = vrot.lane.b32.xlu0 %v2797, 24
    %v2802 = vpop.permute.xlu0 %2801
    %2804 = vst.msk [vmem:[#allocation2] sm:$0xff] %vm1649, %v2802
    %v2805 = vld [vmem:[#allocation2] sm:$0xff]
    %v2806 = vld [vmem:[%s7 + $0x3] sm:$0x1]
    %v2807 = vlaneseq
    %v2808 = vshrl.u32 %v2807, 7
    %v2809 = vsub.s32 0, %v2808
    %v2810 = vrot.slane %v2806, %v2809
    %2815 = vrot.lane.b32.xlu0 %v2021, 32
    %v2816 = vpop.permute.xlu0 %2815
    %2817 = vrot.lane.b32.xlu0 %v2023, 32
    %v2818 = vpop.permute.xlu0 %2817
    %2819 = vrot.lane.b32.xlu0 %v2025, 32
    %v2820 = vpop.permute.xlu0 %2819
    %2821 = vrot.lane.b32.xlu0 %v2027, 32
    %v2822 = vpop.permute.xlu0 %2821
    %2828 = vrot.lane.b32.xlu0 %v2810, 95
    %v2829 = vpop.permute.xlu0 %2828
    %v2832 = vsel %vm147, %v2805, 0
    %2834 = vmatprep.subr.mxu0 0.0
    %2835 = vmatpush1.msra.mxu0 %v2816
    %2836 = vmatprep.subr.mxu0 0.0
    %2837 = vmatpush1.msra.mxu0 %v2818
    %2838 = vmatprep.subr.mxu0 0.0
    %2839 = vmatpush1.msra.mxu0 %v2820
    %2840 = vmatprep.subr.mxu0 0.0
    %2841 = vmatpush1.msra.mxu0 %v2822
    %2842 = vmatprep.subr.mxu0 0.0
    %2843 = vmatpush1.msra.mxu0 0.0
    %2844 = vmatprep.subr.mxu0 0.0
    %2845 = vmatpush1.msra.mxu0 0.0
    %2846 = vmatprep.subr.mxu0 0.0
    %2847 = vmatpush1.msra.mxu0 0.0
    %2848 = vmatprep.subr.mxu0 0.0
    %2849 = vmatpush1.msra.mxu0 0.0
    %2850 = vmatprep.subr.mxu0 0.0
    %2851 = vmatpush1.msra.mxu0 0.0
    %2852 = vmatprep.subr.mxu0 0.0
    %2853 = vmatpush1.msra.mxu0 0.0
    %2854 = vmatprep.subr.mxu0 0.0
    %2855 = vmatpush1.msra.mxu0 0.0
    %2856 = vmatprep.subr.mxu0 0.0
    %2857 = vmatpush1.msra.mxu0 0.0
    %2858 = vmatprep.subr.mxu0 0.0
    %2859 = vmatpush1.msra.mxu0 0.0
    %2860 = vmatprep.subr.mxu0 0.0
    %2861 = vmatpush1.msra.mxu0 0.0
    %2862 = vmatprep.subr.mxu0 0.0
    %2863 = vmatpush1.msra.mxu0 0.0
    %2864 = vmatprep.subr.mxu0 0.0
    %2865 = vmatpush1.msra.mxu0 0.0
    %2866 = vmatprep.subr.mxu0 0.0
    %2867 = vmatpush1.msra.mxu0 0.0
    %2868 = vmatprep.subr.mxu0 0.0
    %2869 = vmatpush1.msra.mxu0 0.0
    %2870 = vmatprep.subr.mxu0 0.0
    %2871 = vmatpush1.msra.mxu0 0.0
    %2872 = vmatprep.subr.mxu0 0.0
    %2873 = vmatpush1.msra.mxu0 0.0
    %2874 = vmatprep.subr.mxu0 0.0
    %2875 = vmatpush1.msra.mxu0 0.0
    %2876 = vmatprep.subr.mxu0 0.0
    %2877 = vmatpush1.msra.mxu0 0.0
    %2878 = vmatprep.subr.mxu0 0.0
    %2879 = vmatpush1.msra.mxu0 0.0
    %2880 = vmatprep.subr.mxu0 0.0
    %2881 = vmatpush1.msra.mxu0 0.0
    %2882 = vmatprep.subr.mxu0 0.0
    %2883 = vmatpush1.msra.mxu0 0.0
    %2884 = vmatprep.subr.mxu0 0.0
    %2885 = vmatpush1.msra.mxu0 0.0
    %2886 = vmatprep.subr.mxu0 0.0
    %2887 = vmatpush1.msra.mxu0 0.0
    %2888 = vmatprep.subr.mxu0 0.0
    %2889 = vmatpush1.msra.mxu0 0.0
    %2890 = vmatprep.subr.mxu0 0.0
    %2891 = vmatpush1.msra.mxu0 0.0
    %2892 = vmatprep.subr.mxu0 0.0
    %2893 = vmatpush1.msra.mxu0 0.0
    %2894 = vmatprep.subr.mxu0 0.0
    %2895 = vmatpush1.msra.mxu0 0.0
    %2896 = vmatprep.subr.mxu0 0.0
    %2897 = vmatpush1.msra.mxu0 0.0
    %2898 = vmatprep.mubr.f32.mxu0 0.0
    %2899 = vmatmul.mubr.f32.gmra.mrb[0].mxu0 %v2832
    %v2900 = vpop.f32.mrb[0].mxu0
    %v2901 = vadd.f32 %v2829, %v2900
    %v2902 = vpop.f32.mrb[0].mxu0
    %2903 = vdwg.mxu0
    %v2904 = vadd.f32 %v2019, %v2901
    %v2905 = vld [vmem:[%s7 + $0x5] sm:$0x1]
    %v2906 = vsel %vm147, %v2904, 0.0
    %2907 = vadd.xlane.f32.xlu0 %v2906
    %v2908 = vpop.xlane.xlu0 %2907
    %v2909 = vmul.f32 %v2908, %v1755
    %v2910 = vsub.f32 %v2904, %v2909
    %v2911 = vmul.f32 %v2910, %v2910
    %v2912 = vsel %vm147, %v2911, 0.0
    %2913 = vadd.xlane.f32.xlu0 %v2912
    %v2914 = vpop.xlane.xlu0 %2913
    %v2915 = vmul.f32 %v2914, %v1755
    %v2916 = vadd.f32 %v2915, 1e-05
    %v2917 = vrsqrt.pop %v2916
    %v2918 = vmul.f32 %v2910, %v2917
    %v2919 = vlaneseq
    %v2920 = vshrl.u32 %v2919, 7
    %v2921 = vsub.s32 0, %v2920
    %v2922 = vrot.slane %v2905, %v2921
    %2924 = vrot.lane.b32.xlu0 %v2922, 95
    %v2925 = vpop.permute.xlu0 %2924
    %v2927 = vmul.f32 %v2918, %v2925
    %2928 = vrot.lane.b32.xlu0 %v2922, 63
    %v2929 = vpop.permute.xlu0 %2928
    %v2931 = vadd.f32 %v2927, %v2929
    %v2932 = vld [vmem:[%s7 + $0x3] sm:$0x5]
    %v2934 = vlaneseq
    %v2935 = vshrl.u32 %v2934, 7
    %v2936 = vsub.s32 0, %v2935
    %v2937 = vrot.slane %v2932, %v2936
    %v2938 = vlaneseq
    %v2939 = vshrl.u32 %v2938, 7
    %v2940 = vsub.s32 2, %v2939
    %v2941 = vrot.slane %v2932, %v2940
    %v2944 = vlaneseq
    %v2945 = vshrl.u32 %v2944, 7
    %v2946 = vsub.s32 0, %v2945
    %v2947 = vrot.slane %v2937, %v2946
    %v2948 = vlaneseq
    %v2949 = vshrl.u32 %v2948, 7
    %v2950 = vsub.s32 0, %v2949
    %v2951 = vrot.slane %v2941, %v2950
    %2954 = vrot.lane.b32.xlu0 %v2947, 63
    %v2955 = vpop.permute.xlu0 %2954
    %2956 = vrot.lane.b32.xlu0 %v2951, 63
    %v2957 = vpop.permute.xlu0 %2956
    %v2958 = vsel %vm896, %v2955, %v2957
    %v2961 = vsel %vm147, %v2931, 0
    %2963 = vmatprep.subr.mxu0 0.0
    %2964 = vmatpush1.msra.mxu0 %v2022
    %2965 = vmatprep.subr.mxu0 0.0
    %2966 = vmatpush1.msra.mxu0 %v2024
    %2967 = vmatprep.subr.mxu0 0.0
    %2968 = vmatpush1.msra.mxu0 %v2026
    %2969 = vmatprep.subr.mxu0 0.0
    %2970 = vmatpush1.msra.mxu0 %v2028
    %2971 = vmatprep.subr.mxu0 0.0
    %2972 = vmatpush1.msra.mxu0 0.0
    %2973 = vmatprep.subr.mxu0 0.0
    %2974 = vmatpush1.msra.mxu0 0.0
    %2975 = vmatprep.subr.mxu0 0.0
    %2976 = vmatpush1.msra.mxu0 0.0
    %2977 = vmatprep.subr.mxu0 0.0
    %2978 = vmatpush1.msra.mxu0 0.0
    %2979 = vmatprep.subr.mxu0 0.0
    %2980 = vmatpush1.msra.mxu0 0.0
    %2981 = vmatprep.subr.mxu0 0.0
    %2982 = vmatpush1.msra.mxu0 0.0
    %2983 = vmatprep.subr.mxu0 0.0
    %2984 = vmatpush1.msra.mxu0 0.0
    %2985 = vmatprep.subr.mxu0 0.0
    %2986 = vmatpush1.msra.mxu0 0.0
    %2987 = vmatprep.subr.mxu0 0.0
    %2988 = vmatpush1.msra.mxu0 0.0
    %2989 = vmatprep.subr.mxu0 0.0
    %2990 = vmatpush1.msra.mxu0 0.0
    %2991 = vmatprep.subr.mxu0 0.0
    %2992 = vmatpush1.msra.mxu0 0.0
    %2993 = vmatprep.subr.mxu0 0.0
    %2994 = vmatpush1.msra.mxu0 0.0
    %2995 = vmatprep.subr.mxu0 0.0
    %2996 = vmatpush1.msra.mxu0 0.0
    %2997 = vmatprep.subr.mxu0 0.0
    %2998 = vmatpush1.msra.mxu0 0.0
    %2999 = vmatprep.subr.mxu0 0.0
    %3000 = vmatpush1.msra.mxu0 0.0
    %3001 = vmatprep.subr.mxu0 0.0
    %3002 = vmatpush1.msra.mxu0 0.0
    %3003 = vmatprep.subr.mxu0 0.0
    %3004 = vmatpush1.msra.mxu0 0.0
    %3005 = vmatprep.subr.mxu0 0.0
    %3006 = vmatpush1.msra.mxu0 0.0
    %3007 = vmatprep.subr.mxu0 0.0
    %3008 = vmatpush1.msra.mxu0 0.0
    %3009 = vmatprep.subr.mxu0 0.0
    %3010 = vmatpush1.msra.mxu0 0.0
    %3011 = vmatprep.subr.mxu0 0.0
    %3012 = vmatpush1.msra.mxu0 0.0
    %3013 = vmatprep.subr.mxu0 0.0
    %3014 = vmatpush1.msra.mxu0 0.0
    %3015 = vmatprep.subr.mxu0 0.0
    %3016 = vmatpush1.msra.mxu0 0.0
    %3017 = vmatprep.subr.mxu0 0.0
    %3018 = vmatpush1.msra.mxu0 0.0
    %3019 = vmatprep.subr.mxu0 0.0
    %3020 = vmatpush1.msra.mxu0 0.0
    %3021 = vmatprep.subr.mxu0 0.0
    %3022 = vmatpush1.msra.mxu0 0.0
    %3023 = vmatprep.subr.mxu0 0.0
    %3024 = vmatpush1.msra.mxu0 0.0
    %3025 = vmatprep.subr.mxu0 0.0
    %3026 = vmatpush1.msra.mxu0 0.0
    %3027 = vmatprep.mubr.f32.mxu0 0.0
    %3028 = vmatmul.mubr.f32.gmra.mrb[0].mxu0 %v2961
    %v3029 = vpop.f32.mrb[0].mxu0
    %v3030 = vadd.f32 %v2958, %v3029
    %v3031 = vpop.f32.mrb[0].mxu0
    %3032 = vdwg.mxu0
    %v3033 = vmax.f32 %v3030, 0.0
    %s3034 = scalar_lea.vmem %s6, 64
    %v3035 = vld [vmem:[%s3034] sm:$0xff]
    %v3036 = vld [vmem:[%s3034 + $0x8] sm:$0xff]
    %v3037 = vld [vmem:[%s3034 + $0x10] sm:$0xff]
    %v3038 = vld [vmem:[%s3034 + $0x18] sm:$0xff]
    %v3039 = vld [vmem:[%s3034 + $0x20] sm:$0xff]
    %v3040 = vld [vmem:[%s3034 + $0x28] sm:$0xff]
    %v3041 = vld [vmem:[%s3034 + $0x30] sm:$0xff]
    %v3042 = vld [vmem:[%s3034 + $0x38] sm:$0xff]
    %3043 = vrot.lane.b32.xlu0 %v2922, 127
    %v3044 = vpop.permute.xlu0 %3043
    %v3047 = vsel %vm1892, %v3033, 0
    %3049 = vmatprep.subr.mxu0 0.0
    %3050 = vmatpush1.msra.mxu0 %v3035
    %3051 = vmatprep.subr.mxu0 0.0
    %3052 = vmatpush1.msra.mxu0 %v3036
    %3053 = vmatprep.subr.mxu0 0.0
    %3054 = vmatpush1.msra.mxu0 %v3037
    %3055 = vmatprep.subr.mxu0 0.0
    %3056 = vmatpush1.msra.mxu0 %v3038
    %3057 = vmatprep.subr.mxu0 0.0
    %3058 = vmatpush1.msra.mxu0 %v3039
    %3059 = vmatprep.subr.mxu0 0.0
    %3060 = vmatpush1.msra.mxu0 %v3040
    %3061 = vmatprep.subr.mxu0 0.0
    %3062 = vmatpush1.msra.mxu0 %v3041
    %3063 = vmatprep.subr.mxu0 0.0
    %3064 = vmatpush1.msra.mxu0 %v3042
    %3065 = vmatprep.subr.mxu0 0.0
    %3066 = vmatpush1.msra.mxu0 0.0
    %3067 = vmatprep.subr.mxu0 0.0
    %3068 = vmatpush1.msra.mxu0 0.0
    %3069 = vmatprep.subr.mxu0 0.0
    %3070 = vmatpush1.msra.mxu0 0.0
    %3071 = vmatprep.subr.mxu0 0.0
    %3072 = vmatpush1.msra.mxu0 0.0
    %3073 = vmatprep.subr.mxu0 0.0
    %3074 = vmatpush1.msra.mxu0 0.0
    %3075 = vmatprep.subr.mxu0 0.0
    %3076 = vmatpush1.msra.mxu0 0.0
    %3077 = vmatprep.subr.mxu0 0.0
    %3078 = vmatpush1.msra.mxu0 0.0
    %3079 = vmatprep.subr.mxu0 0.0
    %3080 = vmatpush1.msra.mxu0 0.0
    %3081 = vmatprep.subr.mxu0 0.0
    %3082 = vmatpush1.msra.mxu0 0.0
    %3083 = vmatprep.subr.mxu0 0.0
    %3084 = vmatpush1.msra.mxu0 0.0
    %3085 = vmatprep.subr.mxu0 0.0
    %3086 = vmatpush1.msra.mxu0 0.0
    %3087 = vmatprep.subr.mxu0 0.0
    %3088 = vmatpush1.msra.mxu0 0.0
    %3089 = vmatprep.subr.mxu0 0.0
    %3090 = vmatpush1.msra.mxu0 0.0
    %3091 = vmatprep.subr.mxu0 0.0
    %3092 = vmatpush1.msra.mxu0 0.0
    %3093 = vmatprep.subr.mxu0 0.0
    %3094 = vmatpush1.msra.mxu0 0.0
    %3095 = vmatprep.subr.mxu0 0.0
    %3096 = vmatpush1.msra.mxu0 0.0
    %3097 = vmatprep.subr.mxu0 0.0
    %3098 = vmatpush1.msra.mxu0 0.0
    %3099 = vmatprep.subr.mxu0 0.0
    %3100 = vmatpush1.msra.mxu0 0.0
    %3101 = vmatprep.subr.mxu0 0.0
    %3102 = vmatpush1.msra.mxu0 0.0
    %3103 = vmatprep.subr.mxu0 0.0
    %3104 = vmatpush1.msra.mxu0 0.0
    %3105 = vmatprep.subr.mxu0 0.0
    %3106 = vmatpush1.msra.mxu0 0.0
    %3107 = vmatprep.subr.mxu0 0.0
    %3108 = vmatpush1.msra.mxu0 0.0
    %3109 = vmatprep.subr.mxu0 0.0
    %3110 = vmatpush1.msra.mxu0 0.0
    %3111 = vmatprep.subr.mxu0 0.0
    %3112 = vmatpush1.msra.mxu0 0.0
    %3113 = vmatprep.mubr.f32.mxu0 0.0
    %3114 = vmatmul.mubr.f32.gmra.mrb[0].mxu0 %v3047
    %v3115 = vpop.f32.mrb[0].mxu0
    %v3116 = vadd.f32 %v3044, %v3115
    %v3117 = vpop.f32.mrb[0].mxu0
    %3118 = vdwg.mxu0
    %v3119 = vadd.f32 %v2931, %v3116
    %v3120 = vld [vmem:[%s7 + $0x5] sm:$0x5]
    %v3121 = vld [vmem:[%s7 + $0x7] sm:$0x1]
    %v3122 = vsel %vm147, %v3119, 0.0
    %3123 = vadd.xlane.f32.xlu0 %v3122
    %v3124 = vpop.xlane.xlu0 %3123
    %v3125 = vmul.f32 %v3124, %v1755
    %v3126 = vsub.f32 %v3119, %v3125
    %v3127 = vmul.f32 %v3126, %v3126
    %v3128 = vsel %vm147, %v3127, 0.0
    %3129 = vadd.xlane.f32.xlu0 %v3128
    %v3130 = vpop.xlane.xlu0 %3129
    %v3131 = vmul.f32 %v3130, %v1755
    %v3132 = vadd.f32 %v3131, 1e-05
    %v3133 = vrsqrt.pop %v3132
    %v3134 = vmul.f32 %v3126, %v3133
    %v3136 = vlaneseq
    %v3137 = vshrl.u32 %v3136, 7
    %v3138 = vsub.s32 0, %v3137
    %v3139 = vrot.slane %v3120, %v3138
    %v3140 = vlaneseq
    %v3141 = vshrl.u32 %v3140, 7
    %v3142 = vsub.s32 2, %v3141
    %v3143 = vrot.slane %v3120, %v3142
    %v3146 = vlaneseq
    %v3147 = vshrl.u32 %v3146, 7
    %v3148 = vsub.s32 0, %v3147
    %v3149 = vrot.slane %v3139, %v3148
    %v3150 = vlaneseq
    %v3151 = vshrl.u32 %v3150, 7
    %v3152 = vsub.s32 0, %v3151
    %v3153 = vrot.slane %v3143, %v3152
    %3156 = vrot.lane.b32.xlu0 %v3149, 31
    %v3157 = vpop.permute.xlu0 %3156
    %3158 = vrot.lane.b32.xlu0 %v3153, 31
    %v3159 = vpop.permute.xlu0 %3158
    %v3160 = vsel %vm2007, %v3157, %v3159
    %v3162 = vmul.f32 %v3134, %v3160
    %v3163 = vlaneseq
    %v3164 = vshrl.u32 %v3163, 7
    %v3165 = vsub.s32 0, %v3164
    %v3166 = vrot.slane %v3121, %v3165
    %3168 = vrot.lane.b32.xlu0 %v3166, 127
    %v3169 = vpop.permute.xlu0 %3168
    %v3171 = vadd.f32 %v3162, %v3169
    %v3172 = vld [vmem:[%s7 + $0x6] sm:$0x1]
    %v3173 = vsel %vm147, %v3171, 0.0
    %3174 = vadd.xlane.f32.xlu0 %v3173
    %v3175 = vpop.xlane.xlu0 %3174
    %v3176 = vmul.f32 %v3175, %v1755
    %v3177 = vsub.f32 %v3171, %v3176
    %v3178 = vmul.f32 %v3177, %v3177
    %v3179 = vsel %vm147, %v3178, 0.0
    %3180 = vadd.xlane.f32.xlu0 %v3179
    %v3181 = vpop.xlane.xlu0 %3180
    %v3182 = vmul.f32 %v3181, %v1755
    %v3183 = vadd.f32 %v3182, 1e-05
    %v3184 = vrsqrt.pop %v3183
    %v3185 = vmul.f32 %v3177, %v3184
    %v3186 = vlaneseq
    %v3187 = vshrl.u32 %v3186, 7
    %v3188 = vsub.s32 0, %v3187
    %v3189 = vrot.slane %v3172, %v3188
    %3191 = vrot.lane.b32.xlu0 %v3189, 95
    %v3192 = vpop.permute.xlu0 %3191
    %v3194 = vmul.f32 %v3185, %v3192
    %3195 = vrot.lane.b32.xlu0 %v3189, 63
    %v3196 = vpop.permute.xlu0 %3195
    %v3198 = vadd.f32 %v3194, %v3196
    %v3199 = vld [vmem:[#allocation3] sm:$0x3]
    %v3200 = vld [vmem:[%s7 + $0x6] sm:$0x5]
    %v3201 = vld [vmem:[%s7 + $0x8] sm:$0x1]
    %v3203 = vlaneseq
    %v3204 = vshrl.u32 %v3203, 7
    %v3205 = vsub.s32 0, %v3204
    %v3206 = vrot.slane %v3200, %v3205
    %v3207 = vlaneseq
    %v3208 = vshrl.u32 %v3207, 7
    %v3209 = vsub.s32 2, %v3208
    %v3210 = vrot.slane %v3200, %v3209
    %v3213 = vlaneseq
    %v3214 = vshrl.u32 %v3213, 7
    %v3215 = vsub.s32 0, %v3214
    %v3216 = vrot.slane %v3206, %v3215
    %v3217 = vlaneseq
    %v3218 = vshrl.u32 %v3217, 7
    %v3219 = vsub.s32 0, %v3218
    %v3220 = vrot.slane %v3210, %v3219
    %3223 = vrot.lane.b32.xlu0 %v3216, 31
    %v3224 = vpop.permute.xlu0 %3223
    %3225 = vrot.lane.b32.xlu0 %v3220, 31
    %v3226 = vpop.permute.xlu0 %3225
    %v3227 = vsel %vm2007, %v3224, %v3226
    %v3229 = vmul.f32 %v3199, %v3227
    %v3230 = vsel %vm540, %v3229, 0.0
    %3231 = vadd.xlane.f32.xlu0 %v3230
    %v3232 = vpop.xlane.xlu0 %3231
    %v3233 = vlaneseq
    %v3234 = vshrl.u32 %v3233, 7
    %v3235 = vsub.s32 0, %v3234
    %v3236 = vrot.slane %v3201, %v3235
    %v3237 = vadd.f32 %v3232, %v3236
    %v3238 = vxor.u32 %v3237, 2147483648
    %v3239 = vmul.f32 %v3238, 1.442695
    %v3240 = vpow.pop %v3239
    %v3241 = vadd.f32 %v3240, 1.0
    %v3242 = vrcp.pop %v3241
    %v3243 = vmul.f32 1.0, %v3242
    %vm3244 = vcmask 9224
    %v3245 = vsel %vm3244, %v3243, -inf
    %v3246 = vrot.slane %v3245, 4
    %v3247 = vmax.f32 %v3245, %v3246
    %v3248 = vrot.slane %v3247, 2
    %v3249 = vmax.f32 %v3247, %v3248
    %v3250 = vrot.slane %v3249, 1
    %v3251 = vmax.f32 %v3249, %v3250
    %v3252 = vsub.f32 %v3243, %v3251
    %v3253 = vmul.f32 %v3252, 1.442695
    %v3254 = vpow.pop %v3253
    %v3255 = vsel %vm3244, %v3254, 0.0
    %v3256 = vrot.slane %v3255, 4
    %v3257 = vadd.f32 %v3255, %v3256
    %v3258 = vrot.slane %v3257, 2
    %v3259 = vadd.f32 %v3257, %v3258
    %v3260 = vrot.slane %v3259, 1
    %v3261 = vadd.f32 %v3259, %v3260
    %v3262 = vrcp.pop %v3261
    %v3263 = vmul.f32 %v3254, %v3262
    %3265 = vset.pattern.permute.xlu0 1
    %3266 = vperm.xlu0 %3265, %v3263
    %v3267 = vpop.permute.xlu0 %3266
    %v3269 = vmul.f32 %v3267, %v3199
    %v3270 = vsel %vm540, %v3269, 0.0
    %v3271 = vrot.slane %v3270, 4
    %v3272 = vadd.f32 %v3270, %v3271
    %v3273 = vrot.slane %v3272, 2
    %v3274 = vadd.f32 %v3272, %v3273
    %v3275 = vrot.slane %v3274, 1
    %v3276 = vadd.f32 %v3274, %v3275
    %3278 = vrot.lane.b32.xlu0 %v3236, 126
    %v3279 = vpop.permute.xlu0 %3278
    %v3281 = vmul.f32 %v3198, %v3279
    %v3282 = vsel %vm147, %v3281, 0.0
    %3283 = vadd.xlane.f32.xlu0 %v3282
    %v3284 = vpop.xlane.xlu0 %3283
    %v3285 = vadd.f32 %v3284, %v3236
    %v3286 = vxor.u32 %v3285, 2147483648
    %v3287 = vmul.f32 %v3286, 1.442695
    %v3288 = vpow.pop %v3287
    %v3289 = vadd.f32 %v3288, 1.0
    %v3290 = vrcp.pop %v3289
    %v3291 = vmul.f32 1.0, %v3290
    %vm3292 = vcmask 285968
    %v3293 = vsel %vm3292, %v3291, -inf
    %v3294 = vrot.slane %v3293, 4
    %v3295 = vmax.f32 %v3293, %v3294
    %v3296 = vrot.slane %v3295, 2
    %v3297 = vmax.f32 %v3295, %v3296
    %v3298 = vrot.slane %v3297, 1
    %v3299 = vmax.f32 %v3297, %v3298
    %v3300 = vsub.f32 %v3291, %v3299
    %v3301 = vmul.f32 %v3300, 1.442695
    %v3302 = vpow.pop %v3301
    %v3303 = vsel %vm3292, %v3302, 0.0
    %v3304 = vrot.slane %v3303, 4
    %v3305 = vadd.f32 %v3303, %v3304
    %v3306 = vrot.slane %v3305, 2
    %v3307 = vadd.f32 %v3305, %v3306
    %v3308 = vrot.slane %v3307, 1
    %v3309 = vadd.f32 %v3307, %v3308
    %v3310 = vrcp.pop %v3309
    %v3311 = vmul.f32 %v3302, %v3310
    %3313 = vset.pattern.permute.xlu0 34
    %3314 = vperm.xlu0 %3313, %v3311
    %v3315 = vpop.permute.xlu0 %3314
    %v3317 = vmul.f32 %v3315, %v3198
    %v3318 = vsel %vm147, %v3317, 0.0
    %v3319 = vrot.slane %v3318, 4
    %v3320 = vadd.f32 %v3318, %v3319
    %v3321 = vrot.slane %v3320, 2
    %v3322 = vadd.f32 %v3320, %v3321
    %v3323 = vrot.slane %v3322, 1
    %v3324 = vadd.f32 %v3322, %v3323
    %v3325 = vld [vmem:[%s8] sm:$0xff]
    %v3326 = vld [vmem:[%s8 + $0x8] sm:$0xff]
    %v3327 = vld [vmem:[%s8 + $0x10] sm:$0xff]
    %v3328 = vld [vmem:[%s8 + $0x18] sm:$0xff]
    %v3329 = vld [vmem:[%s8 + $0x20] sm:$0xff]
    %v3330 = vld [vmem:[%s8 + $0x28] sm:$0xff]
    %v3331 = vld [vmem:[%s8 + $0x30] sm:$0xff]
    %v3332 = vld [vmem:[%s8 + $0x38] sm:$0xff]
    %v3334 = vsel %vm147, %v3324, 0
    %3336 = vmatprep.subr.mxu0 0.0
    %3337 = vmatpush1.msra.mxu0 %v3329
    %3338 = vmatprep.subr.mxu0 0.0
    %3339 = vmatpush1.msra.mxu0 %v3330
    %3340 = vmatprep.subr.mxu0 0.0
    %3341 = vmatpush1.msra.mxu0 %v3331
    %3342 = vmatprep.subr.mxu0 0.0
    %3343 = vmatpush1.msra.mxu0 %v3332
    %3344 = vmatprep.subr.mxu0 0.0
    %3345 = vmatpush1.msra.mxu0 0.0
    %3346 = vmatprep.subr.mxu0 0.0
    %3347 = vmatpush1.msra.mxu0 0.0
    %3348 = vmatprep.subr.mxu0 0.0
    %3349 = vmatpush1.msra.mxu0 0.0
    %3350 = vmatprep.subr.mxu0 0.0
    %3351 = vmatpush1.msra.mxu0 0.0
    %3352 = vmatprep.subr.mxu0 0.0
    %3353 = vmatpush1.msra.mxu0 0.0
    %3354 = vmatprep.subr.mxu0 0.0
    %3355 = vmatpush1.msra.mxu0 0.0
    %3356 = vmatprep.subr.mxu0 0.0
    %3357 = vmatpush1.msra.mxu0 0.0
    %3358 = vmatprep.subr.mxu0 0.0
    %3359 = vmatpush1.msra.mxu0 0.0
    %3360 = vmatprep.subr.mxu0 0.0
    %3361 = vmatpush1.msra.mxu0 0.0
    %3362 = vmatprep.subr.mxu0 0.0
    %3363 = vmatpush1.msra.mxu0 0.0
    %3364 = vmatprep.subr.mxu0 0.0
    %3365 = vmatpush1.msra.mxu0 0.0
    %3366 = vmatprep.subr.mxu0 0.0
    %3367 = vmatpush1.msra.mxu0 0.0
    %3368 = vmatprep.subr.mxu0 0.0
    %3369 = vmatpush1.msra.mxu0 0.0
    %3370 = vmatprep.subr.mxu0 0.0
    %3371 = vmatpush1.msra.mxu0 0.0
    %3372 = vmatprep.subr.mxu0 0.0
    %3373 = vmatpush1.msra.mxu0 0.0
    %3374 = vmatprep.subr.mxu0 0.0
    %3375 = vmatpush1.msra.mxu0 0.0
    %3376 = vmatprep.subr.mxu0 0.0
    %3377 = vmatpush1.msra.mxu0 0.0
    %3378 = vmatprep.subr.mxu0 0.0
    %3379 = vmatpush1.msra.mxu0 0.0
    %3380 = vmatprep.subr.mxu0 0.0
    %3381 = vmatpush1.msra.mxu0 0.0
    %3382 = vmatprep.subr.mxu0 0.0
    %3383 = vmatpush1.msra.mxu0 0.0
    %3384 = vmatprep.subr.mxu0 0.0
    %3385 = vmatpush1.msra.mxu0 0.0
    %3386 = vmatprep.subr.mxu0 0.0
    %3387 = vmatpush1.msra.mxu0 0.0
    %3388 = vmatprep.subr.mxu0 0.0
    %3389 = vmatpush1.msra.mxu0 0.0
    %3390 = vmatprep.subr.mxu0 0.0
    %3391 = vmatpush1.msra.mxu0 0.0
    %3392 = vmatprep.subr.mxu0 0.0
    %3393 = vmatpush1.msra.mxu0 0.0
    %3394 = vmatprep.subr.mxu0 0.0
    %3395 = vmatpush1.msra.mxu0 0.0
    %3396 = vmatprep.subr.mxu0 0.0
    %3397 = vmatpush1.msra.mxu0 0.0
    %3398 = vmatprep.subr.mxu0 0.0
    %3399 = vmatpush1.msra.mxu0 0.0
    %3400 = vmatprep.mubr.f32.mxu0 0.0
    %3401 = vmatmul.mubr.f32.gmra.mrb[0].mxu0 %v3334
    %v3402 = vpop.f32.mrb[0].mxu0
    %v3403 = vadd.f32 0.0, %v3402
    %v3404 = vpop.f32.mrb[0].mxu0
    %3405 = vdwg.mxu0
    %v3407 = vsel %vm147, %v3276, 0
    %3409 = vmatprep.subr.mxu0 0.0
    %3410 = vmatpush1.msra.mxu0 %v3325
    %3411 = vmatprep.subr.mxu0 0.0
    %3412 = vmatpush1.msra.mxu0 %v3326
    %3413 = vmatprep.subr.mxu0 0.0
    %3414 = vmatpush1.msra.mxu0 %v3327
    %3415 = vmatprep.subr.mxu0 0.0
    %3416 = vmatpush1.msra.mxu0 %v3328
    %3417 = vmatprep.subr.mxu0 0.0
    %3418 = vmatpush1.msra.mxu0 0.0
    %3419 = vmatprep.subr.mxu0 0.0
    %3420 = vmatpush1.msra.mxu0 0.0
    %3421 = vmatprep.subr.mxu0 0.0
    %3422 = vmatpush1.msra.mxu0 0.0
    %3423 = vmatprep.subr.mxu0 0.0
    %3424 = vmatpush1.msra.mxu0 0.0
    %3425 = vmatprep.subr.mxu0 0.0
    %3426 = vmatpush1.msra.mxu0 0.0
    %3427 = vmatprep.subr.mxu0 0.0
    %3428 = vmatpush1.msra.mxu0 0.0
    %3429 = vmatprep.subr.mxu0 0.0
    %3430 = vmatpush1.msra.mxu0 0.0
    %3431 = vmatprep.subr.mxu0 0.0
    %3432 = vmatpush1.msra.mxu0 0.0
    %3433 = vmatprep.subr.mxu0 0.0
    %3434 = vmatpush1.msra.mxu0 0.0
    %3435 = vmatprep.subr.mxu0 0.0
    %3436 = vmatpush1.msra.mxu0 0.0
    %3437 = vmatprep.subr.mxu0 0.0
    %3438 = vmatpush1.msra.mxu0 0.0
    %3439 = vmatprep.subr.mxu0 0.0
    %3440 = vmatpush1.msra.mxu0 0.0
    %3441 = vmatprep.subr.mxu0 0.0
    %3442 = vmatpush1.msra.mxu0 0.0
    %3443 = vmatprep.subr.mxu0 0.0
    %3444 = vmatpush1.msra.mxu0 0.0
    %3445 = vmatprep.subr.mxu0 0.0
    %3446 = vmatpush1.msra.mxu0 0.0
    %3447 = vmatprep.subr.mxu0 0.0
    %3448 = vmatpush1.msra.mxu0 0.0
    %3449 = vmatprep.subr.mxu0 0.0
    %3450 = vmatpush1.msra.mxu0 0.0
    %3451 = vmatprep.subr.mxu0 0.0
    %3452 = vmatpush1.msra.mxu0 0.0
    %3453 = vmatprep.subr.mxu0 0.0
    %3454 = vmatpush1.msra.mxu0 0.0
    %3455 = vmatprep.subr.mxu0 0.0
    %3456 = vmatpush1.msra.mxu0 0.0
    %3457 = vmatprep.subr.mxu0 0.0
    %3458 = vmatpush1.msra.mxu0 0.0
    %3459 = vmatprep.subr.mxu0 0.0
    %3460 = vmatpush1.msra.mxu0 0.0
    %3461 = vmatprep.subr.mxu0 0.0
    %3462 = vmatpush1.msra.mxu0 0.0
    %3463 = vmatprep.subr.mxu0 0.0
    %3464 = vmatpush1.msra.mxu0 0.0
    %3465 = vmatprep.subr.mxu0 0.0
    %3466 = vmatpush1.msra.mxu0 0.0
    %3467 = vmatprep.subr.mxu0 0.0
    %3468 = vmatpush1.msra.mxu0 0.0
    %3469 = vmatprep.subr.mxu0 0.0
    %3470 = vmatpush1.msra.mxu0 0.0
    %3471 = vmatprep.subr.mxu0 0.0
    %3472 = vmatpush1.msra.mxu0 0.0
    %3473 = vmatprep.mubr.f32.mxu0 0.0
    %3474 = vmatmul.mubr.f32.gmra.mrb[0].mxu0 %v3407
    %v3475 = vpop.f32.mrb[0].mxu0
    %v3476 = vadd.f32 %v3403, %v3475
    %v3477 = vpop.f32.mrb[0].mxu0
    %3478 = vdwg.mxu0
    %v3480 = vlaneseq
    %v3481 = vshrl.u32 %v3480, 7
    %v3482 = vsub.s32 0, %v3481
    %v3483 = vrot.slane %v3201, %v3482
    %3484 = vrot.lane.b32.xlu0 %v3483, 93
    %v3485 = vpop.permute.xlu0 %3484
    %v3487 = vadd.f32 %v3476, %v3485
    %vm3488 = vcmp.gt.f32.partialorder %v3487, 0.0
    %v3489 = vmin.f32 %v3487, 0.0
    %v3490 = vmul.f32 %v3489, 1.442695
    %v3491 = vpow.pop %v3490
    %v3492 = vsub.f32 %v3491, 1.0
    %v3493 = vsel %vm3488, %v3487, %v3492
    %3498 = vrot.lane.b32.xlu0 %v3325, 96
    %v3499 = vpop.permute.xlu0 %3498
    %3500 = vrot.lane.b32.xlu0 %v3326, 96
    %v3501 = vpop.permute.xlu0 %3500
    %3502 = vrot.lane.b32.xlu0 %v3327, 96
    %v3503 = vpop.permute.xlu0 %3502
    %3504 = vrot.lane.b32.xlu0 %v3328, 96
    %v3505 = vpop.permute.xlu0 %3504
    %3510 = vrot.lane.b32.xlu0 %v3483, 61
    %v3511 = vpop.permute.xlu0 %3510
    %v3514 = vsel %vm147, %v3493, 0
    %3516 = vmatprep.subr.mxu0 0.0
    %3517 = vmatpush1.msra.mxu0 %v3499
    %3518 = vmatprep.subr.mxu0 0.0
    %3519 = vmatpush1.msra.mxu0 %v3501
    %3520 = vmatprep.subr.mxu0 0.0
    %3521 = vmatpush1.msra.mxu0 %v3503
    %3522 = vmatprep.subr.mxu0 0.0
    %3523 = vmatpush1.msra.mxu0 %v3505
    %3524 = vmatprep.subr.mxu0 0.0
    %3525 = vmatpush1.msra.mxu0 0.0
    %3526 = vmatprep.subr.mxu0 0.0
    %3527 = vmatpush1.msra.mxu0 0.0
    %3528 = vmatprep.subr.mxu0 0.0
    %3529 = vmatpush1.msra.mxu0 0.0
    %3530 = vmatprep.subr.mxu0 0.0
    %3531 = vmatpush1.msra.mxu0 0.0
    %3532 = vmatprep.subr.mxu0 0.0
    %3533 = vmatpush1.msra.mxu0 0.0
    %3534 = vmatprep.subr.mxu0 0.0
    %3535 = vmatpush1.msra.mxu0 0.0
    %3536 = vmatprep.subr.mxu0 0.0
    %3537 = vmatpush1.msra.mxu0 0.0
    %3538 = vmatprep.subr.mxu0 0.0
    %3539 = vmatpush1.msra.mxu0 0.0
    %3540 = vmatprep.subr.mxu0 0.0
    %3541 = vmatpush1.msra.mxu0 0.0
    %3542 = vmatprep.subr.mxu0 0.0
    %3543 = vmatpush1.msra.mxu0 0.0
    %3544 = vmatprep.subr.mxu0 0.0
    %3545 = vmatpush1.msra.mxu0 0.0
    %3546 = vmatprep.subr.mxu0 0.0
    %3547 = vmatpush1.msra.mxu0 0.0
    %3548 = vmatprep.subr.mxu0 0.0
    %3549 = vmatpush1.msra.mxu0 0.0
    %3550 = vmatprep.subr.mxu0 0.0
    %3551 = vmatpush1.msra.mxu0 0.0
    %3552 = vmatprep.subr.mxu0 0.0
    %3553 = vmatpush1.msra.mxu0 0.0
    %3554 = vmatprep.subr.mxu0 0.0
    %3555 = vmatpush1.msra.mxu0 0.0
    %3556 = vmatprep.subr.mxu0 0.0
    %3557 = vmatpush1.msra.mxu0 0.0
    %3558 = vmatprep.subr.mxu0 0.0
    %3559 = vmatpush1.msra.mxu0 0.0
    %3560 = vmatprep.subr.mxu0 0.0
    %3561 = vmatpush1.msra.mxu0 0.0
    %3562 = vmatprep.subr.mxu0 0.0
    %3563 = vmatpush1.msra.mxu0 0.0
    %3564 = vmatprep.subr.mxu0 0.0
    %3565 = vmatpush1.msra.mxu0 0.0
    %3566 = vmatprep.subr.mxu0 0.0
    %3567 = vmatpush1.msra.mxu0 0.0
    %3568 = vmatprep.subr.mxu0 0.0
    %3569 = vmatpush1.msra.mxu0 0.0
    %3570 = vmatprep.subr.mxu0 0.0
    %3571 = vmatpush1.msra.mxu0 0.0
    %3572 = vmatprep.subr.mxu0 0.0
    %3573 = vmatpush1.msra.mxu0 0.0
    %3574 = vmatprep.subr.mxu0 0.0
    %3575 = vmatpush1.msra.mxu0 0.0
    %3576 = vmatprep.subr.mxu0 0.0
    %3577 = vmatpush1.msra.mxu0 0.0
    %3578 = vmatprep.subr.mxu0 0.0
    %3579 = vmatpush1.msra.mxu0 0.0
    %3580 = vmatprep.mubr.f32.mxu0 0.0
    %3581 = vmatmul.mubr.f32.gmra.mrb[0].mxu0 %v3514
    %v3582 = vpop.f32.mrb[0].mxu0
    %v3583 = vadd.f32 %v3511, %v3582
    %v3584 = vpop.f32.mrb[0].mxu0
    %3585 = vdwg.mxu0
    %vm3586 = vcmask 8192
    %v3587 = vsel %vm3586, %v3583, -inf
    %3588 = vmax.xlane.f32.xlu0 %v3587
    %v3589 = vpop.xlane.xlu0 %3588
    %v3590 = vsub.f32 %v3583, %v3589
    %v3591 = vmul.f32 %v3590, 1.442695
    %v3592 = vpow.pop %v3591
    %v3593 = vsel %vm3586, %v3592, 0.0
    %3594 = vadd.xlane.f32.xlu0 %v3593
    %v3595 = vpop.xlane.xlu0 %3594
    %v3596 = vrcp.pop %v3595
    %v3597 = vmul.f32 %v3592, %v3596
    %3598 = vst.msk [vmem:[#allocation4] sm:$0x1] %vm3586, %v3597
    // Predicated region
    $region38: #{_forward_impl.1} parent=1 // pred_check
      _
    $region39: #{_forward_impl.1} parent=1 // pred_check_branch
      %3600 = sbr.rel (0) target = $region41
    $region40: #{_forward_impl.1} parent=1 // pred_region
      %s3602 = ssub.s32 16, 16
      %3603 = vsyncadd [#allocation5], %s3602
      %s3605 = sshll.u32 [#allocation4], 4
      %s3606 = int_to_ptr.vmem [resolvable:$true] %s3605
      %3608 = dma.vmem_to_hbm [thread:$0]  %s3606, 16, %s9, [#allocation5]
    $region41: #{_forward_impl.1} parent=1 // pred_fallthru
      _
    // Predicated region
    $region42: #{_forward_impl.1} parent=1 // pred_check
      _
    $region43: #{_forward_impl.1} parent=1 // pred_check_branch
      %3610 = sbr.rel (0) target = $region45
    $region44: #{_forward_impl.1} parent=1 // pred_region
      %3611 = dma.done [#allocation5], 16
    $region45: #{_forward_impl.1} parent=1 // pred_fallthru
      _
    %3612 = vsyncpa [#allocation5], 1

</llo_original>
